<compile_context>
chip_gen: v7x
topology: tpu7x:2x2x1
jax: 0.10.0
libtpu: 0.0.40
codegen_flags: <defaults>
</compile_context>

<pallas_src>
import math

import jax
import jax.numpy as jnp
from jax.experimental import pallas as pl
from jax.experimental.pallas import tpu as pltpu

# ---- scaled-down ViT hyperparameters (vit_b_16 uses D=768, L=12, H=12) ----
B = 2            # batch
C = 3            # image channels
IMG = 32         # image H = W
PATCH = 16       # patch size (as in vit_b_16)
NH = IMG // PATCH
P = NH * NH      # number of patches
S = P + 1        # sequence length (class token + patches)
D = 64           # hidden dim
H = 4            # attention heads
HD = D // H      # head dim
DM = 4 * D       # MLP dim
L = 2            # encoder layers
PATCH_DIM = C * PATCH * PATCH
EPS = 1e-6       # torchvision ViT LayerNorm eps
SCALE = 1.0 / math.sqrt(HD)

# Images processed per grid step (batch folded into matmul M within a step).
# B_BLK = B  -> single grid step, best for single-TensorCore v5e/v6e.
# B_BLK = 1  -> grid=(B,) with "parallel" semantics, splits batch across the
#               two TensorCores on v7x.
B_BLK = B
assert B % B_BLK == 0
N_STEPS = B // B_BLK
BS = B_BLK * S   # rows per grid step

# class counts for the three heads.
# TODO(synk): original code derives these from a CSV (len(df[col].unique()));
#             file is unavailable, using fixed deterministic stand-ins.
N_ARTIST, N_STYLE, N_GENRE = 7, 5, 3
N_CLS = N_ARTIST + N_STYLE + N_GENRE
N_PAD = 128      # lane-dense padded width for the fused classifier heads


# ---------------------------------------------------------------------------
# Fused Pallas kernel (one grid step per batch block)
# ---------------------------------------------------------------------------
def _layernorm(v, g, b):
    # Independent E[x] / E[x^2] so the two cross-lane reductions overlap.
    mu = jnp.mean(v, axis=-1, keepdims=True)
    ms = jnp.mean(v * v, axis=-1, keepdims=True)
    var = ms - mu * mu
    return (v - mu) * jax.lax.rsqrt(var + EPS) * g + b


def vit_fused_kernel(
    x_ref,       # (1, BS, PATCH_DIM) bf16; row b*S is zeros (class-token slot)
    wp_ref,      # (PATCH_DIM, D)     bf16  patch-embedding weight
    off_ref,     # (BS, D)            f32   row b*S: cls_tok+pos0, else bias+pos
    ln_ref,      # (L, 4, D)          f32   [ln1_g, ln1_b, ln2_g, ln2_b]
    wqkv_ref,    # (L, D, 3*D)        bf16  fused lane-dense q|k|v weights
    bqkv_ref,    # (L, 1, 3*D)        f32   fused q|k|v biases
    wo_ref,      # (L, D, D)          bf16  output projection (head-sum folded)
    bo_ref,      # (L, 1, D)          f32
    w1_ref,      # (L, D, DM)         bf16
    b1_ref,      # (L, 1, DM)         f32
    w2_ref,      # (L, DM, D)         bf16
    b2_ref,      # (L, 1, D)          f32
    lnf_ref,     # (2, D)             f32   final encoder LayerNorm
    wh_ref,      # (D, N_PAD)         bf16  fused (padded) classifier heads
    bh_ref,      # (1, N_PAD)         f32
    out_ref,     # (1, B_BLK, N_PAD)  f32
):
    # --- patch embedding: class-token rows of x are zero, the offsets tensor
    #     supplies class token, conv bias and positional embedding ---
    x = (
        jnp.dot(x_ref[0], wp_ref[...], preferred_element_type=jnp.float32)
        + off_ref[...]
    )  # (BS, D) f32

    for lyr in range(L):  # static unroll over encoder layers
        ln = ln_ref[lyr]  # (4, D)

        # ---- pre-LN + multi-head self-attention ----
        y = _layernorm(x, ln[0:1], ln[1:2]).astype(jnp.bfloat16)   # (BS, D)
        # single fused lane-dense QKV matmul
        qkv = (
            jnp.dot(y, wqkv_ref[lyr], preferred_element_type=jnp.float32)
            + bqkv_ref[lyr]
        )  # (BS, 3*D)

        # split the fused activation into per-(batch, head) tiles
        def head(base, b, h):
            return qkv[b * S:(b + 1) * S,
                       base + h * HD: base + (h + 1) * HD]        # (S, HD)

        qh = jnp.stack([head(0, b, h)
                        for b in range(B_BLK) for h in range(H)])  # (BH,S,HD)
        kh = jnp.stack([head(D, b, h)
                        for b in range(B_BLK) for h in range(H)])
        vh = jnp.stack([head(2 * D, b, h)
                        for b in range(B_BLK) for h in range(H)])

        s = jnp.einsum('nse,nte->nst',
                       qh.astype(jnp.bfloat16), kh.astype(jnp.bfloat16),
                       preferred_element_type=jnp.float32) * SCALE
        s = s - jnp.max(s, axis=-1, keepdims=True)
        p = jnp.exp(s)
        p = p * pl.reciprocal(jnp.sum(p, axis=-1, keepdims=True), approx=True)
        ctx = jnp.einsum('nst,nte->nse',
                         p.astype(jnp.bfloat16), vh.astype(jnp.bfloat16),
                         preferred_element_type=jnp.float32)       # (BH,S,HD)

        # repack (BH, S, HD) -> (BS, D) so out-proj + head-sum is ONE matmul
        ctx2d = jnp.concatenate(
            [jnp.concatenate([ctx[b * H + h] for h in range(H)], axis=-1)
             for b in range(B_BLK)], axis=0).astype(jnp.bfloat16)  # (BS, D)
        x = x + (
            jnp.dot(ctx2d, wo_ref[lyr], preferred_element_type=jnp.float32)
            + bo_ref[lyr]
        )  # residual

        # ---- pre-LN + MLP ----
        y = _layernorm(x, ln[2:3], ln[3:4]).astype(jnp.bfloat16)
        h1 = jnp.dot(y, w1_ref[lyr],
                     preferred_element_type=jnp.float32) + b1_ref[lyr]
        # TODO(synk): torchvision MLPBlock uses exact (erf) GELU; tanh approx
        #             kept here for Mosaic portability.
        h1 = jax.nn.gelu(h1, approximate=True)
        h2 = jnp.dot(h1.astype(jnp.bfloat16), w2_ref[lyr],
                     preferred_element_type=jnp.float32) + b2_ref[lyr]
        x = x + h2  # residual

    # ---- final LayerNorm on the class tokens + fused classifier heads ----
    cls = jnp.concatenate([x[b * S:b * S + 1, :] for b in range(B_BLK)],
                          axis=0)                                  # (B_BLK, D)
    yf = _layernorm(cls, lnf_ref[0:1], lnf_ref[1:2]).astype(jnp.bfloat16)
    out_ref[0] = (
        jnp.dot(yf, wh_ref[...], preferred_element_type=jnp.float32)
        + bh_ref[...]
    )


# ---------------------------------------------------------------------------
# Wrapper
# ---------------------------------------------------------------------------
_VMEM = pl.BlockSpec(memory_space=pltpu.MemorySpace.VMEM)


def vit_forward(x_img, pk):
    # im2col of the stride-16 patch conv (pure layout glue).  A zero row is
    # prepended per image so a single (BS, PATCH_DIM) matmul covers the class
    # token slot as well (its embedding comes from the offsets tensor).
    xp = x_img.reshape(B, C, NH, PATCH, NH, PATCH)
    xp = xp.transpose(0, 2, 4, 1, 3, 5).reshape(B, P, PATCH_DIM)
    xp = jnp.pad(xp, ((0, 0), (1, 0), (0, 0)))
    xp = xp.reshape(N_STEPS, BS, PATCH_DIM).astype(jnp.bfloat16)

    # per-row offsets, tiled over the batch block (same for every step)
    off = jnp.tile(pk["offsets"], (B_BLK, 1))                      # (BS, D)

    args = (xp, pk["w_patch"], off, pk["ln"], pk["wqkv"], pk["bqkv"],
            pk["wo"], pk["bo"], pk["w1"], pk["b1"], pk["w2"], pk["b2"],
            pk["lnf"], pk["wh"], pk["bh"])

    logits = pl.pallas_call(
        vit_fused_kernel,
        out_shape=jax.ShapeDtypeStruct((N_STEPS, B_BLK, N_PAD), jnp.float32),
        grid=(N_STEPS,),
        in_specs=[pl.BlockSpec((1, BS, PATCH_DIM), lambda i: (i, 0, 0))]
                 + [_VMEM] * (len(args) - 1),
        out_specs=pl.BlockSpec((1, B_BLK, N_PAD), lambda i: (i, 0, 0)),
        compiler_params=pltpu.CompilerParams(
            dimension_semantics=("parallel",)),
    )(*args)

    logits = logits.reshape(B, N_PAD)[:, :N_CLS]
    x_artist = logits[:, :N_ARTIST]
    x_style = logits[:, N_ARTIST:N_ARTIST + N_STYLE]
    x_genre = logits[:, N_ARTIST + N_STYLE:N_CLS]
    return x_artist, x_style, x_genre


# ---------------------------------------------------------------------------
# Deterministic synthetic parameters (torch-layout) + one-time repacking
# ---------------------------------------------------------------------------
def init_params(key):
    keys = iter(jax.random.split(key, 64))

    def nrm(shape, scale=0.02):
        return scale * jax.random.normal(next(keys), shape, dtype=jnp.float32)

    params = {
        # conv_proj weight, pre-flattened to (C*kh*kw, D); bias as (1, D)
        "w_patch": nrm((PATCH_DIM, D)),
        "b_patch": jnp.zeros((1, D), jnp.float32),
        "class_token": nrm((1, 1, D)),
        "pos_emb": nrm((1, S, D)),
        # final encoder LayerNorm
        "ln_g": jnp.ones((1, D), jnp.float32),
        "ln_b": jnp.zeros((1, D), jnp.float32),
        # heads
        "wa": nrm((D, N_ARTIST)), "ba": jnp.zeros((1, N_ARTIST), jnp.float32),
        "ws": nrm((D, N_STYLE)), "bs": jnp.zeros((1, N_STYLE), jnp.float32),
        "wg": nrm((D, N_GENRE)), "bg": jnp.zeros((1, N_GENRE), jnp.float32),
        "layers": [],
    }
    for _ in range(L):
        params["layers"].append({
            "ln1_g": jnp.ones((1, D), jnp.float32),
            "ln1_b": jnp.zeros((1, D), jnp.float32),
            "wq": nrm((D, D)), "bq": jnp.zeros((D,), jnp.float32),
            "wk": nrm((D, D)), "bk": jnp.zeros((D,), jnp.float32),
            "wv": nrm((D, D)), "bv": jnp.zeros((D,), jnp.float32),
            "wo": nrm((D, D)), "bo": jnp.zeros((1, D), jnp.float32),
            "ln2_g": jnp.ones((1, D), jnp.float32),
            "ln2_b": jnp.zeros((1, D), jnp.float32),
            "w1": nrm((D, DM)), "b1": jnp.zeros((1, DM), jnp.float32),
            "w2": nrm((DM, D)), "b2": jnp.zeros((1, D), jnp.float32),
        })
    return params


def pack_params(p):
    """One-time repacking into kernel-friendly layouts: fused lane-dense
    QKV / out-proj weights, per-layer stacked tensors, fused/padded classifier
    heads, bf16 matmul operands."""
    bf16 = lambda a: a.astype(jnp.bfloat16)
    layers = p["layers"]

    # row 0: class token + pos[0]; rows 1..P: conv bias + pos[1..]
    offsets = jnp.concatenate(
        [p["class_token"][0], jnp.broadcast_to(p["b_patch"], (P, D))], axis=0
    ) + p["pos_emb"][0]                                      # (S, D)

    ln = jnp.stack([
        jnp.concatenate([l["ln1_g"], l["ln1_b"], l["ln2_g"], l["ln2_b"]],
                        axis=0)
        for l in layers])                                    # (L, 4, D)

    # fused lane-dense q|k|v weights / biases (head h of each projection
    # occupies lane columns [h*HD:(h+1)*HD] of its D-wide slot)
    wqkv = jnp.stack([jnp.concatenate([l["wq"], l["wk"], l["wv"]], axis=1)
                      for l in layers])                      # (L, D, 3*D)
    bqkv = jnp.stack([jnp.concatenate([l["bq"], l["bk"], l["bv"]])[None, :]
                      for l in layers])                      # (L, 1, 3*D)
    wo = jnp.stack([l["wo"] for l in layers])                # (L, D, D)
    bo = jnp.stack([l["bo"] for l in layers])                # (L, 1, D)
    w1 = jnp.stack([l["w1"] for l in layers])                # (L, D, DM)
    b1 = jnp.stack([l["b1"] for l in layers])                # (L, 1, DM)
    w2 = jnp.stack([l["w2"] for l in layers])                # (L, DM, D)
    b2 = jnp.stack([l["b2"] for l in layers])                # (L, 1, D)
    lnf = jnp.concatenate([p["ln_g"], p["ln_b"]], axis=0)    # (2, D)

    # fuse the 3 heads into one lane-dense padded matrix
    wh = jnp.zeros((D, N_PAD), jnp.float32)
    wh = wh.at[:, :N_ARTIST].set(p["wa"])
    wh = wh.at[:, N_ARTIST:N_ARTIST + N_STYLE].set(p["ws"])
    wh = wh.at[:, N_ARTIST + N_STYLE:N_CLS].set(p["wg"])
    bh = jnp.zeros((1, N_PAD), jnp.float32)
    bh = bh.at[:, :N_ARTIST].set(p["ba"])
    bh = bh.at[:, N_ARTIST:N_ARTIST + N_STYLE].set(p["bs"])
    bh = bh.at[:, N_ARTIST + N_STYLE:N_CLS].set(p["bg"])

    return {
        "w_patch": bf16(p["w_patch"]), "offsets": offsets, "ln": ln,
        "wqkv": bf16(wqkv), "bqkv": bqkv, "wo": bf16(wo), "bo": bo,
        "w1": bf16(w1), "b1": b1, "w2": bf16(w2), "b2": b2,
        "lnf": lnf, "wh": bf16(wh), "bh": bh,
    }


if __name__ == "__main__":
    key = jax.random.PRNGKey(0)
    k_img, k_par = jax.random.split(key)
    x_img = jax.random.normal(k_img, (B, C, IMG, IMG), dtype=jnp.float32)
    packed = pack_params(init_params(k_par))

    fwd = jax.jit(vit_forward)
    x_artist, x_style, x_genre = jax.block_until_ready(fwd(x_img, packed))

    assert x_artist.shape == (B, N_ARTIST)
    assert x_style.shape == (B, N_STYLE)
    assert x_genre.shape == (B, N_GENRE)
    assert bool(jnp.all(jnp.isfinite(x_artist)))
    assert bool(jnp.all(jnp.isfinite(x_style)))
    assert bool(jnp.all(jnp.isfinite(x_genre)))
    print("KERNEL_OK")
</pallas_src>

<mosaic_0001>
module attributes {stable_mosaic.version = 11 : i64} {
  func.func @vit_fused_kernel(%arg0: i32, %arg1: memref<1x10x768xbf16, #tpu.memory_space<vmem>>, %arg2: memref<768x64xbf16, #tpu.memory_space<vmem>>, %arg3: memref<10x64xf32, #tpu.memory_space<vmem>>, %arg4: memref<2x4x64xf32, #tpu.memory_space<vmem>>, %arg5: memref<2x64x192xbf16, #tpu.memory_space<vmem>>, %arg6: memref<2x1x192xf32, #tpu.memory_space<vmem>>, %arg7: memref<2x64x64xbf16, #tpu.memory_space<vmem>>, %arg8: memref<2x1x64xf32, #tpu.memory_space<vmem>>, %arg9: memref<2x64x256xbf16, #tpu.memory_space<vmem>>, %arg10: memref<2x1x256xf32, #tpu.memory_space<vmem>>, %arg11: memref<2x256x64xbf16, #tpu.memory_space<vmem>>, %arg12: memref<2x1x64xf32, #tpu.memory_space<vmem>>, %arg13: memref<2x64xf32, #tpu.memory_space<vmem>>, %arg14: memref<64x128xbf16, #tpu.memory_space<vmem>>, %arg15: memref<1x128xf32, #tpu.memory_space<vmem>>, %arg16: memref<1x2x128xf32, #tpu.memory_space<vmem>>) attributes {dimension_semantics = [#tpu.dimension_semantics<parallel>], iteration_bounds = array<i64: 1>, scalar_prefetch = 0 : i64, scratch_operands = 0 : i64, tpu.core_type = #tpu.core_type<tc>, window_params = [{transform_indices = @transform_0, window_bounds = array<i64: 1, 10, 768>}, {pipeline_mode = #tpu.pipeline_mode<synchronous>, transform_indices = @transform_1, window_bounds = array<i64: 768, 64>}, {pipeline_mode = #tpu.pipeline_mode<synchronous>, transform_indices = @transform_2, window_bounds = array<i64: 10, 64>}, {pipeline_mode = #tpu.pipeline_mode<synchronous>, transform_indices = @transform_3, window_bounds = array<i64: 2, 4, 64>}, {pipeline_mode = #tpu.pipeline_mode<synchronous>, transform_indices = @transform_4, window_bounds = array<i64: 2, 64, 192>}, {pipeline_mode = #tpu.pipeline_mode<synchronous>, transform_indices = @transform_5, window_bounds = array<i64: 2, 1, 192>}, {pipeline_mode = #tpu.pipeline_mode<synchronous>, transform_indices = @transform_6, window_bounds = array<i64: 2, 64, 64>}, {pipeline_mode = #tpu.pipeline_mode<synchronous>, transform_indices = @transform_7, window_bounds = array<i64: 2, 1, 64>}, {pipeline_mode = #tpu.pipeline_mode<synchronous>, transform_indices = @transform_8, window_bounds = array<i64: 2, 64, 256>}, {pipeline_mode = #tpu.pipeline_mode<synchronous>, transform_indices = @transform_9, window_bounds = array<i64: 2, 1, 256>}, {pipeline_mode = #tpu.pipeline_mode<synchronous>, transform_indices = @transform_10, window_bounds = array<i64: 2, 256, 64>}, {pipeline_mode = #tpu.pipeline_mode<synchronous>, transform_indices = @transform_11, window_bounds = array<i64: 2, 1, 64>}, {pipeline_mode = #tpu.pipeline_mode<synchronous>, transform_indices = @transform_12, window_bounds = array<i64: 2, 64>}, {pipeline_mode = #tpu.pipeline_mode<synchronous>, transform_indices = @transform_13, window_bounds = array<i64: 64, 128>}, {pipeline_mode = #tpu.pipeline_mode<synchronous>, transform_indices = @transform_14, window_bounds = array<i64: 1, 128>}, {transform_indices = @transform_15, window_bounds = array<i64: 1, 2, 128>}]} {
    %c0 = arith.constant 0 : index
    %c0_0 = arith.constant 0 : index
    %c0_1 = arith.constant 0 : index
    %0 = vector.load %arg1[%c0, %c0_0, %c0_1] : memref<1x10x768xbf16, #tpu.memory_space<vmem>>, vector<1x10x768xbf16>
    %1 = vector.shape_cast %0 : vector<1x10x768xbf16> to vector<10x768xbf16>
    %c0_2 = arith.constant 0 : index
    %c0_3 = arith.constant 0 : index
    %2 = vector.load %arg2[%c0_2, %c0_3] : memref<768x64xbf16, #tpu.memory_space<vmem>>, vector<768x64xbf16>
    %cst = arith.constant dense<0.000000e+00> : vector<10x64xf32>
    %3 = tpu.matmul %1, %2, %cst {dimension_numbers = #tpu.dot_dimension_numbers<[1], [0], [0], [1], [0, 0, 1, 1], [], []>} : vector<10x768xbf16>, vector<768x64xbf16>, vector<10x64xf32> -> vector<10x64xf32>
    %c0_4 = arith.constant 0 : index
    %c0_5 = arith.constant 0 : index
    %4 = vector.load %arg3[%c0_4, %c0_5] : memref<10x64xf32, #tpu.memory_space<vmem>>, vector<10x64xf32>
    %5 = arith.addf %3, %4 : vector<10x64xf32>
    %c0_6 = arith.constant 0 : index
    %c0_7 = arith.constant 0 : index
    %c0_8 = arith.constant 0 : index
    %6 = vector.load %arg4[%c0_6, %c0_7, %c0_8] : memref<2x4x64xf32, #tpu.memory_space<vmem>>, vector<1x4x64xf32>
    %7 = vector.shape_cast %6 : vector<1x4x64xf32> to vector<4x64xf32>
    %8 = vector.extract_strided_slice %7 {offsets = [0, 0], sizes = [1, 64], strides = [1, 1]} : vector<4x64xf32> to vector<1x64xf32>
    %9 = vector.extract_strided_slice %7 {offsets = [1, 0], sizes = [1, 64], strides = [1, 1]} : vector<4x64xf32> to vector<1x64xf32>
    %cst_9 = arith.constant dense<0.000000e+00> : vector<10xf32>
    %10 = vector.multi_reduction <add>, %5, %cst_9 [1] : vector<10x64xf32> to vector<10xf32>
    %11 = vector.shape_cast %10 : vector<10xf32> to vector<10x1xf32>
    %cst_10 = arith.constant 6.400000e+01 : f32
    %12 = vector.broadcast %cst_10 : f32 to vector<10x1xf32>
    %13 = arith.divf %11, %12 : vector<10x1xf32>
    %14 = arith.mulf %5, %5 : vector<10x64xf32>
    %cst_11 = arith.constant dense<0.000000e+00> : vector<10xf32>
    %15 = vector.multi_reduction <add>, %14, %cst_11 [1] : vector<10x64xf32> to vector<10xf32>
    %16 = vector.shape_cast %15 : vector<10xf32> to vector<10x1xf32>
    %cst_12 = arith.constant 6.400000e+01 : f32
    %17 = vector.broadcast %cst_12 : f32 to vector<10x1xf32>
    %18 = arith.divf %16, %17 : vector<10x1xf32>
    %19 = arith.mulf %13, %13 : vector<10x1xf32>
    %20 = arith.subf %18, %19 : vector<10x1xf32>
    %21 = vector.broadcast %13 : vector<10x1xf32> to vector<10x64xf32>
    %22 = arith.subf %5, %21 : vector<10x64xf32>
    %cst_13 = arith.constant 9.99999997E-7 : f32
    %23 = vector.broadcast %cst_13 : f32 to vector<10x1xf32>
    %24 = arith.addf %20, %23 : vector<10x1xf32>
    %25 = math.rsqrt %24 : vector<10x1xf32>
    %26 = vector.broadcast %25 : vector<10x1xf32> to vector<10x64xf32>
    %27 = arith.mulf %22, %26 : vector<10x64xf32>
    %28 = vector.broadcast %8 : vector<1x64xf32> to vector<10x64xf32>
    %29 = arith.mulf %27, %28 : vector<10x64xf32>
    %30 = vector.broadcast %9 : vector<1x64xf32> to vector<10x64xf32>
    %31 = arith.addf %29, %30 : vector<10x64xf32>
    %32 = arith.truncf %31 : vector<10x64xf32> to vector<10x64xbf16>
    %c0_14 = arith.constant 0 : index
    %c0_15 = arith.constant 0 : index
    %c0_16 = arith.constant 0 : index
    %33 = vector.load %arg5[%c0_14, %c0_15, %c0_16] : memref<2x64x192xbf16, #tpu.memory_space<vmem>>, vector<1x64x192xbf16>
    %34 = vector.shape_cast %33 : vector<1x64x192xbf16> to vector<64x192xbf16>
    %cst_17 = arith.constant dense<0.000000e+00> : vector<10x192xf32>
    %35 = tpu.matmul %32, %34, %cst_17 {dimension_numbers = #tpu.dot_dimension_numbers<[1], [0], [0], [1], [0, 0, 1, 1], [], []>} : vector<10x64xbf16>, vector<64x192xbf16>, vector<10x192xf32> -> vector<10x192xf32>
    %c0_18 = arith.constant 0 : index
    %c0_19 = arith.constant 0 : index
    %c0_20 = arith.constant 0 : index
    %36 = vector.load %arg6[%c0_18, %c0_19, %c0_20] : memref<2x1x192xf32, #tpu.memory_space<vmem>>, vector<1x1x192xf32>
    %37 = vector.shape_cast %36 : vector<1x1x192xf32> to vector<1x192xf32>
    %38 = vector.broadcast %37 : vector<1x192xf32> to vector<10x192xf32>
    %39 = arith.addf %35, %38 : vector<10x192xf32>
    %40 = vector.extract_strided_slice %39 {offsets = [0, 0], sizes = [5, 16], strides = [1, 1]} : vector<10x192xf32> to vector<5x16xf32>
    %41 = vector.extract_strided_slice %39 {offsets = [0, 16], sizes = [5, 16], strides = [1, 1]} : vector<10x192xf32> to vector<5x16xf32>
    %42 = vector.extract_strided_slice %39 {offsets = [0, 32], sizes = [5, 16], strides = [1, 1]} : vector<10x192xf32> to vector<5x16xf32>
    %43 = vector.extract_strided_slice %39 {offsets = [0, 48], sizes = [5, 16], strides = [1, 1]} : vector<10x192xf32> to vector<5x16xf32>
    %44 = vector.extract_strided_slice %39 {offsets = [5, 0], sizes = [5, 16], strides = [1, 1]} : vector<10x192xf32> to vector<5x16xf32>
    %45 = vector.extract_strided_slice %39 {offsets = [5, 16], sizes = [5, 16], strides = [1, 1]} : vector<10x192xf32> to vector<5x16xf32>
    %46 = vector.extract_strided_slice %39 {offsets = [5, 32], sizes = [5, 16], strides = [1, 1]} : vector<10x192xf32> to vector<5x16xf32>
    %47 = vector.extract_strided_slice %39 {offsets = [5, 48], sizes = [5, 16], strides = [1, 1]} : vector<10x192xf32> to vector<5x16xf32>
    %48 = vector.shape_cast %40 : vector<5x16xf32> to vector<1x5x16xf32>
    %49 = vector.shape_cast %41 : vector<5x16xf32> to vector<1x5x16xf32>
    %50 = vector.shape_cast %42 : vector<5x16xf32> to vector<1x5x16xf32>
    %51 = vector.shape_cast %43 : vector<5x16xf32> to vector<1x5x16xf32>
    %52 = vector.shape_cast %44 : vector<5x16xf32> to vector<1x5x16xf32>
    %53 = vector.shape_cast %45 : vector<5x16xf32> to vector<1x5x16xf32>
    %54 = vector.shape_cast %46 : vector<5x16xf32> to vector<1x5x16xf32>
    %55 = vector.shape_cast %47 : vector<5x16xf32> to vector<1x5x16xf32>
    %56 = tpu.concatenate %48, %49, %50, %51, %52, %53, %54, %55 in 0 : vector<1x5x16xf32>, vector<1x5x16xf32>, vector<1x5x16xf32>, vector<1x5x16xf32>, vector<1x5x16xf32>, vector<1x5x16xf32>, vector<1x5x16xf32>, vector<1x5x16xf32> -> vector<8x5x16xf32>
    %57 = vector.extract_strided_slice %39 {offsets = [0, 64], sizes = [5, 16], strides = [1, 1]} : vector<10x192xf32> to vector<5x16xf32>
    %58 = vector.extract_strided_slice %39 {offsets = [0, 80], sizes = [5, 16], strides = [1, 1]} : vector<10x192xf32> to vector<5x16xf32>
    %59 = vector.extract_strided_slice %39 {offsets = [0, 96], sizes = [5, 16], strides = [1, 1]} : vector<10x192xf32> to vector<5x16xf32>
    %60 = vector.extract_strided_slice %39 {offsets = [0, 112], sizes = [5, 16], strides = [1, 1]} : vector<10x192xf32> to vector<5x16xf32>
    %61 = vector.extract_strided_slice %39 {offsets = [5, 64], sizes = [5, 16], strides = [1, 1]} : vector<10x192xf32> to vector<5x16xf32>
    %62 = vector.extract_strided_slice %39 {offsets = [5, 80], sizes = [5, 16], strides = [1, 1]} : vector<10x192xf32> to vector<5x16xf32>
    %63 = vector.extract_strided_slice %39 {offsets = [5, 96], sizes = [5, 16], strides = [1, 1]} : vector<10x192xf32> to vector<5x16xf32>
    %64 = vector.extract_strided_slice %39 {offsets = [5, 112], sizes = [5, 16], strides = [1, 1]} : vector<10x192xf32> to vector<5x16xf32>
    %65 = vector.shape_cast %57 : vector<5x16xf32> to vector<1x5x16xf32>
    %66 = vector.shape_cast %58 : vector<5x16xf32> to vector<1x5x16xf32>
    %67 = vector.shape_cast %59 : vector<5x16xf32> to vector<1x5x16xf32>
    %68 = vector.shape_cast %60 : vector<5x16xf32> to vector<1x5x16xf32>
    %69 = vector.shape_cast %61 : vector<5x16xf32> to vector<1x5x16xf32>
    %70 = vector.shape_cast %62 : vector<5x16xf32> to vector<1x5x16xf32>
    %71 = vector.shape_cast %63 : vector<5x16xf32> to vector<1x5x16xf32>
    %72 = vector.shape_cast %64 : vector<5x16xf32> to vector<1x5x16xf32>
    %73 = tpu.concatenate %65, %66, %67, %68, %69, %70, %71, %72 in 0 : vector<1x5x16xf32>, vector<1x5x16xf32>, vector<1x5x16xf32>, vector<1x5x16xf32>, vector<1x5x16xf32>, vector<1x5x16xf32>, vector<1x5x16xf32>, vector<1x5x16xf32> -> vector<8x5x16xf32>
    %74 = vector.extract_strided_slice %39 {offsets = [0, 128], sizes = [5, 16], strides = [1, 1]} : vector<10x192xf32> to vector<5x16xf32>
    %75 = vector.extract_strided_slice %39 {offsets = [0, 144], sizes = [5, 16], strides = [1, 1]} : vector<10x192xf32> to vector<5x16xf32>
    %76 = vector.extract_strided_slice %39 {offsets = [0, 160], sizes = [5, 16], strides = [1, 1]} : vector<10x192xf32> to vector<5x16xf32>
    %77 = vector.extract_strided_slice %39 {offsets = [0, 176], sizes = [5, 16], strides = [1, 1]} : vector<10x192xf32> to vector<5x16xf32>
    %78 = vector.extract_strided_slice %39 {offsets = [5, 128], sizes = [5, 16], strides = [1, 1]} : vector<10x192xf32> to vector<5x16xf32>
    %79 = vector.extract_strided_slice %39 {offsets = [5, 144], sizes = [5, 16], strides = [1, 1]} : vector<10x192xf32> to vector<5x16xf32>
    %80 = vector.extract_strided_slice %39 {offsets = [5, 160], sizes = [5, 16], strides = [1, 1]} : vector<10x192xf32> to vector<5x16xf32>
    %81 = vector.extract_strided_slice %39 {offsets = [5, 176], sizes = [5, 16], strides = [1, 1]} : vector<10x192xf32> to vector<5x16xf32>
    %82 = vector.shape_cast %74 : vector<5x16xf32> to vector<1x5x16xf32>
    %83 = vector.shape_cast %75 : vector<5x16xf32> to vector<1x5x16xf32>
    %84 = vector.shape_cast %76 : vector<5x16xf32> to vector<1x5x16xf32>
    %85 = vector.shape_cast %77 : vector<5x16xf32> to vector<1x5x16xf32>
    %86 = vector.shape_cast %78 : vector<5x16xf32> to vector<1x5x16xf32>
    %87 = vector.shape_cast %79 : vector<5x16xf32> to vector<1x5x16xf32>
    %88 = vector.shape_cast %80 : vector<5x16xf32> to vector<1x5x16xf32>
    %89 = vector.shape_cast %81 : vector<5x16xf32> to vector<1x5x16xf32>
    %90 = tpu.concatenate %82, %83, %84, %85, %86, %87, %88, %89 in 0 : vector<1x5x16xf32>, vector<1x5x16xf32>, vector<1x5x16xf32>, vector<1x5x16xf32>, vector<1x5x16xf32>, vector<1x5x16xf32>, vector<1x5x16xf32>, vector<1x5x16xf32> -> vector<8x5x16xf32>
    %91 = arith.truncf %56 : vector<8x5x16xf32> to vector<8x5x16xbf16>
    %92 = arith.truncf %73 : vector<8x5x16xf32> to vector<8x5x16xbf16>
    "tpu.trace_start"() <{level = 10 : i32, message = "nse,nte->nst"}> : () -> ()
    %cst_21 = arith.constant dense<0.000000e+00> : vector<8x5x5xf32>
    %93 = tpu.matmul %91, %92, %cst_21 {dimension_numbers = #tpu.dot_dimension_numbers<[2], [2], [1], [1], [0, 0, 0, 1, 1, 1], [0], [0]>} : vector<8x5x16xbf16>, vector<8x5x16xbf16>, vector<8x5x5xf32> -> vector<8x5x5xf32>
    "tpu.trace_stop"() : () -> ()
    %cst_22 = arith.constant 2.500000e-01 : f32
    %94 = vector.broadcast %cst_22 : f32 to vector<8x5x5xf32>
    %95 = arith.mulf %93, %94 : vector<8x5x5xf32>
    %cst_23 = arith.constant dense<0xFF800000> : vector<8x5xf32>
    %96 = vector.multi_reduction <maximumf>, %95, %cst_23 [2] : vector<8x5x5xf32> to vector<8x5xf32>
    %97 = vector.shape_cast %96 : vector<8x5xf32> to vector<8x5x1xf32>
    %98 = vector.broadcast %97 : vector<8x5x1xf32> to vector<8x5x5xf32>
    %99 = arith.subf %95, %98 : vector<8x5x5xf32>
    %100 = math.exp %99 : vector<8x5x5xf32>
    %cst_24 = arith.constant dense<0.000000e+00> : vector<8x5xf32>
    %101 = vector.multi_reduction <add>, %100, %cst_24 [2] : vector<8x5x5xf32> to vector<8x5xf32>
    %102 = vector.shape_cast %101 : vector<8x5xf32> to vector<8x5x1xf32>
    %103 = tpu.reciprocal %102 {approx = true} : vector<8x5x1xf32> -> vector<8x5x1xf32>
    %104 = vector.broadcast %103 : vector<8x5x1xf32> to vector<8x5x5xf32>
    %105 = arith.mulf %100, %104 : vector<8x5x5xf32>
    %106 = arith.truncf %105 : vector<8x5x5xf32> to vector<8x5x5xbf16>
    %107 = arith.truncf %90 : vector<8x5x16xf32> to vector<8x5x16xbf16>
    "tpu.trace_start"() <{level = 10 : i32, message = "nst,nte->nse"}> : () -> ()
    %cst_25 = arith.constant dense<0.000000e+00> : vector<8x5x16xf32>
    %108 = tpu.matmul %106, %107, %cst_25 {dimension_numbers = #tpu.dot_dimension_numbers<[2], [1], [1], [2], [0, 0, 0, 1, 1, 2], [0], [0]>} : vector<8x5x5xbf16>, vector<8x5x16xbf16>, vector<8x5x16xf32> -> vector<8x5x16xf32>
    "tpu.trace_stop"() : () -> ()
    %109 = vector.extract_strided_slice %108 {offsets = [0, 0, 0], sizes = [1, 5, 16], strides = [1, 1, 1]} : vector<8x5x16xf32> to vector<1x5x16xf32>
    %110 = vector.shape_cast %109 : vector<1x5x16xf32> to vector<5x16xf32>
    %111 = vector.extract_strided_slice %108 {offsets = [1, 0, 0], sizes = [1, 5, 16], strides = [1, 1, 1]} : vector<8x5x16xf32> to vector<1x5x16xf32>
    %112 = vector.shape_cast %111 : vector<1x5x16xf32> to vector<5x16xf32>
    %113 = vector.extract_strided_slice %108 {offsets = [2, 0, 0], sizes = [1, 5, 16], strides = [1, 1, 1]} : vector<8x5x16xf32> to vector<1x5x16xf32>
    %114 = vector.shape_cast %113 : vector<1x5x16xf32> to vector<5x16xf32>
    %115 = vector.extract_strided_slice %108 {offsets = [3, 0, 0], sizes = [1, 5, 16], strides = [1, 1, 1]} : vector<8x5x16xf32> to vector<1x5x16xf32>
    %116 = vector.shape_cast %115 : vector<1x5x16xf32> to vector<5x16xf32>
    %117 = tpu.concatenate %110, %112, %114, %116 in 1 : vector<5x16xf32>, vector<5x16xf32>, vector<5x16xf32>, vector<5x16xf32> -> vector<5x64xf32>
    %118 = vector.extract_strided_slice %108 {offsets = [4, 0, 0], sizes = [1, 5, 16], strides = [1, 1, 1]} : vector<8x5x16xf32> to vector<1x5x16xf32>
    %119 = vector.shape_cast %118 : vector<1x5x16xf32> to vector<5x16xf32>
    %120 = vector.extract_strided_slice %108 {offsets = [5, 0, 0], sizes = [1, 5, 16], strides = [1, 1, 1]} : vector<8x5x16xf32> to vector<1x5x16xf32>
    %121 = vector.shape_cast %120 : vector<1x5x16xf32> to vector<5x16xf32>
    %122 = vector.extract_strided_slice %108 {offsets = [6, 0, 0], sizes = [1, 5, 16], strides = [1, 1, 1]} : vector<8x5x16xf32> to vector<1x5x16xf32>
    %123 = vector.shape_cast %122 : vector<1x5x16xf32> to vector<5x16xf32>
    %124 = vector.extract_strided_slice %108 {offsets = [7, 0, 0], sizes = [1, 5, 16], strides = [1, 1, 1]} : vector<8x5x16xf32> to vector<1x5x16xf32>
    %125 = vector.shape_cast %124 : vector<1x5x16xf32> to vector<5x16xf32>
    %126 = tpu.concatenate %119, %121, %123, %125 in 1 : vector<5x16xf32>, vector<5x16xf32>, vector<5x16xf32>, vector<5x16xf32> -> vector<5x64xf32>
    %127 = tpu.concatenate %117, %126 in 0 : vector<5x64xf32>, vector<5x64xf32> -> vector<10x64xf32>
    %128 = arith.truncf %127 : vector<10x64xf32> to vector<10x64xbf16>
    %c0_26 = arith.constant 0 : index
    %c0_27 = arith.constant 0 : index
    %c0_28 = arith.constant 0 : index
    %129 = vector.load %arg7[%c0_26, %c0_27, %c0_28] : memref<2x64x64xbf16, #tpu.memory_space<vmem>>, vector<1x64x64xbf16>
    %130 = vector.shape_cast %129 : vector<1x64x64xbf16> to vector<64x64xbf16>
    %cst_29 = arith.constant dense<0.000000e+00> : vector<10x64xf32>
    %131 = tpu.matmul %128, %130, %cst_29 {dimension_numbers = #tpu.dot_dimension_numbers<[1], [0], [0], [1], [0, 0, 1, 1], [], []>} : vector<10x64xbf16>, vector<64x64xbf16>, vector<10x64xf32> -> vector<10x64xf32>
    %c0_30 = arith.constant 0 : index
    %c0_31 = arith.constant 0 : index
    %c0_32 = arith.constant 0 : index
    %132 = vector.load %arg8[%c0_30, %c0_31, %c0_32] : memref<2x1x64xf32, #tpu.memory_space<vmem>>, vector<1x1x64xf32>
    %133 = vector.shape_cast %132 : vector<1x1x64xf32> to vector<1x64xf32>
    %134 = vector.broadcast %133 : vector<1x64xf32> to vector<10x64xf32>
    %135 = arith.addf %131, %134 : vector<10x64xf32>
    %136 = arith.addf %5, %135 : vector<10x64xf32>
    %137 = vector.extract_strided_slice %7 {offsets = [2, 0], sizes = [1, 64], strides = [1, 1]} : vector<4x64xf32> to vector<1x64xf32>
    %138 = vector.extract_strided_slice %7 {offsets = [3, 0], sizes = [1, 64], strides = [1, 1]} : vector<4x64xf32> to vector<1x64xf32>
    %cst_33 = arith.constant dense<0.000000e+00> : vector<10xf32>
    %139 = vector.multi_reduction <add>, %136, %cst_33 [1] : vector<10x64xf32> to vector<10xf32>
    %140 = vector.shape_cast %139 : vector<10xf32> to vector<10x1xf32>
    %cst_34 = arith.constant 6.400000e+01 : f32
    %141 = vector.broadcast %cst_34 : f32 to vector<10x1xf32>
    %142 = arith.divf %140, %141 : vector<10x1xf32>
    %143 = arith.mulf %136, %136 : vector<10x64xf32>
    %cst_35 = arith.constant dense<0.000000e+00> : vector<10xf32>
    %144 = vector.multi_reduction <add>, %143, %cst_35 [1] : vector<10x64xf32> to vector<10xf32>
    %145 = vector.shape_cast %144 : vector<10xf32> to vector<10x1xf32>
    %cst_36 = arith.constant 6.400000e+01 : f32
    %146 = vector.broadcast %cst_36 : f32 to vector<10x1xf32>
    %147 = arith.divf %145, %146 : vector<10x1xf32>
    %148 = arith.mulf %142, %142 : vector<10x1xf32>
    %149 = arith.subf %147, %148 : vector<10x1xf32>
    %150 = vector.broadcast %142 : vector<10x1xf32> to vector<10x64xf32>
    %151 = arith.subf %136, %150 : vector<10x64xf32>
    %cst_37 = arith.constant 9.99999997E-7 : f32
    %152 = vector.broadcast %cst_37 : f32 to vector<10x1xf32>
    %153 = arith.addf %149, %152 : vector<10x1xf32>
    %154 = math.rsqrt %153 : vector<10x1xf32>
    %155 = vector.broadcast %154 : vector<10x1xf32> to vector<10x64xf32>
    %156 = arith.mulf %151, %155 : vector<10x64xf32>
    %157 = vector.broadcast %137 : vector<1x64xf32> to vector<10x64xf32>
    %158 = arith.mulf %156, %157 : vector<10x64xf32>
    %159 = vector.broadcast %138 : vector<1x64xf32> to vector<10x64xf32>
    %160 = arith.addf %158, %159 : vector<10x64xf32>
    %161 = arith.truncf %160 : vector<10x64xf32> to vector<10x64xbf16>
    %c0_38 = arith.constant 0 : index
    %c0_39 = arith.constant 0 : index
    %c0_40 = arith.constant 0 : index
    %162 = vector.load %arg9[%c0_38, %c0_39, %c0_40] : memref<2x64x256xbf16, #tpu.memory_space<vmem>>, vector<1x64x256xbf16>
    %163 = vector.shape_cast %162 : vector<1x64x256xbf16> to vector<64x256xbf16>
    %cst_41 = arith.constant dense<0.000000e+00> : vector<10x256xf32>
    %164 = tpu.matmul %161, %163, %cst_41 {dimension_numbers = #tpu.dot_dimension_numbers<[1], [0], [0], [1], [0, 0, 1, 1], [], []>} : vector<10x64xbf16>, vector<64x256xbf16>, vector<10x256xf32> -> vector<10x256xf32>
    %c0_42 = arith.constant 0 : index
    %c0_43 = arith.constant 0 : index
    %c0_44 = arith.constant 0 : index
    %165 = vector.load %arg10[%c0_42, %c0_43, %c0_44] : memref<2x1x256xf32, #tpu.memory_space<vmem>>, vector<1x1x256xf32>
    %166 = vector.shape_cast %165 : vector<1x1x256xf32> to vector<1x256xf32>
    %167 = vector.broadcast %166 : vector<1x256xf32> to vector<10x256xf32>
    %168 = arith.addf %164, %167 : vector<10x256xf32>
    %169 = arith.mulf %168, %168 : vector<10x256xf32>
    %170 = arith.mulf %168, %169 : vector<10x256xf32>
    %cst_45 = arith.constant 4.471500e-02 : f32
    %171 = vector.broadcast %cst_45 : f32 to vector<10x256xf32>
    %172 = arith.mulf %171, %170 : vector<10x256xf32>
    %173 = arith.addf %168, %172 : vector<10x256xf32>
    %cst_46 = arith.constant 0.797884583 : f32
    %174 = vector.broadcast %cst_46 : f32 to vector<10x256xf32>
    %175 = arith.mulf %174, %173 : vector<10x256xf32>
    %176 = math.tanh %175 : vector<10x256xf32>
    %cst_47 = arith.constant 1.000000e+00 : f32
    %177 = vector.broadcast %cst_47 : f32 to vector<10x256xf32>
    %178 = arith.addf %177, %176 : vector<10x256xf32>
    %cst_48 = arith.constant 5.000000e-01 : f32
    %179 = vector.broadcast %cst_48 : f32 to vector<10x256xf32>
    %180 = arith.mulf %179, %178 : vector<10x256xf32>
    %181 = arith.mulf %168, %180 : vector<10x256xf32>
    %182 = arith.truncf %181 : vector<10x256xf32> to vector<10x256xbf16>
    %c0_49 = arith.constant 0 : index
    %c0_50 = arith.constant 0 : index
    %c0_51 = arith.constant 0 : index
    %183 = vector.load %arg11[%c0_49, %c0_50, %c0_51] : memref<2x256x64xbf16, #tpu.memory_space<vmem>>, vector<1x256x64xbf16>
    %184 = vector.shape_cast %183 : vector<1x256x64xbf16> to vector<256x64xbf16>
    %cst_52 = arith.constant dense<0.000000e+00> : vector<10x64xf32>
    %185 = tpu.matmul %182, %184, %cst_52 {dimension_numbers = #tpu.dot_dimension_numbers<[1], [0], [0], [1], [0, 0, 1, 1], [], []>} : vector<10x256xbf16>, vector<256x64xbf16>, vector<10x64xf32> -> vector<10x64xf32>
    %c0_53 = arith.constant 0 : index
    %c0_54 = arith.constant 0 : index
    %c0_55 = arith.constant 0 : index
    %186 = vector.load %arg12[%c0_53, %c0_54, %c0_55] : memref<2x1x64xf32, #tpu.memory_space<vmem>>, vector<1x1x64xf32>
    %187 = vector.shape_cast %186 : vector<1x1x64xf32> to vector<1x64xf32>
    %188 = vector.broadcast %187 : vector<1x64xf32> to vector<10x64xf32>
    %189 = arith.addf %185, %188 : vector<10x64xf32>
    %190 = arith.addf %136, %189 : vector<10x64xf32>
    %c1 = arith.constant 1 : index
    %c0_56 = arith.constant 0 : index
    %c0_57 = arith.constant 0 : index
    %191 = vector.load %arg4[%c1, %c0_56, %c0_57] : memref<2x4x64xf32, #tpu.memory_space<vmem>>, vector<1x4x64xf32>
    %192 = vector.shape_cast %191 : vector<1x4x64xf32> to vector<4x64xf32>
    %193 = vector.extract_strided_slice %192 {offsets = [0, 0], sizes = [1, 64], strides = [1, 1]} : vector<4x64xf32> to vector<1x64xf32>
    %194 = vector.extract_strided_slice %192 {offsets = [1, 0], sizes = [1, 64], strides = [1, 1]} : vector<4x64xf32> to vector<1x64xf32>
    %cst_58 = arith.constant dense<0.000000e+00> : vector<10xf32>
    %195 = vector.multi_reduction <add>, %190, %cst_58 [1] : vector<10x64xf32> to vector<10xf32>
    %196 = vector.shape_cast %195 : vector<10xf32> to vector<10x1xf32>
    %cst_59 = arith.constant 6.400000e+01 : f32
    %197 = vector.broadcast %cst_59 : f32 to vector<10x1xf32>
    %198 = arith.divf %196, %197 : vector<10x1xf32>
    %199 = arith.mulf %190, %190 : vector<10x64xf32>
    %cst_60 = arith.constant dense<0.000000e+00> : vector<10xf32>
    %200 = vector.multi_reduction <add>, %199, %cst_60 [1] : vector<10x64xf32> to vector<10xf32>
    %201 = vector.shape_cast %200 : vector<10xf32> to vector<10x1xf32>
    %cst_61 = arith.constant 6.400000e+01 : f32
    %202 = vector.broadcast %cst_61 : f32 to vector<10x1xf32>
    %203 = arith.divf %201, %202 : vector<10x1xf32>
    %204 = arith.mulf %198, %198 : vector<10x1xf32>
    %205 = arith.subf %203, %204 : vector<10x1xf32>
    %206 = vector.broadcast %198 : vector<10x1xf32> to vector<10x64xf32>
    %207 = arith.subf %190, %206 : vector<10x64xf32>
    %cst_62 = arith.constant 9.99999997E-7 : f32
    %208 = vector.broadcast %cst_62 : f32 to vector<10x1xf32>
    %209 = arith.addf %205, %208 : vector<10x1xf32>
    %210 = math.rsqrt %209 : vector<10x1xf32>
    %211 = vector.broadcast %210 : vector<10x1xf32> to vector<10x64xf32>
    %212 = arith.mulf %207, %211 : vector<10x64xf32>
    %213 = vector.broadcast %193 : vector<1x64xf32> to vector<10x64xf32>
    %214 = arith.mulf %212, %213 : vector<10x64xf32>
    %215 = vector.broadcast %194 : vector<1x64xf32> to vector<10x64xf32>
    %216 = arith.addf %214, %215 : vector<10x64xf32>
    %217 = arith.truncf %216 : vector<10x64xf32> to vector<10x64xbf16>
    %c1_63 = arith.constant 1 : index
    %c0_64 = arith.constant 0 : index
    %c0_65 = arith.constant 0 : index
    %218 = vector.load %arg5[%c1_63, %c0_64, %c0_65] : memref<2x64x192xbf16, #tpu.memory_space<vmem>>, vector<1x64x192xbf16>
    %219 = vector.shape_cast %218 : vector<1x64x192xbf16> to vector<64x192xbf16>
    %cst_66 = arith.constant dense<0.000000e+00> : vector<10x192xf32>
    %220 = tpu.matmul %217, %219, %cst_66 {dimension_numbers = #tpu.dot_dimension_numbers<[1], [0], [0], [1], [0, 0, 1, 1], [], []>} : vector<10x64xbf16>, vector<64x192xbf16>, vector<10x192xf32> -> vector<10x192xf32>
    %c1_67 = arith.constant 1 : index
    %c0_68 = arith.constant 0 : index
    %c0_69 = arith.constant 0 : index
    %221 = vector.load %arg6[%c1_67, %c0_68, %c0_69] : memref<2x1x192xf32, #tpu.memory_space<vmem>>, vector<1x1x192xf32>
    %222 = vector.shape_cast %221 : vector<1x1x192xf32> to vector<1x192xf32>
    %223 = vector.broadcast %222 : vector<1x192xf32> to vector<10x192xf32>
    %224 = arith.addf %220, %223 : vector<10x192xf32>
    %225 = vector.extract_strided_slice %224 {offsets = [0, 0], sizes = [5, 16], strides = [1, 1]} : vector<10x192xf32> to vector<5x16xf32>
    %226 = vector.extract_strided_slice %224 {offsets = [0, 16], sizes = [5, 16], strides = [1, 1]} : vector<10x192xf32> to vector<5x16xf32>
    %227 = vector.extract_strided_slice %224 {offsets = [0, 32], sizes = [5, 16], strides = [1, 1]} : vector<10x192xf32> to vector<5x16xf32>
    %228 = vector.extract_strided_slice %224 {offsets = [0, 48], sizes = [5, 16], strides = [1, 1]} : vector<10x192xf32> to vector<5x16xf32>
    %229 = vector.extract_strided_slice %224 {offsets = [5, 0], sizes = [5, 16], strides = [1, 1]} : vector<10x192xf32> to vector<5x16xf32>
    %230 = vector.extract_strided_slice %224 {offsets = [5, 16], sizes = [5, 16], strides = [1, 1]} : vector<10x192xf32> to vector<5x16xf32>
    %231 = vector.extract_strided_slice %224 {offsets = [5, 32], sizes = [5, 16], strides = [1, 1]} : vector<10x192xf32> to vector<5x16xf32>
    %232 = vector.extract_strided_slice %224 {offsets = [5, 48], sizes = [5, 16], strides = [1, 1]} : vector<10x192xf32> to vector<5x16xf32>
    %233 = vector.shape_cast %225 : vector<5x16xf32> to vector<1x5x16xf32>
    %234 = vector.shape_cast %226 : vector<5x16xf32> to vector<1x5x16xf32>
    %235 = vector.shape_cast %227 : vector<5x16xf32> to vector<1x5x16xf32>
    %236 = vector.shape_cast %228 : vector<5x16xf32> to vector<1x5x16xf32>
    %237 = vector.shape_cast %229 : vector<5x16xf32> to vector<1x5x16xf32>
    %238 = vector.shape_cast %230 : vector<5x16xf32> to vector<1x5x16xf32>
    %239 = vector.shape_cast %231 : vector<5x16xf32> to vector<1x5x16xf32>
    %240 = vector.shape_cast %232 : vector<5x16xf32> to vector<1x5x16xf32>
    %241 = tpu.concatenate %233, %234, %235, %236, %237, %238, %239, %240 in 0 : vector<1x5x16xf32>, vector<1x5x16xf32>, vector<1x5x16xf32>, vector<1x5x16xf32>, vector<1x5x16xf32>, vector<1x5x16xf32>, vector<1x5x16xf32>, vector<1x5x16xf32> -> vector<8x5x16xf32>
    %242 = vector.extract_strided_slice %224 {offsets = [0, 64], sizes = [5, 16], strides = [1, 1]} : vector<10x192xf32> to vector<5x16xf32>
    %243 = vector.extract_strided_slice %224 {offsets = [0, 80], sizes = [5, 16], strides = [1, 1]} : vector<10x192xf32> to vector<5x16xf32>
    %244 = vector.extract_strided_slice %224 {offsets = [0, 96], sizes = [5, 16], strides = [1, 1]} : vector<10x192xf32> to vector<5x16xf32>
    %245 = vector.extract_strided_slice %224 {offsets = [0, 112], sizes = [5, 16], strides = [1, 1]} : vector<10x192xf32> to vector<5x16xf32>
    %246 = vector.extract_strided_slice %224 {offsets = [5, 64], sizes = [5, 16], strides = [1, 1]} : vector<10x192xf32> to vector<5x16xf32>
    %247 = vector.extract_strided_slice %224 {offsets = [5, 80], sizes = [5, 16], strides = [1, 1]} : vector<10x192xf32> to vector<5x16xf32>
    %248 = vector.extract_strided_slice %224 {offsets = [5, 96], sizes = [5, 16], strides = [1, 1]} : vector<10x192xf32> to vector<5x16xf32>
    %249 = vector.extract_strided_slice %224 {offsets = [5, 112], sizes = [5, 16], strides = [1, 1]} : vector<10x192xf32> to vector<5x16xf32>
    %250 = vector.shape_cast %242 : vector<5x16xf32> to vector<1x5x16xf32>
    %251 = vector.shape_cast %243 : vector<5x16xf32> to vector<1x5x16xf32>
    %252 = vector.shape_cast %244 : vector<5x16xf32> to vector<1x5x16xf32>
    %253 = vector.shape_cast %245 : vector<5x16xf32> to vector<1x5x16xf32>
    %254 = vector.shape_cast %246 : vector<5x16xf32> to vector<1x5x16xf32>
    %255 = vector.shape_cast %247 : vector<5x16xf32> to vector<1x5x16xf32>
    %256 = vector.shape_cast %248 : vector<5x16xf32> to vector<1x5x16xf32>
    %257 = vector.shape_cast %249 : vector<5x16xf32> to vector<1x5x16xf32>
    %258 = tpu.concatenate %250, %251, %252, %253, %254, %255, %256, %257 in 0 : vector<1x5x16xf32>, vector<1x5x16xf32>, vector<1x5x16xf32>, vector<1x5x16xf32>, vector<1x5x16xf32>, vector<1x5x16xf32>, vector<1x5x16xf32>, vector<1x5x16xf32> -> vector<8x5x16xf32>
    %259 = vector.extract_strided_slice %224 {offsets = [0, 128], sizes = [5, 16], strides = [1, 1]} : vector<10x192xf32> to vector<5x16xf32>
    %260 = vector.extract_strided_slice %224 {offsets = [0, 144], sizes = [5, 16], strides = [1, 1]} : vector<10x192xf32> to vector<5x16xf32>
    %261 = vector.extract_strided_slice %224 {offsets = [0, 160], sizes = [5, 16], strides = [1, 1]} : vector<10x192xf32> to vector<5x16xf32>
    %262 = vector.extract_strided_slice %224 {offsets = [0, 176], sizes = [5, 16], strides = [1, 1]} : vector<10x192xf32> to vector<5x16xf32>
    %263 = vector.extract_strided_slice %224 {offsets = [5, 128], sizes = [5, 16], strides = [1, 1]} : vector<10x192xf32> to vector<5x16xf32>
    %264 = vector.extract_strided_slice %224 {offsets = [5, 144], sizes = [5, 16], strides = [1, 1]} : vector<10x192xf32> to vector<5x16xf32>
    %265 = vector.extract_strided_slice %224 {offsets = [5, 160], sizes = [5, 16], strides = [1, 1]} : vector<10x192xf32> to vector<5x16xf32>
    %266 = vector.extract_strided_slice %224 {offsets = [5, 176], sizes = [5, 16], strides = [1, 1]} : vector<10x192xf32> to vector<5x16xf32>
    %267 = vector.shape_cast %259 : vector<5x16xf32> to vector<1x5x16xf32>
    %268 = vector.shape_cast %260 : vector<5x16xf32> to vector<1x5x16xf32>
    %269 = vector.shape_cast %261 : vector<5x16xf32> to vector<1x5x16xf32>
    %270 = vector.shape_cast %262 : vector<5x16xf32> to vector<1x5x16xf32>
    %271 = vector.shape_cast %263 : vector<5x16xf32> to vector<1x5x16xf32>
    %272 = vector.shape_cast %264 : vector<5x16xf32> to vector<1x5x16xf32>
    %273 = vector.shape_cast %265 : vector<5x16xf32> to vector<1x5x16xf32>
    %274 = vector.shape_cast %266 : vector<5x16xf32> to vector<1x5x16xf32>
    %275 = tpu.concatenate %267, %268, %269, %270, %271, %272, %273, %274 in 0 : vector<1x5x16xf32>, vector<1x5x16xf32>, vector<1x5x16xf32>, vector<1x5x16xf32>, vector<1x5x16xf32>, vector<1x5x16xf32>, vector<1x5x16xf32>, vector<1x5x16xf32> -> vector<8x5x16xf32>
    %276 = arith.truncf %241 : vector<8x5x16xf32> to vector<8x5x16xbf16>
    %277 = arith.truncf %258 : vector<8x5x16xf32> to vector<8x5x16xbf16>
    "tpu.trace_start"() <{level = 10 : i32, message = "nse,nte->nst"}> : () -> ()
    %cst_70 = arith.constant dense<0.000000e+00> : vector<8x5x5xf32>
    %278 = tpu.matmul %276, %277, %cst_70 {dimension_numbers = #tpu.dot_dimension_numbers<[2], [2], [1], [1], [0, 0, 0, 1, 1, 1], [0], [0]>} : vector<8x5x16xbf16>, vector<8x5x16xbf16>, vector<8x5x5xf32> -> vector<8x5x5xf32>
    "tpu.trace_stop"() : () -> ()
    %cst_71 = arith.constant 2.500000e-01 : f32
    %279 = vector.broadcast %cst_71 : f32 to vector<8x5x5xf32>
    %280 = arith.mulf %278, %279 : vector<8x5x5xf32>
    %cst_72 = arith.constant dense<0xFF800000> : vector<8x5xf32>
    %281 = vector.multi_reduction <maximumf>, %280, %cst_72 [2] : vector<8x5x5xf32> to vector<8x5xf32>
    %282 = vector.shape_cast %281 : vector<8x5xf32> to vector<8x5x1xf32>
    %283 = vector.broadcast %282 : vector<8x5x1xf32> to vector<8x5x5xf32>
    %284 = arith.subf %280, %283 : vector<8x5x5xf32>
    %285 = math.exp %284 : vector<8x5x5xf32>
    %cst_73 = arith.constant dense<0.000000e+00> : vector<8x5xf32>
    %286 = vector.multi_reduction <add>, %285, %cst_73 [2] : vector<8x5x5xf32> to vector<8x5xf32>
    %287 = vector.shape_cast %286 : vector<8x5xf32> to vector<8x5x1xf32>
    %288 = tpu.reciprocal %287 {approx = true} : vector<8x5x1xf32> -> vector<8x5x1xf32>
    %289 = vector.broadcast %288 : vector<8x5x1xf32> to vector<8x5x5xf32>
    %290 = arith.mulf %285, %289 : vector<8x5x5xf32>
    %291 = arith.truncf %290 : vector<8x5x5xf32> to vector<8x5x5xbf16>
    %292 = arith.truncf %275 : vector<8x5x16xf32> to vector<8x5x16xbf16>
    "tpu.trace_start"() <{level = 10 : i32, message = "nst,nte->nse"}> : () -> ()
    %cst_74 = arith.constant dense<0.000000e+00> : vector<8x5x16xf32>
    %293 = tpu.matmul %291, %292, %cst_74 {dimension_numbers = #tpu.dot_dimension_numbers<[2], [1], [1], [2], [0, 0, 0, 1, 1, 2], [0], [0]>} : vector<8x5x5xbf16>, vector<8x5x16xbf16>, vector<8x5x16xf32> -> vector<8x5x16xf32>
    "tpu.trace_stop"() : () -> ()
    %294 = vector.extract_strided_slice %293 {offsets = [0, 0, 0], sizes = [1, 5, 16], strides = [1, 1, 1]} : vector<8x5x16xf32> to vector<1x5x16xf32>
    %295 = vector.shape_cast %294 : vector<1x5x16xf32> to vector<5x16xf32>
    %296 = vector.extract_strided_slice %293 {offsets = [1, 0, 0], sizes = [1, 5, 16], strides = [1, 1, 1]} : vector<8x5x16xf32> to vector<1x5x16xf32>
    %297 = vector.shape_cast %296 : vector<1x5x16xf32> to vector<5x16xf32>
    %298 = vector.extract_strided_slice %293 {offsets = [2, 0, 0], sizes = [1, 5, 16], strides = [1, 1, 1]} : vector<8x5x16xf32> to vector<1x5x16xf32>
    %299 = vector.shape_cast %298 : vector<1x5x16xf32> to vector<5x16xf32>
    %300 = vector.extract_strided_slice %293 {offsets = [3, 0, 0], sizes = [1, 5, 16], strides = [1, 1, 1]} : vector<8x5x16xf32> to vector<1x5x16xf32>
    %301 = vector.shape_cast %300 : vector<1x5x16xf32> to vector<5x16xf32>
    %302 = tpu.concatenate %295, %297, %299, %301 in 1 : vector<5x16xf32>, vector<5x16xf32>, vector<5x16xf32>, vector<5x16xf32> -> vector<5x64xf32>
    %303 = vector.extract_strided_slice %293 {offsets = [4, 0, 0], sizes = [1, 5, 16], strides = [1, 1, 1]} : vector<8x5x16xf32> to vector<1x5x16xf32>
    %304 = vector.shape_cast %303 : vector<1x5x16xf32> to vector<5x16xf32>
    %305 = vector.extract_strided_slice %293 {offsets = [5, 0, 0], sizes = [1, 5, 16], strides = [1, 1, 1]} : vector<8x5x16xf32> to vector<1x5x16xf32>
    %306 = vector.shape_cast %305 : vector<1x5x16xf32> to vector<5x16xf32>
    %307 = vector.extract_strided_slice %293 {offsets = [6, 0, 0], sizes = [1, 5, 16], strides = [1, 1, 1]} : vector<8x5x16xf32> to vector<1x5x16xf32>
    %308 = vector.shape_cast %307 : vector<1x5x16xf32> to vector<5x16xf32>
    %309 = vector.extract_strided_slice %293 {offsets = [7, 0, 0], sizes = [1, 5, 16], strides = [1, 1, 1]} : vector<8x5x16xf32> to vector<1x5x16xf32>
    %310 = vector.shape_cast %309 : vector<1x5x16xf32> to vector<5x16xf32>
    %311 = tpu.concatenate %304, %306, %308, %310 in 1 : vector<5x16xf32>, vector<5x16xf32>, vector<5x16xf32>, vector<5x16xf32> -> vector<5x64xf32>
    %312 = tpu.concatenate %302, %311 in 0 : vector<5x64xf32>, vector<5x64xf32> -> vector<10x64xf32>
    %313 = arith.truncf %312 : vector<10x64xf32> to vector<10x64xbf16>
    %c1_75 = arith.constant 1 : index
    %c0_76 = arith.constant 0 : index
    %c0_77 = arith.constant 0 : index
    %314 = vector.load %arg7[%c1_75, %c0_76, %c0_77] : memref<2x64x64xbf16, #tpu.memory_space<vmem>>, vector<1x64x64xbf16>
    %315 = vector.shape_cast %314 : vector<1x64x64xbf16> to vector<64x64xbf16>
    %cst_78 = arith.constant dense<0.000000e+00> : vector<10x64xf32>
    %316 = tpu.matmul %313, %315, %cst_78 {dimension_numbers = #tpu.dot_dimension_numbers<[1], [0], [0], [1], [0, 0, 1, 1], [], []>} : vector<10x64xbf16>, vector<64x64xbf16>, vector<10x64xf32> -> vector<10x64xf32>
    %c1_79 = arith.constant 1 : index
    %c0_80 = arith.constant 0 : index
    %c0_81 = arith.constant 0 : index
    %317 = vector.load %arg8[%c1_79, %c0_80, %c0_81] : memref<2x1x64xf32, #tpu.memory_space<vmem>>, vector<1x1x64xf32>
    %318 = vector.shape_cast %317 : vector<1x1x64xf32> to vector<1x64xf32>
    %319 = vector.broadcast %318 : vector<1x64xf32> to vector<10x64xf32>
    %320 = arith.addf %316, %319 : vector<10x64xf32>
    %321 = arith.addf %190, %320 : vector<10x64xf32>
    %322 = vector.extract_strided_slice %192 {offsets = [2, 0], sizes = [1, 64], strides = [1, 1]} : vector<4x64xf32> to vector<1x64xf32>
    %323 = vector.extract_strided_slice %192 {offsets = [3, 0], sizes = [1, 64], strides = [1, 1]} : vector<4x64xf32> to vector<1x64xf32>
    %cst_82 = arith.constant dense<0.000000e+00> : vector<10xf32>
    %324 = vector.multi_reduction <add>, %321, %cst_82 [1] : vector<10x64xf32> to vector<10xf32>
    %325 = vector.shape_cast %324 : vector<10xf32> to vector<10x1xf32>
    %cst_83 = arith.constant 6.400000e+01 : f32
    %326 = vector.broadcast %cst_83 : f32 to vector<10x1xf32>
    %327 = arith.divf %325, %326 : vector<10x1xf32>
    %328 = arith.mulf %321, %321 : vector<10x64xf32>
    %cst_84 = arith.constant dense<0.000000e+00> : vector<10xf32>
    %329 = vector.multi_reduction <add>, %328, %cst_84 [1] : vector<10x64xf32> to vector<10xf32>
    %330 = vector.shape_cast %329 : vector<10xf32> to vector<10x1xf32>
    %cst_85 = arith.constant 6.400000e+01 : f32
    %331 = vector.broadcast %cst_85 : f32 to vector<10x1xf32>
    %332 = arith.divf %330, %331 : vector<10x1xf32>
    %333 = arith.mulf %327, %327 : vector<10x1xf32>
    %334 = arith.subf %332, %333 : vector<10x1xf32>
    %335 = vector.broadcast %327 : vector<10x1xf32> to vector<10x64xf32>
    %336 = arith.subf %321, %335 : vector<10x64xf32>
    %cst_86 = arith.constant 9.99999997E-7 : f32
    %337 = vector.broadcast %cst_86 : f32 to vector<10x1xf32>
    %338 = arith.addf %334, %337 : vector<10x1xf32>
    %339 = math.rsqrt %338 : vector<10x1xf32>
    %340 = vector.broadcast %339 : vector<10x1xf32> to vector<10x64xf32>
    %341 = arith.mulf %336, %340 : vector<10x64xf32>
    %342 = vector.broadcast %322 : vector<1x64xf32> to vector<10x64xf32>
    %343 = arith.mulf %341, %342 : vector<10x64xf32>
    %344 = vector.broadcast %323 : vector<1x64xf32> to vector<10x64xf32>
    %345 = arith.addf %343, %344 : vector<10x64xf32>
    %346 = arith.truncf %345 : vector<10x64xf32> to vector<10x64xbf16>
    %c1_87 = arith.constant 1 : index
    %c0_88 = arith.constant 0 : index
    %c0_89 = arith.constant 0 : index
    %347 = vector.load %arg9[%c1_87, %c0_88, %c0_89] : memref<2x64x256xbf16, #tpu.memory_space<vmem>>, vector<1x64x256xbf16>
    %348 = vector.shape_cast %347 : vector<1x64x256xbf16> to vector<64x256xbf16>
    %cst_90 = arith.constant dense<0.000000e+00> : vector<10x256xf32>
    %349 = tpu.matmul %346, %348, %cst_90 {dimension_numbers = #tpu.dot_dimension_numbers<[1], [0], [0], [1], [0, 0, 1, 1], [], []>} : vector<10x64xbf16>, vector<64x256xbf16>, vector<10x256xf32> -> vector<10x256xf32>
    %c1_91 = arith.constant 1 : index
    %c0_92 = arith.constant 0 : index
    %c0_93 = arith.constant 0 : index
    %350 = vector.load %arg10[%c1_91, %c0_92, %c0_93] : memref<2x1x256xf32, #tpu.memory_space<vmem>>, vector<1x1x256xf32>
    %351 = vector.shape_cast %350 : vector<1x1x256xf32> to vector<1x256xf32>
    %352 = vector.broadcast %351 : vector<1x256xf32> to vector<10x256xf32>
    %353 = arith.addf %349, %352 : vector<10x256xf32>
    %354 = arith.mulf %353, %353 : vector<10x256xf32>
    %355 = arith.mulf %353, %354 : vector<10x256xf32>
    %cst_94 = arith.constant 4.471500e-02 : f32
    %356 = vector.broadcast %cst_94 : f32 to vector<10x256xf32>
    %357 = arith.mulf %356, %355 : vector<10x256xf32>
    %358 = arith.addf %353, %357 : vector<10x256xf32>
    %cst_95 = arith.constant 0.797884583 : f32
    %359 = vector.broadcast %cst_95 : f32 to vector<10x256xf32>
    %360 = arith.mulf %359, %358 : vector<10x256xf32>
    %361 = math.tanh %360 : vector<10x256xf32>
    %cst_96 = arith.constant 1.000000e+00 : f32
    %362 = vector.broadcast %cst_96 : f32 to vector<10x256xf32>
    %363 = arith.addf %362, %361 : vector<10x256xf32>
    %cst_97 = arith.constant 5.000000e-01 : f32
    %364 = vector.broadcast %cst_97 : f32 to vector<10x256xf32>
    %365 = arith.mulf %364, %363 : vector<10x256xf32>
    %366 = arith.mulf %353, %365 : vector<10x256xf32>
    %367 = arith.truncf %366 : vector<10x256xf32> to vector<10x256xbf16>
    %c1_98 = arith.constant 1 : index
    %c0_99 = arith.constant 0 : index
    %c0_100 = arith.constant 0 : index
    %368 = vector.load %arg11[%c1_98, %c0_99, %c0_100] : memref<2x256x64xbf16, #tpu.memory_space<vmem>>, vector<1x256x64xbf16>
    %369 = vector.shape_cast %368 : vector<1x256x64xbf16> to vector<256x64xbf16>
    %cst_101 = arith.constant dense<0.000000e+00> : vector<10x64xf32>
    %370 = tpu.matmul %367, %369, %cst_101 {dimension_numbers = #tpu.dot_dimension_numbers<[1], [0], [0], [1], [0, 0, 1, 1], [], []>} : vector<10x256xbf16>, vector<256x64xbf16>, vector<10x64xf32> -> vector<10x64xf32>
    %c1_102 = arith.constant 1 : index
    %c0_103 = arith.constant 0 : index
    %c0_104 = arith.constant 0 : index
    %371 = vector.load %arg12[%c1_102, %c0_103, %c0_104] : memref<2x1x64xf32, #tpu.memory_space<vmem>>, vector<1x1x64xf32>
    %372 = vector.shape_cast %371 : vector<1x1x64xf32> to vector<1x64xf32>
    %373 = vector.broadcast %372 : vector<1x64xf32> to vector<10x64xf32>
    %374 = arith.addf %370, %373 : vector<10x64xf32>
    %375 = arith.addf %321, %374 : vector<10x64xf32>
    %376 = vector.extract_strided_slice %375 {offsets = [0, 0], sizes = [1, 64], strides = [1, 1]} : vector<10x64xf32> to vector<1x64xf32>
    %377 = vector.extract_strided_slice %375 {offsets = [5, 0], sizes = [1, 64], strides = [1, 1]} : vector<10x64xf32> to vector<1x64xf32>
    %378 = tpu.concatenate %376, %377 in 0 : vector<1x64xf32>, vector<1x64xf32> -> vector<2x64xf32>
    %c0_105 = arith.constant 0 : index
    %c0_106 = arith.constant 0 : index
    %379 = vector.load %arg13[%c0_105, %c0_106] : memref<2x64xf32, #tpu.memory_space<vmem>>, vector<1x64xf32>
    %c1_107 = arith.constant 1 : index
    %c0_108 = arith.constant 0 : index
    %380 = vector.load %arg13[%c1_107, %c0_108] : memref<2x64xf32, #tpu.memory_space<vmem>>, vector<1x64xf32>
    %cst_109 = arith.constant dense<0.000000e+00> : vector<2xf32>
    %381 = vector.multi_reduction <add>, %378, %cst_109 [1] : vector<2x64xf32> to vector<2xf32>
    %382 = vector.shape_cast %381 : vector<2xf32> to vector<2x1xf32>
    %cst_110 = arith.constant 6.400000e+01 : f32
    %383 = vector.broadcast %cst_110 : f32 to vector<2x1xf32>
    %384 = arith.divf %382, %383 : vector<2x1xf32>
    %385 = arith.mulf %378, %378 : vector<2x64xf32>
    %cst_111 = arith.constant dense<0.000000e+00> : vector<2xf32>
    %386 = vector.multi_reduction <add>, %385, %cst_111 [1] : vector<2x64xf32> to vector<2xf32>
    %387 = vector.shape_cast %386 : vector<2xf32> to vector<2x1xf32>
    %cst_112 = arith.constant 6.400000e+01 : f32
    %388 = vector.broadcast %cst_112 : f32 to vector<2x1xf32>
    %389 = arith.divf %387, %388 : vector<2x1xf32>
    %390 = arith.mulf %384, %384 : vector<2x1xf32>
    %391 = arith.subf %389, %390 : vector<2x1xf32>
    %392 = vector.broadcast %384 : vector<2x1xf32> to vector<2x64xf32>
    %393 = arith.subf %378, %392 : vector<2x64xf32>
    %cst_113 = arith.constant 9.99999997E-7 : f32
    %394 = vector.broadcast %cst_113 : f32 to vector<2x1xf32>
    %395 = arith.addf %391, %394 : vector<2x1xf32>
    %396 = math.rsqrt %395 : vector<2x1xf32>
    %397 = vector.broadcast %396 : vector<2x1xf32> to vector<2x64xf32>
    %398 = arith.mulf %393, %397 : vector<2x64xf32>
    %399 = vector.broadcast %379 : vector<1x64xf32> to vector<2x64xf32>
    %400 = arith.mulf %398, %399 : vector<2x64xf32>
    %401 = vector.broadcast %380 : vector<1x64xf32> to vector<2x64xf32>
    %402 = arith.addf %400, %401 : vector<2x64xf32>
    %403 = arith.truncf %402 : vector<2x64xf32> to vector<2x64xbf16>
    %c0_114 = arith.constant 0 : index
    %c0_115 = arith.constant 0 : index
    %404 = vector.load %arg14[%c0_114, %c0_115] : memref<64x128xbf16, #tpu.memory_space<vmem>>, vector<64x128xbf16>
    %cst_116 = arith.constant dense<0.000000e+00> : vector<2x128xf32>
    %405 = tpu.matmul %403, %404, %cst_116 {dimension_numbers = #tpu.dot_dimension_numbers<[1], [0], [0], [1], [0, 0, 1, 1], [], []>} : vector<2x64xbf16>, vector<64x128xbf16>, vector<2x128xf32> -> vector<2x128xf32>
    %c0_117 = arith.constant 0 : index
    %c0_118 = arith.constant 0 : index
    %406 = vector.load %arg15[%c0_117, %c0_118] : memref<1x128xf32, #tpu.memory_space<vmem>>, vector<1x128xf32>
    %407 = vector.broadcast %406 : vector<1x128xf32> to vector<2x128xf32>
    %408 = arith.addf %405, %407 : vector<2x128xf32>
    %c0_119 = arith.constant 0 : index
    %c0_120 = arith.constant 0 : index
    %c0_121 = arith.constant 0 : index
    %409 = vector.load %arg16[%c0_119, %c0_120, %c0_121] : memref<1x2x128xf32, #tpu.memory_space<vmem>>, vector<1x2x128xf32>
    %410 = vector.shape_cast %409 : vector<1x2x128xf32> to vector<2x128xf32>
    %411 = vector.shape_cast %408 : vector<2x128xf32> to vector<1x2x128xf32>
    tpu.vector_store %arg16[%c0_119, %c0_120, %c0_121], %411 {strides = array<i32>} : memref<1x2x128xf32, #tpu.memory_space<vmem>>, vector<1x2x128xf32>,
    return
  }
  func.func @transform_0(%arg0: i32) -> (i32, i32, i32) {
    %c0_i32 = arith.constant 0 : i32
    %c0_i32_0 = arith.constant 0 : i32
    %c0_i32_1 = arith.constant 0 : i32
    return %arg0, %c0_i32, %c0_i32_0 : i32, i32, i32
  }
  func.func @transform_1(%arg0: i32) -> (i32, i32) {
    %c0_i32 = arith.constant 0 : i32
    %c0_i32_0 = arith.constant 0 : i32
    %c0_i32_1 = arith.constant 0 : i32
    return %c0_i32, %c0_i32_0 : i32, i32
  }
  func.func @transform_2(%arg0: i32) -> (i32, i32) {
    %c0_i32 = arith.constant 0 : i32
    %c0_i32_0 = arith.constant 0 : i32
    %c0_i32_1 = arith.constant 0 : i32
    return %c0_i32, %c0_i32_0 : i32, i32
  }
  func.func @transform_3(%arg0: i32) -> (i32, i32, i32) {
    %c0_i32 = arith.constant 0 : i32
    %c0_i32_0 = arith.constant 0 : i32
    %c0_i32_1 = arith.constant 0 : i32
    %c0_i32_2 = arith.constant 0 : i32
    return %c0_i32, %c0_i32_0, %c0_i32_1 : i32, i32, i32
  }
  func.func @transform_4(%arg0: i32) -> (i32, i32, i32) {
    %c0_i32 = arith.constant 0 : i32
    %c0_i32_0 = arith.constant 0 : i32
    %c0_i32_1 = arith.constant 0 : i32
    %c0_i32_2 = arith.constant 0 : i32
    return %c0_i32, %c0_i32_0, %c0_i32_1 : i32, i32, i32
  }
  func.func @transform_5(%arg0: i32) -> (i32, i32, i32) {
    %c0_i32 = arith.constant 0 : i32
    %c0_i32_0 = arith.constant 0 : i32
    %c0_i32_1 = arith.constant 0 : i32
    %c0_i32_2 = arith.constant 0 : i32
    return %c0_i32, %c0_i32_0, %c0_i32_1 : i32, i32, i32
  }
  func.func @transform_6(%arg0: i32) -> (i32, i32, i32) {
    %c0_i32 = arith.constant 0 : i32
    %c0_i32_0 = arith.constant 0 : i32
    %c0_i32_1 = arith.constant 0 : i32
    %c0_i32_2 = arith.constant 0 : i32
    return %c0_i32, %c0_i32_0, %c0_i32_1 : i32, i32, i32
  }
  func.func @transform_7(%arg0: i32) -> (i32, i32, i32) {
    %c0_i32 = arith.constant 0 : i32
    %c0_i32_0 = arith.constant 0 : i32
    %c0_i32_1 = arith.constant 0 : i32
    %c0_i32_2 = arith.constant 0 : i32
    return %c0_i32, %c0_i32_0, %c0_i32_1 : i32, i32, i32
  }
  func.func @transform_8(%arg0: i32) -> (i32, i32, i32) {
    %c0_i32 = arith.constant 0 : i32
    %c0_i32_0 = arith.constant 0 : i32
    %c0_i32_1 = arith.constant 0 : i32
    %c0_i32_2 = arith.constant 0 : i32
    return %c0_i32, %c0_i32_0, %c0_i32_1 : i32, i32, i32
  }
  func.func @transform_9(%arg0: i32) -> (i32, i32, i32) {
    %c0_i32 = arith.constant 0 : i32
    %c0_i32_0 = arith.constant 0 : i32
    %c0_i32_1 = arith.constant 0 : i32
    %c0_i32_2 = arith.constant 0 : i32
    return %c0_i32, %c0_i32_0, %c0_i32_1 : i32, i32, i32
  }
  func.func @transform_10(%arg0: i32) -> (i32, i32, i32) {
    %c0_i32 = arith.constant 0 : i32
    %c0_i32_0 = arith.constant 0 : i32
    %c0_i32_1 = arith.constant 0 : i32
    %c0_i32_2 = arith.constant 0 : i32
    return %c0_i32, %c0_i32_0, %c0_i32_1 : i32, i32, i32
  }
  func.func @transform_11(%arg0: i32) -> (i32, i32, i32) {
    %c0_i32 = arith.constant 0 : i32
    %c0_i32_0 = arith.constant 0 : i32
    %c0_i32_1 = arith.constant 0 : i32
    %c0_i32_2 = arith.constant 0 : i32
    return %c0_i32, %c0_i32_0, %c0_i32_1 : i32, i32, i32
  }
  func.func @transform_12(%arg0: i32) -> (i32, i32) {
    %c0_i32 = arith.constant 0 : i32
    %c0_i32_0 = arith.constant 0 : i32
    %c0_i32_1 = arith.constant 0 : i32
    return %c0_i32, %c0_i32_0 : i32, i32
  }
  func.func @transform_13(%arg0: i32) -> (i32, i32) {
    %c0_i32 = arith.constant 0 : i32
    %c0_i32_0 = arith.constant 0 : i32
    %c0_i32_1 = arith.constant 0 : i32
    return %c0_i32, %c0_i32_0 : i32, i32
  }
  func.func @transform_14(%arg0: i32) -> (i32, i32) {
    %c0_i32 = arith.constant 0 : i32
    %c0_i32_0 = arith.constant 0 : i32
    %c0_i32_1 = arith.constant 0 : i32
    return %c0_i32, %c0_i32_0 : i32, i32
  }
  func.func @transform_15(%arg0: i32) -> (i32, i32, i32) {
    %c0_i32 = arith.constant 0 : i32
    %c0_i32_0 = arith.constant 0 : i32
    %c0_i32_1 = arith.constant 0 : i32
    return %arg0, %c0_i32, %c0_i32_0 : i32, i32, i32
  }
}

</mosaic_0001>

<llo_original>
// kernel: tile.9
$region0: #{tile.9}
  %s0 = inlined_call_operand.vmem [shape: f32[2,5,64], index: 0, kind: input, shape index: {}]
  %s1 = inlined_call_operand.vmem [shape: f32[10,64], index: 1, kind: output, shape index: {}]
  %v2 = vld [vmem:[%s0] sm:$0x1f]
  %vm3 = vcmask 523264
  %4 = vst.msk [vmem:[%s1] sm:$0x1f] %vm3, %v2
  %s5 = scalar_lea.vmem %s0, 8
  %v6 = vld [vmem:[%s5] sm:$0x1f]
  %vm7 = vcmask 523264
  %s8 = scalar_lea.vmem %s1, 5
  %9 = vst.msk [vmem:[%s8] sm:$0x1f] %vm7, %v6

// kernel: vit_forward.1
$region0: #{vit_forward.1}
  #allocation0 [shape = 'u32[]', space=smem, size = 0x4, offset = 0x4, fixed_abs, tag = 'smem constant byte address 0x4 - core index']
  #allocation1 [shape = 'u32[144,128]{1,0:T(1,128)}', space=vmem, size = 0x12000, scoped, tag = 'internal scratch']
  %s0 = inlined_call_operand.vmem [shape: bf16[1,10,768], index: 0, kind: input, shape index: {}]
  %s1 = inlined_call_operand.vmem [shape: bf16[768,64], index: 1, kind: input, shape index: {}]
  %s2 = inlined_call_operand.vmem [shape: f32[10,64], index: 2, kind: input, shape index: {}]
  %s3 = inlined_call_operand.vmem [shape: f32[2,4,64], index: 3, kind: input, shape index: {}]
  %s4 = inlined_call_operand.vmem [shape: bf16[2,64,192], index: 4, kind: input, shape index: {}]
  %s5 = inlined_call_operand.vmem [shape: f32[2,1,192], index: 5, kind: input, shape index: {}]
  %s6 = inlined_call_operand.vmem [shape: bf16[2,64,64], index: 6, kind: input, shape index: {}]
  %s7 = inlined_call_operand.vmem [shape: f32[2,1,64], index: 7, kind: input, shape index: {}]
  %s8 = inlined_call_operand.vmem [shape: bf16[2,64,256], index: 8, kind: input, shape index: {}]
  %s9 = inlined_call_operand.vmem [shape: f32[2,1,256], index: 9, kind: input, shape index: {}]
  %s10 = inlined_call_operand.vmem [shape: bf16[2,256,64], index: 10, kind: input, shape index: {}]
  %s11 = inlined_call_operand.vmem [shape: f32[2,1,64], index: 11, kind: input, shape index: {}]
  %s12 = inlined_call_operand.vmem [shape: f32[2,64], index: 12, kind: input, shape index: {}]
  %s13 = inlined_call_operand.vmem [shape: bf16[64,128], index: 13, kind: input, shape index: {}]
  %s14 = inlined_call_operand.vmem [shape: f32[1,128], index: 14, kind: input, shape index: {}]
  %s15 = inlined_call_operand.vmem [shape: f32[1,2,128], index: 15, kind: output, shape index: {}]
  %s16 = sld [smem:[#allocation0]]
  $region70: #{vit_forward.1} parent=0
    _
  %s18 = ssub.s32 1, %s16
  %s19 = scalar_select 0, %s18, %s16
  // Predicated region
  $region2: #{vit_forward.1} parent=0 // pred_check
    _
  $region3: #{vit_forward.1} parent=0 // pred_check_branch
    %21 = sbr.rel (0) target = $region5
  $region4: #{vit_forward.1} parent=0 // pred_region
    _
  $region5: #{vit_forward.1} parent=0 // pred_fallthru
    _
  // Predicated region
  $region6: #{vit_forward.1} parent=0 // pred_check
    _
  $region7: #{vit_forward.1} parent=0 // pred_check_branch
    %23 = sbr.rel (0) target = $region9
  $region8: #{vit_forward.1} parent=0 // pred_region
    _
  $region9: #{vit_forward.1} parent=0 // pred_fallthru
    _
  // Predicated region
  $region10: #{vit_forward.1} parent=0 // pred_check
    _
  $region11: #{vit_forward.1} parent=0 // pred_check_branch
    %25 = sbr.rel (0) target = $region13
  $region12: #{vit_forward.1} parent=0 // pred_region
    _
  $region13: #{vit_forward.1} parent=0 // pred_fallthru
    _
  // Predicated region
  $region14: #{vit_forward.1} parent=0 // pred_check
    _
  $region15: #{vit_forward.1} parent=0 // pred_check_branch
    %27 = sbr.rel (0) target = $region17
  $region16: #{vit_forward.1} parent=0 // pred_region
    _
  $region17: #{vit_forward.1} parent=0 // pred_fallthru
    _
  // Predicated region
  $region18: #{vit_forward.1} parent=0 // pred_check
    _
  $region19: #{vit_forward.1} parent=0 // pred_check_branch
    %29 = sbr.rel (0) target = $region21
  $region20: #{vit_forward.1} parent=0 // pred_region
    _
  $region21: #{vit_forward.1} parent=0 // pred_fallthru
    _
  // Predicated region
  $region22: #{vit_forward.1} parent=0 // pred_check
    _
  $region23: #{vit_forward.1} parent=0 // pred_check_branch
    %31 = sbr.rel (0) target = $region25
  $region24: #{vit_forward.1} parent=0 // pred_region
    _
  $region25: #{vit_forward.1} parent=0 // pred_fallthru
    _
  // Predicated region
  $region26: #{vit_forward.1} parent=0 // pred_check
    _
  $region27: #{vit_forward.1} parent=0 // pred_check_branch
    %33 = sbr.rel (0) target = $region29
  $region28: #{vit_forward.1} parent=0 // pred_region
    _
  $region29: #{vit_forward.1} parent=0 // pred_fallthru
    _
  // Predicated region
  $region30: #{vit_forward.1} parent=0 // pred_check
    _
  $region31: #{vit_forward.1} parent=0 // pred_check_branch
    %35 = sbr.rel (0) target = $region33
  $region32: #{vit_forward.1} parent=0 // pred_region
    _
  $region33: #{vit_forward.1} parent=0 // pred_fallthru
    _
  // Predicated region
  $region34: #{vit_forward.1} parent=0 // pred_check
    _
  $region35: #{vit_forward.1} parent=0 // pred_check_branch
    %37 = sbr.rel (0) target = $region37
  $region36: #{vit_forward.1} parent=0 // pred_region
    _
  $region37: #{vit_forward.1} parent=0 // pred_fallthru
    _
  // Predicated region
  $region38: #{vit_forward.1} parent=0 // pred_check
    _
  $region39: #{vit_forward.1} parent=0 // pred_check_branch
    %39 = sbr.rel (0) target = $region41
  $region40: #{vit_forward.1} parent=0 // pred_region
    _
  $region41: #{vit_forward.1} parent=0 // pred_fallthru
    _
  // Predicated region
  $region42: #{vit_forward.1} parent=0 // pred_check
    _
  $region43: #{vit_forward.1} parent=0 // pred_check_branch
    %41 = sbr.rel (0) target = $region45
  $region44: #{vit_forward.1} parent=0 // pred_region
    _
  $region45: #{vit_forward.1} parent=0 // pred_fallthru
    _
  // Predicated region
  $region46: #{vit_forward.1} parent=0 // pred_check
    _
  $region47: #{vit_forward.1} parent=0 // pred_check_branch
    %43 = sbr.rel (0) target = $region49
  $region48: #{vit_forward.1} parent=0 // pred_region
    _
  $region49: #{vit_forward.1} parent=0 // pred_fallthru
    _
  // Predicated region
  $region50: #{vit_forward.1} parent=0 // pred_check
    _
  $region51: #{vit_forward.1} parent=0 // pred_check_branch
    %45 = sbr.rel (0) target = $region53
  $region52: #{vit_forward.1} parent=0 // pred_region
    _
  $region53: #{vit_forward.1} parent=0 // pred_fallthru
    _
  // Predicated region
  $region54: #{vit_forward.1} parent=0 // pred_check
    _
  $region55: #{vit_forward.1} parent=0 // pred_check_branch
    %47 = sbr.rel (0) target = $region57
  $region56: #{vit_forward.1} parent=0 // pred_region
    _
  $region57: #{vit_forward.1} parent=0 // pred_fallthru
    _
  // Predicated region
  $region58: #{vit_forward.1} parent=0 // pred_check
    _
  $region59: #{vit_forward.1} parent=0 // pred_check_branch
    %49 = sbr.rel (0) target = $region61
  $region60: #{vit_forward.1} parent=0 // pred_region
    _
  $region61: #{vit_forward.1} parent=0 // pred_fallthru
    _
  %v51 = vld [vmem:[%s0] sm:$0xff]
  %v52 = vld [vmem:[%s0 + $0x8] sm:$0xff]
  %v53 = vld [vmem:[%s0 + $0x10] sm:$0xff]
  %v54 = vld [vmem:[%s0 + $0x18] sm:$0x11]
  %v55 = vld [vmem:[%s0 + $0x20] sm:$0x11]
  %v56 = vld [vmem:[%s0 + $0x28] sm:$0x11]
  %v57 = vld [vmem:[%s1] sm:$0xf]
  %v58 = vld [vmem:[%s1 + $0x4] sm:$0xf]
  %v59 = vld [vmem:[%s1 + $0x8] sm:$0xf]
  %v60 = vld [vmem:[%s1 + $0xc] sm:$0xf]
  %v61 = vld [vmem:[%s1 + $0x10] sm:$0xf]
  %v62 = vld [vmem:[%s1 + $0x14] sm:$0xf]
  %v63 = vld [vmem:[%s1 + $0x18] sm:$0xf]
  %v64 = vld [vmem:[%s1 + $0x1c] sm:$0xf]
  %v65 = vld [vmem:[%s1 + $0x20] sm:$0xf]
  %v66 = vld [vmem:[%s1 + $0x24] sm:$0xf]
  %v67 = vld [vmem:[%s1 + $0x28] sm:$0xf]
  %v68 = vld [vmem:[%s1 + $0x2c] sm:$0xf]
  %v69 = vld [vmem:[%s1 + $0x30] sm:$0xf]
  %v70 = vld [vmem:[%s1 + $0x34] sm:$0xf]
  %v71 = vld [vmem:[%s1 + $0x38] sm:$0xf]
  %v72 = vld [vmem:[%s1 + $0x3c] sm:$0xf]
  %v73 = vld [vmem:[%s1 + $0x40] sm:$0xf]
  %v74 = vld [vmem:[%s1 + $0x44] sm:$0xf]
  %v75 = vld [vmem:[%s1 + $0x48] sm:$0xf]
  %v76 = vld [vmem:[%s1 + $0x4c] sm:$0xf]
  %v77 = vld [vmem:[%s1 + $0x50] sm:$0xf]
  %v78 = vld [vmem:[%s1 + $0x54] sm:$0xf]
  %v79 = vld [vmem:[%s1 + $0x58] sm:$0xf]
  %v80 = vld [vmem:[%s1 + $0x5c] sm:$0xf]
  %v81 = vld [vmem:[%s1 + $0x60] sm:$0xf]
  %v82 = vld [vmem:[%s1 + $0x64] sm:$0xf]
  %v83 = vld [vmem:[%s1 + $0x68] sm:$0xf]
  %v84 = vld [vmem:[%s1 + $0x6c] sm:$0xf]
  %v85 = vld [vmem:[%s1 + $0x70] sm:$0xf]
  %v86 = vld [vmem:[%s1 + $0x74] sm:$0xf]
  %v87 = vld [vmem:[%s1 + $0x78] sm:$0xf]
  %v88 = vld [vmem:[%s1 + $0x7c] sm:$0xf]
  %v89 = vld [vmem:[%s1 + $0x80] sm:$0xf]
  %v90 = vld [vmem:[%s1 + $0x84] sm:$0xf]
  %v91 = vld [vmem:[%s1 + $0x88] sm:$0xf]
  %v92 = vld [vmem:[%s1 + $0x8c] sm:$0xf]
  %v93 = vld [vmem:[%s1 + $0x90] sm:$0xf]
  %v94 = vld [vmem:[%s1 + $0x94] sm:$0xf]
  %v95 = vld [vmem:[%s1 + $0x98] sm:$0xf]
  %v96 = vld [vmem:[%s1 + $0x9c] sm:$0xf]
  %v97 = vld [vmem:[%s1 + $0xa0] sm:$0xf]
  %v98 = vld [vmem:[%s1 + $0xa4] sm:$0xf]
  %v99 = vld [vmem:[%s1 + $0xa8] sm:$0xf]
  %v100 = vld [vmem:[%s1 + $0xac] sm:$0xf]
  %v101 = vld [vmem:[%s1 + $0xb0] sm:$0xf]
  %v102 = vld [vmem:[%s1 + $0xb4] sm:$0xf]
  %v103 = vld [vmem:[%s1 + $0xb8] sm:$0xf]
  %v104 = vld [vmem:[%s1 + $0xbc] sm:$0xf]
  %v105 = vld [vmem:[%s1 + $0xc0] sm:$0xf]
  %v106 = vld [vmem:[%s1 + $0xc4] sm:$0xf]
  %v107 = vld [vmem:[%s1 + $0xc8] sm:$0xf]
  %v108 = vld [vmem:[%s1 + $0xcc] sm:$0xf]
  %v109 = vld [vmem:[%s1 + $0xd0] sm:$0xf]
  %v110 = vld [vmem:[%s1 + $0xd4] sm:$0xf]
  %v111 = vld [vmem:[%s1 + $0xd8] sm:$0xf]
  %v112 = vld [vmem:[%s1 + $0xdc] sm:$0xf]
  %v113 = vld [vmem:[%s1 + $0xe0] sm:$0xf]
  %v114 = vld [vmem:[%s1 + $0xe4] sm:$0xf]
  %v115 = vld [vmem:[%s1 + $0xe8] sm:$0xf]
  %v116 = vld [vmem:[%s1 + $0xec] sm:$0xf]
  %v117 = vld [vmem:[%s1 + $0xf0] sm:$0xf]
  %v118 = vld [vmem:[%s1 + $0xf4] sm:$0xf]
  %v119 = vld [vmem:[%s1 + $0xf8] sm:$0xf]
  %v120 = vld [vmem:[%s1 + $0xfc] sm:$0xf]
  %v121 = vld [vmem:[%s1 + $0x100] sm:$0xf]
  %v122 = vld [vmem:[%s1 + $0x104] sm:$0xf]
  %v123 = vld [vmem:[%s1 + $0x108] sm:$0xf]
  %v124 = vld [vmem:[%s1 + $0x10c] sm:$0xf]
  %v125 = vld [vmem:[%s1 + $0x110] sm:$0xf]
  %v126 = vld [vmem:[%s1 + $0x114] sm:$0xf]
  %v127 = vld [vmem:[%s1 + $0x118] sm:$0xf]
  %v128 = vld [vmem:[%s1 + $0x11c] sm:$0xf]
  %v129 = vld [vmem:[%s1 + $0x120] sm:$0xf]
  %v130 = vld [vmem:[%s1 + $0x124] sm:$0xf]
  %v131 = vld [vmem:[%s1 + $0x128] sm:$0xf]
  %v132 = vld [vmem:[%s1 + $0x12c] sm:$0xf]
  %v133 = vld [vmem:[%s1 + $0x130] sm:$0xf]
  %v134 = vld [vmem:[%s1 + $0x134] sm:$0xf]
  %v135 = vld [vmem:[%s1 + $0x138] sm:$0xf]
  %v136 = vld [vmem:[%s1 + $0x13c] sm:$0xf]
  %v137 = vld [vmem:[%s1 + $0x140] sm:$0xf]
  %v138 = vld [vmem:[%s1 + $0x144] sm:$0xf]
  %v139 = vld [vmem:[%s1 + $0x148] sm:$0xf]
  %v140 = vld [vmem:[%s1 + $0x14c] sm:$0xf]
  %v141 = vld [vmem:[%s1 + $0x150] sm:$0xf]
  %v142 = vld [vmem:[%s1 + $0x154] sm:$0xf]
  %v143 = vld [vmem:[%s1 + $0x158] sm:$0xf]
  %v144 = vld [vmem:[%s1 + $0x15c] sm:$0xf]
  %v145 = vld [vmem:[%s1 + $0x160] sm:$0xf]
  %v146 = vld [vmem:[%s1 + $0x164] sm:$0xf]
  %v147 = vld [vmem:[%s1 + $0x168] sm:$0xf]
  %v148 = vld [vmem:[%s1 + $0x16c] sm:$0xf]
  %v149 = vld [vmem:[%s1 + $0x170] sm:$0xf]
  %v150 = vld [vmem:[%s1 + $0x174] sm:$0xf]
  %v151 = vld [vmem:[%s1 + $0x178] sm:$0xf]
  %v152 = vld [vmem:[%s1 + $0x17c] sm:$0xf]
  %v153 = vld [vmem:[%s2] sm:$0xff]
  %v154 = vld [vmem:[%s2 + $0x8] sm:$0x3]
  %v161 = vunpack.c.l.b16 %v51
  %v162 = vunpack.c.h.b16 %v51
  %v163 = vunpack.c.l.b16 %v52
  %v164 = vunpack.c.h.b16 %v52
  %v165 = vunpack.c.l.b16 %v53
  %v166 = vunpack.c.h.b16 %v53
  %v167 = vunpack.c.l.b16 %v54
  %v168 = vunpack.c.h.b16 %v54
  %v169 = vunpack.c.l.b16 %v55
  %v170 = vunpack.c.h.b16 %v55
  %v171 = vunpack.c.l.b16 %v56
  %v172 = vunpack.c.h.b16 %v56
  %v173 = vpack.c.b16 %v167, %v161
  %v174 = vpack.c.b16 %v168, %v162
  %v175 = vpack.c.b16 %v169, %v163
  %v176 = vpack.c.b16 %v170, %v164
  %v177 = vpack.c.b16 %v171, %v165
  %v178 = vpack.c.b16 %v172, %v166
  %v281 = vunpack.c.l.b16 %v57
  %v282 = vunpack.c.l.b16 %v58
  %v283 = vunpack.c.l.b16 %v59
  %v284 = vunpack.c.l.b16 %v60
  %v285 = vunpack.c.l.b16 %v61
  %v286 = vunpack.c.l.b16 %v62
  %v287 = vunpack.c.l.b16 %v63
  %v288 = vunpack.c.l.b16 %v64
  %v289 = vunpack.c.l.b16 %v65
  %v290 = vunpack.c.l.b16 %v66
  %v291 = vunpack.c.l.b16 %v67
  %v292 = vunpack.c.l.b16 %v68
  %v293 = vunpack.c.l.b16 %v69
  %v294 = vunpack.c.l.b16 %v70
  %v295 = vunpack.c.l.b16 %v71
  %v296 = vunpack.c.l.b16 %v72
  %v297 = vunpack.c.l.b16 %v73
  %v298 = vunpack.c.l.b16 %v74
  %v299 = vunpack.c.l.b16 %v75
  %v300 = vunpack.c.l.b16 %v76
  %v301 = vunpack.c.l.b16 %v77
  %v302 = vunpack.c.l.b16 %v78
  %v303 = vunpack.c.l.b16 %v79
  %v304 = vunpack.c.l.b16 %v80
  %v305 = vunpack.c.l.b16 %v81
  %v306 = vunpack.c.l.b16 %v82
  %v307 = vunpack.c.l.b16 %v83
  %v308 = vunpack.c.l.b16 %v84
  %v309 = vunpack.c.l.b16 %v85
  %v310 = vunpack.c.l.b16 %v86
  %v311 = vunpack.c.l.b16 %v87
  %v312 = vunpack.c.l.b16 %v88
  %v313 = vunpack.c.l.b16 %v89
  %v314 = vunpack.c.l.b16 %v90
  %v315 = vunpack.c.l.b16 %v91
  %v316 = vunpack.c.l.b16 %v92
  %v317 = vunpack.c.l.b16 %v93
  %v318 = vunpack.c.l.b16 %v94
  %v319 = vunpack.c.l.b16 %v95
  %v320 = vunpack.c.l.b16 %v96
  %v321 = vunpack.c.l.b16 %v97
  %v322 = vunpack.c.l.b16 %v98
  %v323 = vunpack.c.l.b16 %v99
  %v324 = vunpack.c.l.b16 %v100
  %v325 = vunpack.c.l.b16 %v101
  %v326 = vunpack.c.l.b16 %v102
  %v327 = vunpack.c.l.b16 %v103
  %v328 = vunpack.c.l.b16 %v104
  %v329 = vunpack.c.l.b16 %v105
  %v330 = vunpack.c.l.b16 %v106
  %v331 = vunpack.c.l.b16 %v107
  %v332 = vunpack.c.l.b16 %v108
  %v333 = vunpack.c.l.b16 %v109
  %v334 = vunpack.c.l.b16 %v110
  %v335 = vunpack.c.l.b16 %v111
  %v336 = vunpack.c.l.b16 %v112
  %v337 = vunpack.c.l.b16 %v113
  %v338 = vunpack.c.l.b16 %v114
  %v339 = vunpack.c.l.b16 %v115
  %v340 = vunpack.c.l.b16 %v116
  %v341 = vunpack.c.l.b16 %v117
  %v342 = vunpack.c.l.b16 %v118
  %v343 = vunpack.c.l.b16 %v119
  %v344 = vunpack.c.l.b16 %v120
  %v345 = vunpack.c.l.b16 %v121
  %v346 = vunpack.c.l.b16 %v122
  %v347 = vunpack.c.l.b16 %v123
  %v348 = vunpack.c.l.b16 %v124
  %v349 = vunpack.c.l.b16 %v125
  %v350 = vunpack.c.l.b16 %v126
  %v351 = vunpack.c.l.b16 %v127
  %v352 = vunpack.c.l.b16 %v128
  %v353 = vunpack.c.l.b16 %v129
  %v354 = vunpack.c.l.b16 %v130
  %v355 = vunpack.c.l.b16 %v131
  %v356 = vunpack.c.l.b16 %v132
  %v357 = vunpack.c.l.b16 %v133
  %v358 = vunpack.c.l.b16 %v134
  %v359 = vunpack.c.l.b16 %v135
  %v360 = vunpack.c.l.b16 %v136
  %v361 = vunpack.c.l.b16 %v137
  %v362 = vunpack.c.l.b16 %v138
  %v363 = vunpack.c.l.b16 %v139
  %v364 = vunpack.c.l.b16 %v140
  %v365 = vunpack.c.l.b16 %v141
  %v366 = vunpack.c.l.b16 %v142
  %v367 = vunpack.c.l.b16 %v143
  %v368 = vunpack.c.l.b16 %v144
  %v369 = vunpack.c.l.b16 %v145
  %v370 = vunpack.c.l.b16 %v146
  %v371 = vunpack.c.l.b16 %v147
  %v372 = vunpack.c.l.b16 %v148
  %v373 = vunpack.c.l.b16 %v149
  %v374 = vunpack.c.l.b16 %v150
  %v375 = vunpack.c.l.b16 %v151
  %v376 = vunpack.c.l.b16 %v152
  %v377 = vpack.c.b16 %v282, %v281
  %v378 = vpack.c.b16 %v284, %v283
  %v379 = vpack.c.b16 %v286, %v285
  %v380 = vpack.c.b16 %v288, %v287
  %v381 = vpack.c.b16 %v290, %v289
  %v382 = vpack.c.b16 %v292, %v291
  %v383 = vpack.c.b16 %v294, %v293
  %v384 = vpack.c.b16 %v296, %v295
  %v385 = vpack.c.b16 %v298, %v297
  %v386 = vpack.c.b16 %v300, %v299
  %v387 = vpack.c.b16 %v302, %v301
  %v388 = vpack.c.b16 %v304, %v303
  %v389 = vpack.c.b16 %v306, %v305
  %v390 = vpack.c.b16 %v308, %v307
  %v391 = vpack.c.b16 %v310, %v309
  %v392 = vpack.c.b16 %v312, %v311
  %v393 = vpack.c.b16 %v314, %v313
  %v394 = vpack.c.b16 %v316, %v315
  %v395 = vpack.c.b16 %v318, %v317
  %v396 = vpack.c.b16 %v320, %v319
  %v397 = vpack.c.b16 %v322, %v321
  %v398 = vpack.c.b16 %v324, %v323
  %v399 = vpack.c.b16 %v326, %v325
  %v400 = vpack.c.b16 %v328, %v327
  %v401 = vpack.c.b16 %v330, %v329
  %v402 = vpack.c.b16 %v332, %v331
  %v403 = vpack.c.b16 %v334, %v333
  %v404 = vpack.c.b16 %v336, %v335
  %v405 = vpack.c.b16 %v338, %v337
  %v406 = vpack.c.b16 %v340, %v339
  %v407 = vpack.c.b16 %v342, %v341
  %v408 = vpack.c.b16 %v344, %v343
  %v409 = vpack.c.b16 %v346, %v345
  %v410 = vpack.c.b16 %v348, %v347
  %v411 = vpack.c.b16 %v350, %v349
  %v412 = vpack.c.b16 %v352, %v351
  %v413 = vpack.c.b16 %v354, %v353
  %v414 = vpack.c.b16 %v356, %v355
  %v415 = vpack.c.b16 %v358, %v357
  %v416 = vpack.c.b16 %v360, %v359
  %v417 = vpack.c.b16 %v362, %v361
  %v418 = vpack.c.b16 %v364, %v363
  %v419 = vpack.c.b16 %v366, %v365
  %v420 = vpack.c.b16 %v368, %v367
  %v421 = vpack.c.b16 %v370, %v369
  %v422 = vpack.c.b16 %v372, %v371
  %v423 = vpack.c.b16 %v374, %v373
  %v424 = vpack.c.b16 %v376, %v375
  %473 = vmatprep.subr.bf16.mxu0 0
  %474 = vmatpush1.bf16.msra.mxu0 %v377
  %475 = vmatprep.subr.bf16.mxu0 0
  %476 = vmatpush1.bf16.msra.mxu0 %v378
  %477 = vmatprep.subr.bf16.mxu0 0
  %478 = vmatpush1.bf16.msra.mxu0 %v379
  %479 = vmatprep.subr.bf16.mxu0 0
  %480 = vmatpush1.bf16.msra.mxu0 %v380
  %481 = vmatprep.subr.bf16.mxu0 0
  %482 = vmatpush1.bf16.msra.mxu0 %v381
  %483 = vmatprep.subr.bf16.mxu0 0
  %484 = vmatpush1.bf16.msra.mxu0 %v382
  %485 = vmatprep.subr.bf16.mxu0 0
  %486 = vmatpush1.bf16.msra.mxu0 %v383
  %487 = vmatprep.subr.bf16.mxu0 0
  %488 = vmatpush1.bf16.msra.mxu0 %v384
  %489 = vmatprep.subr.bf16.mxu0 0
  %490 = vmatpush1.bf16.msra.mxu0 %v385
  %491 = vmatprep.subr.bf16.mxu0 0
  %492 = vmatpush1.bf16.msra.mxu0 %v386
  %493 = vmatprep.subr.bf16.mxu0 0
  %494 = vmatpush1.bf16.msra.mxu0 %v387
  %495 = vmatprep.subr.bf16.mxu0 0
  %496 = vmatpush1.bf16.msra.mxu0 %v388
  %497 = vmatprep.subr.bf16.mxu0 0
  %498 = vmatpush1.bf16.msra.mxu0 %v389
  %499 = vmatprep.subr.bf16.mxu0 0
  %500 = vmatpush1.bf16.msra.mxu0 %v390
  %501 = vmatprep.subr.bf16.mxu0 0
  %502 = vmatpush1.bf16.msra.mxu0 %v391
  %503 = vmatprep.subr.bf16.mxu0 0
  %504 = vmatpush1.bf16.msra.mxu0 %v392
  %505 = vmatprep.mubr.bf16.mxu0 %v174
  %506 = vmatmul.mubr.bf16.gmra.mrb[0].mxu0 %v173
  %v507 = vpop.f32.mrb[0].mxu0
  %v508 = vadd.f32 %v153, %v507
  %v509 = vpop.f32.mrb[0].mxu0
  %v510 = vpop.f32.mrb[0].mxu0
  %v511 = vadd.f32 %v154, %v510
  %v512 = vpop.f32.mrb[0].mxu0
  %513 = vdwg.mxu0
  %514 = vmatprep.subr.bf16.mxu0 0
  %515 = vmatpush1.bf16.msra.mxu0 %v393
  %516 = vmatprep.subr.bf16.mxu0 0
  %517 = vmatpush1.bf16.msra.mxu0 %v394
  %518 = vmatprep.subr.bf16.mxu0 0
  %519 = vmatpush1.bf16.msra.mxu0 %v395
  %520 = vmatprep.subr.bf16.mxu0 0
  %521 = vmatpush1.bf16.msra.mxu0 %v396
  %522 = vmatprep.subr.bf16.mxu0 0
  %523 = vmatpush1.bf16.msra.mxu0 %v397
  %524 = vmatprep.subr.bf16.mxu0 0
  %525 = vmatpush1.bf16.msra.mxu0 %v398
  %526 = vmatprep.subr.bf16.mxu0 0
  %527 = vmatpush1.bf16.msra.mxu0 %v399
  %528 = vmatprep.subr.bf16.mxu0 0
  %529 = vmatpush1.bf16.msra.mxu0 %v400
  %530 = vmatprep.subr.bf16.mxu0 0
  %531 = vmatpush1.bf16.msra.mxu0 %v401
  %532 = vmatprep.subr.bf16.mxu0 0
  %533 = vmatpush1.bf16.msra.mxu0 %v402
  %534 = vmatprep.subr.bf16.mxu0 0
  %535 = vmatpush1.bf16.msra.mxu0 %v403
  %536 = vmatprep.subr.bf16.mxu0 0
  %537 = vmatpush1.bf16.msra.mxu0 %v404
  %538 = vmatprep.subr.bf16.mxu0 0
  %539 = vmatpush1.bf16.msra.mxu0 %v405
  %540 = vmatprep.subr.bf16.mxu0 0
  %541 = vmatpush1.bf16.msra.mxu0 %v406
  %542 = vmatprep.subr.bf16.mxu0 0
  %543 = vmatpush1.bf16.msra.mxu0 %v407
  %544 = vmatprep.subr.bf16.mxu0 0
  %545 = vmatpush1.bf16.msra.mxu0 %v408
  %546 = vmatprep.mubr.bf16.mxu0 %v176
  %547 = vmatmul.mubr.bf16.gmra.mrb[0].mxu0 %v175
  %v548 = vpop.f32.mrb[0].mxu0
  %v549 = vadd.f32 %v508, %v548
  %v550 = vpop.f32.mrb[0].mxu0
  %v551 = vpop.f32.mrb[0].mxu0
  %v552 = vadd.f32 %v511, %v551
  %v553 = vpop.f32.mrb[0].mxu0
  %554 = vdwg.mxu0
  %555 = vmatprep.subr.bf16.mxu0 0
  %556 = vmatpush1.bf16.msra.mxu0 %v409
  %557 = vmatprep.subr.bf16.mxu0 0
  %558 = vmatpush1.bf16.msra.mxu0 %v410
  %559 = vmatprep.subr.bf16.mxu0 0
  %560 = vmatpush1.bf16.msra.mxu0 %v411
  %561 = vmatprep.subr.bf16.mxu0 0
  %562 = vmatpush1.bf16.msra.mxu0 %v412
  %563 = vmatprep.subr.bf16.mxu0 0
  %564 = vmatpush1.bf16.msra.mxu0 %v413
  %565 = vmatprep.subr.bf16.mxu0 0
  %566 = vmatpush1.bf16.msra.mxu0 %v414
  %567 = vmatprep.subr.bf16.mxu0 0
  %568 = vmatpush1.bf16.msra.mxu0 %v415
  %569 = vmatprep.subr.bf16.mxu0 0
  %570 = vmatpush1.bf16.msra.mxu0 %v416
  %571 = vmatprep.subr.bf16.mxu0 0
  %572 = vmatpush1.bf16.msra.mxu0 %v417
  %573 = vmatprep.subr.bf16.mxu0 0
  %574 = vmatpush1.bf16.msra.mxu0 %v418
  %575 = vmatprep.subr.bf16.mxu0 0
  %576 = vmatpush1.bf16.msra.mxu0 %v419
  %577 = vmatprep.subr.bf16.mxu0 0
  %578 = vmatpush1.bf16.msra.mxu0 %v420
  %579 = vmatprep.subr.bf16.mxu0 0
  %580 = vmatpush1.bf16.msra.mxu0 %v421
  %581 = vmatprep.subr.bf16.mxu0 0
  %582 = vmatpush1.bf16.msra.mxu0 %v422
  %583 = vmatprep.subr.bf16.mxu0 0
  %584 = vmatpush1.bf16.msra.mxu0 %v423
  %585 = vmatprep.subr.bf16.mxu0 0
  %586 = vmatpush1.bf16.msra.mxu0 %v424
  %587 = vmatprep.mubr.bf16.mxu0 %v178
  %588 = vmatmul.mubr.bf16.gmra.mrb[0].mxu0 %v177
  %v589 = vpop.f32.mrb[0].mxu0
  %v590 = vadd.f32 %v549, %v589
  %v591 = vpop.f32.mrb[0].mxu0
  %v592 = vpop.f32.mrb[0].mxu0
  %v593 = vadd.f32 %v552, %v592
  %v594 = vpop.f32.mrb[0].mxu0
  %595 = vdwg.mxu0
  %v596 = vld [vmem:[%s3] sm:$0xf]
  %vm597 = vcmask 523264
  %v598 = vsel %vm597, %v590, 0.0
  %599 = vadd.xlane.f32.xlu0 %v598
  %v600 = vpop.xlane.xlu0 %599
  %vm601 = vcmask 517120
  %v602 = vsel %vm601, %v593, 0.0
  %603 = vadd.xlane.f32.xlu0 %v602
  %v604 = vpop.xlane.xlu0 %603
  %v605 = vrcp.pop 64.0
  %v606 = vmul.f32 %v600, %v605
  %v607 = vmul.f32 %v604, %v605
  %v608 = vmul.f32 %v590, %v590
  %v609 = vmul.f32 %v593, %v593
  %v610 = vsel %vm597, %v608, 0.0
  %611 = vadd.xlane.f32.xlu0 %v610
  %v612 = vpop.xlane.xlu0 %611
  %v613 = vsel %vm601, %v609, 0.0
  %614 = vadd.xlane.f32.xlu0 %v613
  %v615 = vpop.xlane.xlu0 %614
  %v616 = vmul.f32 %v612, %v605
  %v617 = vmul.f32 %v615, %v605
  %v618 = vmul.f32 %v606, %v606
  %v619 = vmul.f32 %v607, %v607
  %v620 = vsub.f32 %v616, %v618
  %v621 = vsub.f32 %v617, %v619
  %v622 = vsub.f32 %v590, %v606
  %v623 = vsub.f32 %v593, %v607
  %v624 = vadd.f32 %v620, 1e-06
  %v625 = vadd.f32 %v621, 1e-06
  %v626 = vrsqrt.pop %v624
  %v627 = vrsqrt.pop %v625
  %v628 = vmul.f32 %v622, %v626
  %v629 = vmul.f32 %v623, %v627
  %v630 = vlaneseq
  %v631 = vshrl.u32 %v630, 7
  %v632 = vsub.s32 0, %v631
  %v633 = vrot.slane %v596, %v632
  %v634 = vmul.f32 %v628, %v633
  %v635 = vmul.f32 %v629, %v633
  %v636 = vlaneseq
  %v637 = vshrl.u32 %v636, 7
  %v638 = vsub.s32 1, %v637
  %v639 = vrot.slane %v596, %v638
  %v640 = vadd.f32 %v634, %v639
  %v641 = vadd.f32 %v635, %v639
  %v642 = vpack.c.bf16 %v641, %v640
  %v643 = vld [vmem:[%s4] sm:$0xff]
  %v644 = vld [vmem:[%s4 + $0x8] sm:$0xff]
  %v645 = vld [vmem:[%s4 + $0x10] sm:$0xff]
  %v646 = vld [vmem:[%s4 + $0x18] sm:$0xff]
  %v647 = vld [vmem:[%s4 + $0x20] sm:$0xff]
  %v648 = vld [vmem:[%s4 + $0x28] sm:$0xff]
  %v649 = vld [vmem:[%s4 + $0x30] sm:$0xff]
  %v650 = vld [vmem:[%s4 + $0x38] sm:$0xff]
  %v651 = vld [vmem:[%s5] sm:$0x3]
  %v653 = vlaneseq
  %v654 = vshrl.u32 %v653, 7
  %v655 = vsub.s32 0, %v654
  %v656 = vrot.slane %v651, %v655
  %v657 = vlaneseq
  %v658 = vshrl.u32 %v657, 7
  %v659 = vsub.s32 1, %v658
  %v660 = vrot.slane %v651, %v659
  %v671 = vunpack.c.l.b16 %v643
  %v672 = vunpack.c.h.b16 %v643
  %v673 = vunpack.c.l.b16 %v644
  %v674 = vunpack.c.h.b16 %v644
  %v675 = vunpack.c.l.b16 %v645
  %v676 = vunpack.c.h.b16 %v645
  %v677 = vunpack.c.l.b16 %v646
  %v678 = vunpack.c.h.b16 %v646
  %v679 = vunpack.c.l.b16 %v647
  %v680 = vunpack.c.h.b16 %v647
  %v681 = vunpack.c.l.b16 %v648
  %v682 = vunpack.c.h.b16 %v648
  %v683 = vunpack.c.l.b16 %v649
  %v684 = vunpack.c.h.b16 %v649
  %v685 = vunpack.c.l.b16 %v650
  %v686 = vunpack.c.h.b16 %v650
  %v687 = vpack.c.b16 %v673, %v671
  %v688 = vpack.c.b16 %v674, %v672
  %v689 = vpack.c.b16 %v677, %v675
  %v690 = vpack.c.b16 %v678, %v676
  %v691 = vpack.c.b16 %v681, %v679
  %v692 = vpack.c.b16 %v682, %v680
  %v693 = vpack.c.b16 %v685, %v683
  %v694 = vpack.c.b16 %v686, %v684
  %v704 = vsel %vm597, %v642, 0
  %706 = vmatprep.subr.bf16.mxu0 %v688
  %707 = vmatpush1.bf16.msra.mxu0 %v687
  %708 = vmatprep.subr.bf16.mxu0 %v690
  %709 = vmatpush1.bf16.msra.mxu0 %v689
  %710 = vmatprep.subr.bf16.mxu0 %v692
  %711 = vmatpush1.bf16.msra.mxu0 %v691
  %712 = vmatprep.subr.bf16.mxu0 %v694
  %713 = vmatpush1.bf16.msra.mxu0 %v693
  %714 = vmatprep.subr.bf16.mxu0 0
  %715 = vmatpush1.bf16.msra.mxu0 0
  %716 = vmatprep.subr.bf16.mxu0 0
  %717 = vmatpush1.bf16.msra.mxu0 0
  %718 = vmatprep.subr.bf16.mxu0 0
  %719 = vmatpush1.bf16.msra.mxu0 0
  %720 = vmatprep.subr.bf16.mxu0 0
  %721 = vmatpush1.bf16.msra.mxu0 0
  %722 = vmatprep.subr.bf16.mxu0 0
  %723 = vmatpush1.bf16.msra.mxu0 0
  %724 = vmatprep.subr.bf16.mxu0 0
  %725 = vmatpush1.bf16.msra.mxu0 0
  %726 = vmatprep.subr.bf16.mxu0 0
  %727 = vmatpush1.bf16.msra.mxu0 0
  %728 = vmatprep.subr.bf16.mxu0 0
  %729 = vmatpush1.bf16.msra.mxu0 0
  %730 = vmatprep.subr.bf16.mxu0 0
  %731 = vmatpush1.bf16.msra.mxu0 0
  %732 = vmatprep.subr.bf16.mxu0 0
  %733 = vmatpush1.bf16.msra.mxu0 0
  %734 = vmatprep.subr.bf16.mxu0 0
  %735 = vmatpush1.bf16.msra.mxu0 0
  %736 = vmatprep.subr.bf16.mxu0 0
  %737 = vmatpush1.bf16.msra.mxu0 0
  %738 = vmatprep.mubr.bf16.mxu0 0
  %739 = vmatmul.mubr.bf16.gmra.mrb[0].mxu0 %v704
  %v740 = vpop.f32.mrb[0].mxu0
  %v741 = vadd.f32 %v656, %v740
  %v742 = vpop.f32.mrb[0].mxu0
  %v743 = vadd.f32 %v660, %v742
  %v744 = vpop.f32.mrb[0].mxu0
  %v745 = vadd.f32 %v656, %v744
  %v746 = vpop.f32.mrb[0].mxu0
  %v747 = vadd.f32 %v660, %v746
  %748 = vdwg.mxu0
  %750 = vrot.lane.b32.xlu0 %v741, 112
  %v751 = vpop.permute.xlu0 %750
  %753 = vrot.lane.b32.xlu0 %v741, 96
  %v754 = vpop.permute.xlu0 %753
  %756 = vrot.lane.b32.xlu0 %v741, 80
  %v757 = vpop.permute.xlu0 %756
  %vm760 = vcmask 1042432
  %v761 = vrot.slane %v741, 5
  %v762 = vrot.slane %v745, 5
  %v763 = vsel %vm760, %v761, %v762
  %765 = vrot.lane.b32.xlu0 %v763, 112
  %v766 = vpop.permute.xlu0 %765
  %768 = vrot.lane.b32.xlu0 %v763, 96
  %v769 = vpop.permute.xlu0 %768
  %771 = vrot.lane.b32.xlu0 %v763, 80
  %v772 = vpop.permute.xlu0 %771
  %775 = vrot.lane.b32.xlu0 %v743, 112
  %v776 = vpop.permute.xlu0 %775
  %778 = vrot.lane.b32.xlu0 %v743, 96
  %v779 = vpop.permute.xlu0 %778
  %781 = vrot.lane.b32.xlu0 %v743, 80
  %v782 = vpop.permute.xlu0 %781
  %v785 = vrot.slane %v743, 5
  %v786 = vrot.slane %v747, 5
  %v787 = vsel %vm760, %v785, %v786
  %789 = vrot.lane.b32.xlu0 %v787, 112
  %v790 = vpop.permute.xlu0 %789
  %792 = vrot.lane.b32.xlu0 %v787, 96
  %v793 = vpop.permute.xlu0 %792
  %795 = vrot.lane.b32.xlu0 %v787, 80
  %v796 = vpop.permute.xlu0 %795
  %v798 = vpack.c.bf16 %v741, %v741
  %v799 = vpack.c.bf16 %v751, %v751
  %v800 = vpack.c.bf16 %v754, %v754
  %v801 = vpack.c.bf16 %v757, %v757
  %v802 = vpack.c.bf16 %v763, %v763
  %v803 = vpack.c.bf16 %v766, %v766
  %v804 = vpack.c.bf16 %v769, %v769
  %v805 = vpack.c.bf16 %v772, %v772
  %807 = vrot.lane.b32.xlu0 %v798, 64
  %v808 = vpop.permute.xlu0 %807
  %vm809 = vcmask 130048
  %v811 = vsel %vm809, %v798, 0
  %v814 = vsel %vm809, %v808, 0
  %816 = vmatprep.subr.bf16.mxu0 0
  %817 = vmatpush1.bf16.xpose.msra.mxu0 %v814
  %818 = vmatprep.subr.bf16.mxu0 0
  %819 = vmatpush1.bf16.xpose.msra.mxu0 0
  %820 = vmatprep.subr.bf16.mxu0 0
  %821 = vmatpush1.bf16.xpose.msra.mxu0 0
  %822 = vmatprep.subr.bf16.mxu0 0
  %823 = vmatpush1.bf16.xpose.msra.mxu0 0
  %824 = vmatprep.subr.bf16.mxu0 0
  %825 = vmatpush1.bf16.xpose.msra.mxu0 0
  %826 = vmatprep.subr.bf16.mxu0 0
  %827 = vmatpush1.bf16.xpose.msra.mxu0 0
  %828 = vmatprep.subr.bf16.mxu0 0
  %829 = vmatpush1.bf16.xpose.msra.mxu0 0
  %830 = vmatprep.subr.bf16.mxu0 0
  %831 = vmatpush1.bf16.xpose.msra.mxu0 0
  %832 = vmatprep.subr.bf16.mxu0 0
  %833 = vmatpush1.bf16.xpose.msra.mxu0 0
  %834 = vmatprep.subr.bf16.mxu0 0
  %835 = vmatpush1.bf16.xpose.msra.mxu0 0
  %836 = vmatprep.subr.bf16.mxu0 0
  %837 = vmatpush1.bf16.xpose.msra.mxu0 0
  %838 = vmatprep.subr.bf16.mxu0 0
  %839 = vmatpush1.bf16.xpose.msra.mxu0 0
  %840 = vmatprep.subr.bf16.mxu0 0
  %841 = vmatpush1.bf16.xpose.msra.mxu0 0
  %842 = vmatprep.subr.bf16.mxu0 0
  %843 = vmatpush1.bf16.xpose.msra.mxu0 0
  %844 = vmatprep.subr.bf16.mxu0 0
  %845 = vmatpush1.bf16.xpose.msra.mxu0 0
  %846 = vmatprep.subr.bf16.mxu0 0
  %847 = vmatpush1.bf16.xpose.msra.mxu0 0
  %848 = vmatprep.mubr.bf16.mxu0 0
  %849 = vmatmul.mubr.bf16.gmra.mrb[0].mxu0 %v811
  %v850 = vpop.f32.mrb[0].mxu0
  %v851 = vadd.f32 0.0, %v850
  %v852 = vpop.f32.mrb[0].mxu0
  %v853 = vpop.f32.mrb[0].mxu0
  %v854 = vpop.f32.mrb[0].mxu0
  %855 = vdwg.mxu0
  %857 = vrot.lane.b32.xlu0 %v799, 64
  %v858 = vpop.permute.xlu0 %857
  %v860 = vsel %vm809, %v799, 0
  %v863 = vsel %vm809, %v858, 0
  %865 = vmatprep.subr.bf16.mxu0 0
  %866 = vmatpush1.bf16.xpose.msra.mxu0 %v863
  %867 = vmatprep.subr.bf16.mxu0 0
  %868 = vmatpush1.bf16.xpose.msra.mxu0 0
  %869 = vmatprep.subr.bf16.mxu0 0
  %870 = vmatpush1.bf16.xpose.msra.mxu0 0
  %871 = vmatprep.subr.bf16.mxu0 0
  %872 = vmatpush1.bf16.xpose.msra.mxu0 0
  %873 = vmatprep.subr.bf16.mxu0 0
  %874 = vmatpush1.bf16.xpose.msra.mxu0 0
  %875 = vmatprep.subr.bf16.mxu0 0
  %876 = vmatpush1.bf16.xpose.msra.mxu0 0
  %877 = vmatprep.subr.bf16.mxu0 0
  %878 = vmatpush1.bf16.xpose.msra.mxu0 0
  %879 = vmatprep.subr.bf16.mxu0 0
  %880 = vmatpush1.bf16.xpose.msra.mxu0 0
  %881 = vmatprep.subr.bf16.mxu0 0
  %882 = vmatpush1.bf16.xpose.msra.mxu0 0
  %883 = vmatprep.subr.bf16.mxu0 0
  %884 = vmatpush1.bf16.xpose.msra.mxu0 0
  %885 = vmatprep.subr.bf16.mxu0 0
  %886 = vmatpush1.bf16.xpose.msra.mxu0 0
  %887 = vmatprep.subr.bf16.mxu0 0
  %888 = vmatpush1.bf16.xpose.msra.mxu0 0
  %889 = vmatprep.subr.bf16.mxu0 0
  %890 = vmatpush1.bf16.xpose.msra.mxu0 0
  %891 = vmatprep.subr.bf16.mxu0 0
  %892 = vmatpush1.bf16.xpose.msra.mxu0 0
  %893 = vmatprep.subr.bf16.mxu0 0
  %894 = vmatpush1.bf16.xpose.msra.mxu0 0
  %895 = vmatprep.subr.bf16.mxu0 0
  %896 = vmatpush1.bf16.xpose.msra.mxu0 0
  %897 = vmatprep.mubr.bf16.mxu0 0
  %898 = vmatmul.mubr.bf16.gmra.mrb[0].mxu0 %v860
  %v899 = vpop.f32.mrb[0].mxu0
  %v900 = vadd.f32 0.0, %v899
  %v901 = vpop.f32.mrb[0].mxu0
  %v902 = vpop.f32.mrb[0].mxu0
  %v903 = vpop.f32.mrb[0].mxu0
  %904 = vdwg.mxu0
  %906 = vrot.lane.b32.xlu0 %v800, 64
  %v907 = vpop.permute.xlu0 %906
  %v909 = vsel %vm809, %v800, 0
  %v912 = vsel %vm809, %v907, 0
  %914 = vmatprep.subr.bf16.mxu0 0
  %915 = vmatpush1.bf16.xpose.msra.mxu0 %v912
  %916 = vmatprep.subr.bf16.mxu0 0
  %917 = vmatpush1.bf16.xpose.msra.mxu0 0
  %918 = vmatprep.subr.bf16.mxu0 0
  %919 = vmatpush1.bf16.xpose.msra.mxu0 0
  %920 = vmatprep.subr.bf16.mxu0 0
  %921 = vmatpush1.bf16.xpose.msra.mxu0 0
  %922 = vmatprep.subr.bf16.mxu0 0
  %923 = vmatpush1.bf16.xpose.msra.mxu0 0
  %924 = vmatprep.subr.bf16.mxu0 0
  %925 = vmatpush1.bf16.xpose.msra.mxu0 0
  %926 = vmatprep.subr.bf16.mxu0 0
  %927 = vmatpush1.bf16.xpose.msra.mxu0 0
  %928 = vmatprep.subr.bf16.mxu0 0
  %929 = vmatpush1.bf16.xpose.msra.mxu0 0
  %930 = vmatprep.subr.bf16.mxu0 0
  %931 = vmatpush1.bf16.xpose.msra.mxu0 0
  %932 = vmatprep.subr.bf16.mxu0 0
  %933 = vmatpush1.bf16.xpose.msra.mxu0 0
  %934 = vmatprep.subr.bf16.mxu0 0
  %935 = vmatpush1.bf16.xpose.msra.mxu0 0
  %936 = vmatprep.subr.bf16.mxu0 0
  %937 = vmatpush1.bf16.xpose.msra.mxu0 0
  %938 = vmatprep.subr.bf16.mxu0 0
  %939 = vmatpush1.bf16.xpose.msra.mxu0 0
  %940 = vmatprep.subr.bf16.mxu0 0
  %941 = vmatpush1.bf16.xpose.msra.mxu0 0
  %942 = vmatprep.subr.bf16.mxu0 0
  %943 = vmatpush1.bf16.xpose.msra.mxu0 0
  %944 = vmatprep.subr.bf16.mxu0 0
  %945 = vmatpush1.bf16.xpose.msra.mxu0 0
  %946 = vmatprep.mubr.bf16.mxu0 0
  %947 = vmatmul.mubr.bf16.gmra.mrb[0].mxu0 %v909
  %v948 = vpop.f32.mrb[0].mxu0
  %v949 = vadd.f32 0.0, %v948
  %v950 = vpop.f32.mrb[0].mxu0
  %v951 = vpop.f32.mrb[0].mxu0
  %v952 = vpop.f32.mrb[0].mxu0
  %953 = vdwg.mxu0
  %955 = vrot.lane.b32.xlu0 %v801, 64
  %v956 = vpop.permute.xlu0 %955
  %v958 = vsel %vm809, %v801, 0
  %v961 = vsel %vm809, %v956, 0
  %963 = vmatprep.subr.bf16.mxu0 0
  %964 = vmatpush1.bf16.xpose.msra.mxu0 %v961
  %965 = vmatprep.subr.bf16.mxu0 0
  %966 = vmatpush1.bf16.xpose.msra.mxu0 0
  %967 = vmatprep.subr.bf16.mxu0 0
  %968 = vmatpush1.bf16.xpose.msra.mxu0 0
  %969 = vmatprep.subr.bf16.mxu0 0
  %970 = vmatpush1.bf16.xpose.msra.mxu0 0
  %971 = vmatprep.subr.bf16.mxu0 0
  %972 = vmatpush1.bf16.xpose.msra.mxu0 0
  %973 = vmatprep.subr.bf16.mxu0 0
  %974 = vmatpush1.bf16.xpose.msra.mxu0 0
  %975 = vmatprep.subr.bf16.mxu0 0
  %976 = vmatpush1.bf16.xpose.msra.mxu0 0
  %977 = vmatprep.subr.bf16.mxu0 0
  %978 = vmatpush1.bf16.xpose.msra.mxu0 0
  %979 = vmatprep.subr.bf16.mxu0 0
  %980 = vmatpush1.bf16.xpose.msra.mxu0 0
  %981 = vmatprep.subr.bf16.mxu0 0
  %982 = vmatpush1.bf16.xpose.msra.mxu0 0
  %983 = vmatprep.subr.bf16.mxu0 0
  %984 = vmatpush1.bf16.xpose.msra.mxu0 0
  %985 = vmatprep.subr.bf16.mxu0 0
  %986 = vmatpush1.bf16.xpose.msra.mxu0 0
  %987 = vmatprep.subr.bf16.mxu0 0
  %988 = vmatpush1.bf16.xpose.msra.mxu0 0
  %989 = vmatprep.subr.bf16.mxu0 0
  %990 = vmatpush1.bf16.xpose.msra.mxu0 0
  %991 = vmatprep.subr.bf16.mxu0 0
  %992 = vmatpush1.bf16.xpose.msra.mxu0 0
  %993 = vmatprep.subr.bf16.mxu0 0
  %994 = vmatpush1.bf16.xpose.msra.mxu0 0
  %995 = vmatprep.mubr.bf16.mxu0 0
  %996 = vmatmul.mubr.bf16.gmra.mrb[0].mxu0 %v958
  %v997 = vpop.f32.mrb[0].mxu0
  %v998 = vadd.f32 0.0, %v997
  %v999 = vpop.f32.mrb[0].mxu0
  %v1000 = vpop.f32.mrb[0].mxu0
  %v1001 = vpop.f32.mrb[0].mxu0
  %1002 = vdwg.mxu0
  %1004 = vrot.lane.b32.xlu0 %v802, 64
  %v1005 = vpop.permute.xlu0 %1004
  %v1007 = vsel %vm809, %v802, 0
  %v1010 = vsel %vm809, %v1005, 0
  %1012 = vmatprep.subr.bf16.mxu0 0
  %1013 = vmatpush1.bf16.xpose.msra.mxu0 %v1010
  %1014 = vmatprep.subr.bf16.mxu0 0
  %1015 = vmatpush1.bf16.xpose.msra.mxu0 0
  %1016 = vmatprep.subr.bf16.mxu0 0
  %1017 = vmatpush1.bf16.xpose.msra.mxu0 0
  %1018 = vmatprep.subr.bf16.mxu0 0
  %1019 = vmatpush1.bf16.xpose.msra.mxu0 0
  %1020 = vmatprep.subr.bf16.mxu0 0
  %1021 = vmatpush1.bf16.xpose.msra.mxu0 0
  %1022 = vmatprep.subr.bf16.mxu0 0
  %1023 = vmatpush1.bf16.xpose.msra.mxu0 0
  %1024 = vmatprep.subr.bf16.mxu0 0
  %1025 = vmatpush1.bf16.xpose.msra.mxu0 0
  %1026 = vmatprep.subr.bf16.mxu0 0
  %1027 = vmatpush1.bf16.xpose.msra.mxu0 0
  %1028 = vmatprep.subr.bf16.mxu0 0
  %1029 = vmatpush1.bf16.xpose.msra.mxu0 0
  %1030 = vmatprep.subr.bf16.mxu0 0
  %1031 = vmatpush1.bf16.xpose.msra.mxu0 0
  %1032 = vmatprep.subr.bf16.mxu0 0
  %1033 = vmatpush1.bf16.xpose.msra.mxu0 0
  %1034 = vmatprep.subr.bf16.mxu0 0
  %1035 = vmatpush1.bf16.xpose.msra.mxu0 0
  %1036 = vmatprep.subr.bf16.mxu0 0
  %1037 = vmatpush1.bf16.xpose.msra.mxu0 0
  %1038 = vmatprep.subr.bf16.mxu0 0
  %1039 = vmatpush1.bf16.xpose.msra.mxu0 0
  %1040 = vmatprep.subr.bf16.mxu0 0
  %1041 = vmatpush1.bf16.xpose.msra.mxu0 0
  %1042 = vmatprep.subr.bf16.mxu0 0
  %1043 = vmatpush1.bf16.xpose.msra.mxu0 0
  %1044 = vmatprep.mubr.bf16.mxu0 0
  %1045 = vmatmul.mubr.bf16.gmra.mrb[0].mxu0 %v1007
  %v1046 = vpop.f32.mrb[0].mxu0
  %v1047 = vadd.f32 0.0, %v1046
  %v1048 = vpop.f32.mrb[0].mxu0
  %v1049 = vpop.f32.mrb[0].mxu0
  %v1050 = vpop.f32.mrb[0].mxu0
  %1051 = vdwg.mxu0
  %1053 = vrot.lane.b32.xlu0 %v803, 64
  %v1054 = vpop.permute.xlu0 %1053
  %v1056 = vsel %vm809, %v803, 0
  %v1059 = vsel %vm809, %v1054, 0
  %1061 = vmatprep.subr.bf16.mxu0 0
  %1062 = vmatpush1.bf16.xpose.msra.mxu0 %v1059
  %1063 = vmatprep.subr.bf16.mxu0 0
  %1064 = vmatpush1.bf16.xpose.msra.mxu0 0
  %1065 = vmatprep.subr.bf16.mxu0 0
  %1066 = vmatpush1.bf16.xpose.msra.mxu0 0
  %1067 = vmatprep.subr.bf16.mxu0 0
  %1068 = vmatpush1.bf16.xpose.msra.mxu0 0
  %1069 = vmatprep.subr.bf16.mxu0 0
  %1070 = vmatpush1.bf16.xpose.msra.mxu0 0
  %1071 = vmatprep.subr.bf16.mxu0 0
  %1072 = vmatpush1.bf16.xpose.msra.mxu0 0
  %1073 = vmatprep.subr.bf16.mxu0 0
  %1074 = vmatpush1.bf16.xpose.msra.mxu0 0
  %1075 = vmatprep.subr.bf16.mxu0 0
  %1076 = vmatpush1.bf16.xpose.msra.mxu0 0
  %1077 = vmatprep.subr.bf16.mxu0 0
  %1078 = vmatpush1.bf16.xpose.msra.mxu0 0
  %1079 = vmatprep.subr.bf16.mxu0 0
  %1080 = vmatpush1.bf16.xpose.msra.mxu0 0
  %1081 = vmatprep.subr.bf16.mxu0 0
  %1082 = vmatpush1.bf16.xpose.msra.mxu0 0
  %1083 = vmatprep.subr.bf16.mxu0 0
  %1084 = vmatpush1.bf16.xpose.msra.mxu0 0
  %1085 = vmatprep.subr.bf16.mxu0 0
  %1086 = vmatpush1.bf16.xpose.msra.mxu0 0
  %1087 = vmatprep.subr.bf16.mxu0 0
  %1088 = vmatpush1.bf16.xpose.msra.mxu0 0
  %1089 = vmatprep.subr.bf16.mxu0 0
  %1090 = vmatpush1.bf16.xpose.msra.mxu0 0
  %1091 = vmatprep.subr.bf16.mxu0 0
  %1092 = vmatpush1.bf16.xpose.msra.mxu0 0
  %1093 = vmatprep.mubr.bf16.mxu0 0
  %1094 = vmatmul.mubr.bf16.gmra.mrb[0].mxu0 %v1056
  %v1095 = vpop.f32.mrb[0].mxu0
  %v1096 = vadd.f32 0.0, %v1095
  %v1097 = vpop.f32.mrb[0].mxu0
  %v1098 = vpop.f32.mrb[0].mxu0
  %v1099 = vpop.f32.mrb[0].mxu0
  %1100 = vdwg.mxu0
  %1102 = vrot.lane.b32.xlu0 %v804, 64
  %v1103 = vpop.permute.xlu0 %1102
  %v1105 = vsel %vm809, %v804, 0
  %v1108 = vsel %vm809, %v1103, 0
  %1110 = vmatprep.subr.bf16.mxu0 0
  %1111 = vmatpush1.bf16.xpose.msra.mxu0 %v1108
  %1112 = vmatprep.subr.bf16.mxu0 0
  %1113 = vmatpush1.bf16.xpose.msra.mxu0 0
  %1114 = vmatprep.subr.bf16.mxu0 0
  %1115 = vmatpush1.bf16.xpose.msra.mxu0 0
  %1116 = vmatprep.subr.bf16.mxu0 0
  %1117 = vmatpush1.bf16.xpose.msra.mxu0 0
  %1118 = vmatprep.subr.bf16.mxu0 0
  %1119 = vmatpush1.bf16.xpose.msra.mxu0 0
  %1120 = vmatprep.subr.bf16.mxu0 0
  %1121 = vmatpush1.bf16.xpose.msra.mxu0 0
  %1122 = vmatprep.subr.bf16.mxu0 0
  %1123 = vmatpush1.bf16.xpose.msra.mxu0 0
  %1124 = vmatprep.subr.bf16.mxu0 0
  %1125 = vmatpush1.bf16.xpose.msra.mxu0 0
  %1126 = vmatprep.subr.bf16.mxu0 0
  %1127 = vmatpush1.bf16.xpose.msra.mxu0 0
  %1128 = vmatprep.subr.bf16.mxu0 0
  %1129 = vmatpush1.bf16.xpose.msra.mxu0 0
  %1130 = vmatprep.subr.bf16.mxu0 0
  %1131 = vmatpush1.bf16.xpose.msra.mxu0 0
  %1132 = vmatprep.subr.bf16.mxu0 0
  %1133 = vmatpush1.bf16.xpose.msra.mxu0 0
  %1134 = vmatprep.subr.bf16.mxu0 0
  %1135 = vmatpush1.bf16.xpose.msra.mxu0 0
  %1136 = vmatprep.subr.bf16.mxu0 0
  %1137 = vmatpush1.bf16.xpose.msra.mxu0 0
  %1138 = vmatprep.subr.bf16.mxu0 0
  %1139 = vmatpush1.bf16.xpose.msra.mxu0 0
  %1140 = vmatprep.subr.bf16.mxu0 0
  %1141 = vmatpush1.bf16.xpose.msra.mxu0 0
  %1142 = vmatprep.mubr.bf16.mxu0 0
  %1143 = vmatmul.mubr.bf16.gmra.mrb[0].mxu0 %v1105
  %v1144 = vpop.f32.mrb[0].mxu0
  %v1145 = vadd.f32 0.0, %v1144
  %v1146 = vpop.f32.mrb[0].mxu0
  %v1147 = vpop.f32.mrb[0].mxu0
  %v1148 = vpop.f32.mrb[0].mxu0
  %1149 = vdwg.mxu0
  %1151 = vrot.lane.b32.xlu0 %v805, 64
  %v1152 = vpop.permute.xlu0 %1151
  %v1154 = vsel %vm809, %v805, 0
  %v1157 = vsel %vm809, %v1152, 0
  %1159 = vmatprep.subr.bf16.mxu0 0
  %1160 = vmatpush1.bf16.xpose.msra.mxu0 %v1157
  %1161 = vmatprep.subr.bf16.mxu0 0
  %1162 = vmatpush1.bf16.xpose.msra.mxu0 0
  %1163 = vmatprep.subr.bf16.mxu0 0
  %1164 = vmatpush1.bf16.xpose.msra.mxu0 0
  %1165 = vmatprep.subr.bf16.mxu0 0
  %1166 = vmatpush1.bf16.xpose.msra.mxu0 0
  %1167 = vmatprep.subr.bf16.mxu0 0
  %1168 = vmatpush1.bf16.xpose.msra.mxu0 0
  %1169 = vmatprep.subr.bf16.mxu0 0
  %1170 = vmatpush1.bf16.xpose.msra.mxu0 0
  %1171 = vmatprep.subr.bf16.mxu0 0
  %1172 = vmatpush1.bf16.xpose.msra.mxu0 0
  %1173 = vmatprep.subr.bf16.mxu0 0
  %1174 = vmatpush1.bf16.xpose.msra.mxu0 0
  %1175 = vmatprep.subr.bf16.mxu0 0
  %1176 = vmatpush1.bf16.xpose.msra.mxu0 0
  %1177 = vmatprep.subr.bf16.mxu0 0
  %1178 = vmatpush1.bf16.xpose.msra.mxu0 0
  %1179 = vmatprep.subr.bf16.mxu0 0
  %1180 = vmatpush1.bf16.xpose.msra.mxu0 0
  %1181 = vmatprep.subr.bf16.mxu0 0
  %1182 = vmatpush1.bf16.xpose.msra.mxu0 0
  %1183 = vmatprep.subr.bf16.mxu0 0
  %1184 = vmatpush1.bf16.xpose.msra.mxu0 0
  %1185 = vmatprep.subr.bf16.mxu0 0
  %1186 = vmatpush1.bf16.xpose.msra.mxu0 0
  %1187 = vmatprep.subr.bf16.mxu0 0
  %1188 = vmatpush1.bf16.xpose.msra.mxu0 0
  %1189 = vmatprep.subr.bf16.mxu0 0
  %1190 = vmatpush1.bf16.xpose.msra.mxu0 0
  %1191 = vmatprep.mubr.bf16.mxu0 0
  %1192 = vmatmul.mubr.bf16.gmra.mrb[0].mxu0 %v1154
  %v1193 = vpop.f32.mrb[0].mxu0
  %v1194 = vadd.f32 0.0, %v1193
  %v1195 = vpop.f32.mrb[0].mxu0
  %v1196 = vpop.f32.mrb[0].mxu0
  %v1197 = vpop.f32.mrb[0].mxu0
  %1198 = vdwg.mxu0
  %v1199 = vmul.f32 %v851, 0.25
  %v1200 = vmul.f32 %v900, 0.25
  %v1201 = vmul.f32 %v949, 0.25
  %v1202 = vmul.f32 %v998, 0.25
  %v1203 = vmul.f32 %v1047, 0.25
  %v1204 = vmul.f32 %v1096, 0.25
  %v1205 = vmul.f32 %v1145, 0.25
  %v1206 = vmul.f32 %v1194, 0.25
  %vm1207 = vcmask 36864
  %v1208 = vsel %vm1207, %v1199, -inf
  %1209 = vmax.xlane.f32.xlu0 %v1208
  %v1210 = vpop.xlane.xlu0 %1209
  %v1211 = vsel %vm1207, %v1200, -inf
  %1212 = vmax.xlane.f32.xlu0 %v1211
  %v1213 = vpop.xlane.xlu0 %1212
  %v1214 = vsel %vm1207, %v1201, -inf
  %1215 = vmax.xlane.f32.xlu0 %v1214
  %v1216 = vpop.xlane.xlu0 %1215
  %v1217 = vsel %vm1207, %v1202, -inf
  %1218 = vmax.xlane.f32.xlu0 %v1217
  %v1219 = vpop.xlane.xlu0 %1218
  %v1220 = vsel %vm1207, %v1203, -inf
  %1221 = vmax.xlane.f32.xlu0 %v1220
  %v1222 = vpop.xlane.xlu0 %1221
  %v1223 = vsel %vm1207, %v1204, -inf
  %1224 = vmax.xlane.f32.xlu0 %v1223
  %v1225 = vpop.xlane.xlu0 %1224
  %v1226 = vsel %vm1207, %v1205, -inf
  %1227 = vmax.xlane.f32.xlu0 %v1226
  %v1228 = vpop.xlane.xlu0 %1227
  %v1229 = vsel %vm1207, %v1206, -inf
  %1230 = vmax.xlane.f32.xlu0 %v1229
  %v1231 = vpop.xlane.xlu0 %1230
  %v1232 = vsub.f32 %v1199, %v1210
  %v1233 = vsub.f32 %v1200, %v1213
  %v1234 = vsub.f32 %v1201, %v1216
  %v1235 = vsub.f32 %v1202, %v1219
  %v1236 = vsub.f32 %v1203, %v1222
  %v1237 = vsub.f32 %v1204, %v1225
  %v1238 = vsub.f32 %v1205, %v1228
  %v1239 = vsub.f32 %v1206, %v1231
  %v1240 = vmul.f32 %v1232, 1.442695
  %v1241 = vpow.pop %v1240
  %v1242 = vmul.f32 %v1233, 1.442695
  %v1243 = vpow.pop %v1242
  %v1244 = vmul.f32 %v1234, 1.442695
  %v1245 = vpow.pop %v1244
  %v1246 = vmul.f32 %v1235, 1.442695
  %v1247 = vpow.pop %v1246
  %v1248 = vmul.f32 %v1236, 1.442695
  %v1249 = vpow.pop %v1248
  %v1250 = vmul.f32 %v1237, 1.442695
  %v1251 = vpow.pop %v1250
  %v1252 = vmul.f32 %v1238, 1.442695
  %v1253 = vpow.pop %v1252
  %v1254 = vmul.f32 %v1239, 1.442695
  %v1255 = vpow.pop %v1254
  %v1256 = vsel %vm1207, %v1241, 0.0
  %1257 = vadd.xlane.f32.xlu0 %v1256
  %v1258 = vpop.xlane.xlu0 %1257
  %v1259 = vsel %vm1207, %v1243, 0.0
  %1260 = vadd.xlane.f32.xlu0 %v1259
  %v1261 = vpop.xlane.xlu0 %1260
  %v1262 = vsel %vm1207, %v1245, 0.0
  %1263 = vadd.xlane.f32.xlu0 %v1262
  %v1264 = vpop.xlane.xlu0 %1263
  %v1265 = vsel %vm1207, %v1247, 0.0
  %1266 = vadd.xlane.f32.xlu0 %v1265
  %v1267 = vpop.xlane.xlu0 %1266
  %v1268 = vsel %vm1207, %v1249, 0.0
  %1269 = vadd.xlane.f32.xlu0 %v1268
  %v1270 = vpop.xlane.xlu0 %1269
  %v1271 = vsel %vm1207, %v1251, 0.0
  %1272 = vadd.xlane.f32.xlu0 %v1271
  %v1273 = vpop.xlane.xlu0 %1272
  %v1274 = vsel %vm1207, %v1253, 0.0
  %1275 = vadd.xlane.f32.xlu0 %v1274
  %v1276 = vpop.xlane.xlu0 %1275
  %v1277 = vsel %vm1207, %v1255, 0.0
  %1278 = vadd.xlane.f32.xlu0 %v1277
  %v1279 = vpop.xlane.xlu0 %1278
  %v1280 = vrcp.pop %v1258
  %v1281 = vrcp.pop %v1261
  %v1282 = vrcp.pop %v1264
  %v1283 = vrcp.pop %v1267
  %v1284 = vrcp.pop %v1270
  %v1285 = vrcp.pop %v1273
  %v1286 = vrcp.pop %v1276
  %v1287 = vrcp.pop %v1279
  %v1288 = vmul.f32 %v1241, %v1280
  %v1289 = vmul.f32 %v1243, %v1281
  %v1290 = vmul.f32 %v1245, %v1282
  %v1291 = vmul.f32 %v1247, %v1283
  %v1292 = vmul.f32 %v1249, %v1284
  %v1293 = vmul.f32 %v1251, %v1285
  %v1294 = vmul.f32 %v1253, %v1286
  %v1295 = vmul.f32 %v1255, %v1287
  %v1296 = vpack.c.bf16 %v1288, %v1288
  %v1297 = vpack.c.bf16 %v1289, %v1289
  %v1298 = vpack.c.bf16 %v1290, %v1290
  %v1299 = vpack.c.bf16 %v1291, %v1291
  %v1300 = vpack.c.bf16 %v1292, %v1292
  %v1301 = vpack.c.bf16 %v1293, %v1293
  %v1302 = vpack.c.bf16 %v1294, %v1294
  %v1303 = vpack.c.bf16 %v1295, %v1295
  %v1304 = vpack.c.bf16 %v743, %v743
  %v1305 = vpack.c.bf16 %v776, %v776
  %v1306 = vpack.c.bf16 %v779, %v779
  %v1307 = vpack.c.bf16 %v782, %v782
  %v1308 = vpack.c.bf16 %v787, %v787
  %v1309 = vpack.c.bf16 %v790, %v790
  %v1310 = vpack.c.bf16 %v793, %v793
  %v1311 = vpack.c.bf16 %v796, %v796
  %vm1312 = vcmask 39936
  %v1314 = vsel %vm1312, %v1296, 0
  %vm1316 = vcmask 1041408
  %v1317 = vsel %vm1316, 4294967295, 65535
  %v1318 = vsel %vm760, %v1317, 0
  %v1320 = vand.u32 %v1304, %v1318
  %1322 = vmatprep.subr.bf16.mxu0 0
  %1323 = vmatpush1.bf16.msra.mxu0 %v1320
  %1324 = vmatprep.subr.bf16.mxu0 0
  %1325 = vmatpush1.bf16.msra.mxu0 0
  %1326 = vmatprep.subr.bf16.mxu0 0
  %1327 = vmatpush1.bf16.msra.mxu0 0
  %1328 = vmatprep.subr.bf16.mxu0 0
  %1329 = vmatpush1.bf16.msra.mxu0 0
  %1330 = vmatprep.subr.bf16.mxu0 0
  %1331 = vmatpush1.bf16.msra.mxu0 0
  %1332 = vmatprep.subr.bf16.mxu0 0
  %1333 = vmatpush1.bf16.msra.mxu0 0
  %1334 = vmatprep.subr.bf16.mxu0 0
  %1335 = vmatpush1.bf16.msra.mxu0 0
  %1336 = vmatprep.subr.bf16.mxu0 0
  %1337 = vmatpush1.bf16.msra.mxu0 0
  %1338 = vmatprep.subr.bf16.mxu0 0
  %1339 = vmatpush1.bf16.msra.mxu0 0
  %1340 = vmatprep.subr.bf16.mxu0 0
  %1341 = vmatpush1.bf16.msra.mxu0 0
  %1342 = vmatprep.subr.bf16.mxu0 0
  %1343 = vmatpush1.bf16.msra.mxu0 0
  %1344 = vmatprep.subr.bf16.mxu0 0
  %1345 = vmatpush1.bf16.msra.mxu0 0
  %1346 = vmatprep.subr.bf16.mxu0 0
  %1347 = vmatpush1.bf16.msra.mxu0 0
  %1348 = vmatprep.subr.bf16.mxu0 0
  %1349 = vmatpush1.bf16.msra.mxu0 0
  %1350 = vmatprep.subr.bf16.mxu0 0
  %1351 = vmatpush1.bf16.msra.mxu0 0
  %1352 = vmatprep.subr.bf16.mxu0 0
  %1353 = vmatpush1.bf16.msra.mxu0 0
  %1354 = vmatprep.mubr.bf16.mxu0 0
  %1355 = vmatmul.mubr.bf16.gmra.mrb[0].mxu0 %v1314
  %v1356 = vpop.f32.mrb[0].mxu0
  %v1357 = vadd.f32 0.0, %v1356
  %v1358 = vpop.f32.mrb[0].mxu0
  %v1359 = vpop.f32.mrb[0].mxu0
  %v1360 = vpop.f32.mrb[0].mxu0
  %1361 = vdwg.mxu0
  %v1363 = vsel %vm1312, %v1297, 0
  %v1366 = vand.u32 %v1305, %v1318
  %1368 = vmatprep.subr.bf16.mxu0 0
  %1369 = vmatpush1.bf16.msra.mxu0 %v1366
  %1370 = vmatprep.subr.bf16.mxu0 0
  %1371 = vmatpush1.bf16.msra.mxu0 0
  %1372 = vmatprep.subr.bf16.mxu0 0
  %1373 = vmatpush1.bf16.msra.mxu0 0
  %1374 = vmatprep.subr.bf16.mxu0 0
  %1375 = vmatpush1.bf16.msra.mxu0 0
  %1376 = vmatprep.subr.bf16.mxu0 0
  %1377 = vmatpush1.bf16.msra.mxu0 0
  %1378 = vmatprep.subr.bf16.mxu0 0
  %1379 = vmatpush1.bf16.msra.mxu0 0
  %1380 = vmatprep.subr.bf16.mxu0 0
  %1381 = vmatpush1.bf16.msra.mxu0 0
  %1382 = vmatprep.subr.bf16.mxu0 0
  %1383 = vmatpush1.bf16.msra.mxu0 0
  %1384 = vmatprep.subr.bf16.mxu0 0
  %1385 = vmatpush1.bf16.msra.mxu0 0
  %1386 = vmatprep.subr.bf16.mxu0 0
  %1387 = vmatpush1.bf16.msra.mxu0 0
  %1388 = vmatprep.subr.bf16.mxu0 0
  %1389 = vmatpush1.bf16.msra.mxu0 0
  %1390 = vmatprep.subr.bf16.mxu0 0
  %1391 = vmatpush1.bf16.msra.mxu0 0
  %1392 = vmatprep.subr.bf16.mxu0 0
  %1393 = vmatpush1.bf16.msra.mxu0 0
  %1394 = vmatprep.subr.bf16.mxu0 0
  %1395 = vmatpush1.bf16.msra.mxu0 0
  %1396 = vmatprep.subr.bf16.mxu0 0
  %1397 = vmatpush1.bf16.msra.mxu0 0
  %1398 = vmatprep.subr.bf16.mxu0 0
  %1399 = vmatpush1.bf16.msra.mxu0 0
  %1400 = vmatprep.mubr.bf16.mxu0 0
  %1401 = vmatmul.mubr.bf16.gmra.mrb[0].mxu0 %v1363
  %v1402 = vpop.f32.mrb[0].mxu0
  %v1403 = vadd.f32 0.0, %v1402
  %v1404 = vpop.f32.mrb[0].mxu0
  %v1405 = vpop.f32.mrb[0].mxu0
  %v1406 = vpop.f32.mrb[0].mxu0
  %1407 = vdwg.mxu0
  %v1409 = vsel %vm1312, %v1298, 0
  %v1412 = vand.u32 %v1306, %v1318
  %1414 = vmatprep.subr.bf16.mxu0 0
  %1415 = vmatpush1.bf16.msra.mxu0 %v1412
  %1416 = vmatprep.subr.bf16.mxu0 0
  %1417 = vmatpush1.bf16.msra.mxu0 0
  %1418 = vmatprep.subr.bf16.mxu0 0
  %1419 = vmatpush1.bf16.msra.mxu0 0
  %1420 = vmatprep.subr.bf16.mxu0 0
  %1421 = vmatpush1.bf16.msra.mxu0 0
  %1422 = vmatprep.subr.bf16.mxu0 0
  %1423 = vmatpush1.bf16.msra.mxu0 0
  %1424 = vmatprep.subr.bf16.mxu0 0
  %1425 = vmatpush1.bf16.msra.mxu0 0
  %1426 = vmatprep.subr.bf16.mxu0 0
  %1427 = vmatpush1.bf16.msra.mxu0 0
  %1428 = vmatprep.subr.bf16.mxu0 0
  %1429 = vmatpush1.bf16.msra.mxu0 0
  %1430 = vmatprep.subr.bf16.mxu0 0
  %1431 = vmatpush1.bf16.msra.mxu0 0
  %1432 = vmatprep.subr.bf16.mxu0 0
  %1433 = vmatpush1.bf16.msra.mxu0 0
  %1434 = vmatprep.subr.bf16.mxu0 0
  %1435 = vmatpush1.bf16.msra.mxu0 0
  %1436 = vmatprep.subr.bf16.mxu0 0
  %1437 = vmatpush1.bf16.msra.mxu0 0
  %1438 = vmatprep.subr.bf16.mxu0 0
  %1439 = vmatpush1.bf16.msra.mxu0 0
  %1440 = vmatprep.subr.bf16.mxu0 0
  %1441 = vmatpush1.bf16.msra.mxu0 0
  %1442 = vmatprep.subr.bf16.mxu0 0
  %1443 = vmatpush1.bf16.msra.mxu0 0
  %1444 = vmatprep.subr.bf16.mxu0 0
  %1445 = vmatpush1.bf16.msra.mxu0 0
  %1446 = vmatprep.mubr.bf16.mxu0 0
  %1447 = vmatmul.mubr.bf16.gmra.mrb[0].mxu0 %v1409
  %v1448 = vpop.f32.mrb[0].mxu0
  %v1449 = vadd.f32 0.0, %v1448
  %v1450 = vpop.f32.mrb[0].mxu0
  %v1451 = vpop.f32.mrb[0].mxu0
  %v1452 = vpop.f32.mrb[0].mxu0
  %1453 = vdwg.mxu0
  %v1455 = vsel %vm1312, %v1299, 0
  %v1458 = vand.u32 %v1307, %v1318
  %1460 = vmatprep.subr.bf16.mxu0 0
  %1461 = vmatpush1.bf16.msra.mxu0 %v1458
  %1462 = vmatprep.subr.bf16.mxu0 0
  %1463 = vmatpush1.bf16.msra.mxu0 0
  %1464 = vmatprep.subr.bf16.mxu0 0
  %1465 = vmatpush1.bf16.msra.mxu0 0
  %1466 = vmatprep.subr.bf16.mxu0 0
  %1467 = vmatpush1.bf16.msra.mxu0 0
  %1468 = vmatprep.subr.bf16.mxu0 0
  %1469 = vmatpush1.bf16.msra.mxu0 0
  %1470 = vmatprep.subr.bf16.mxu0 0
  %1471 = vmatpush1.bf16.msra.mxu0 0
  %1472 = vmatprep.subr.bf16.mxu0 0
  %1473 = vmatpush1.bf16.msra.mxu0 0
  %1474 = vmatprep.subr.bf16.mxu0 0
  %1475 = vmatpush1.bf16.msra.mxu0 0
  %1476 = vmatprep.subr.bf16.mxu0 0
  %1477 = vmatpush1.bf16.msra.mxu0 0
  %1478 = vmatprep.subr.bf16.mxu0 0
  %1479 = vmatpush1.bf16.msra.mxu0 0
  %1480 = vmatprep.subr.bf16.mxu0 0
  %1481 = vmatpush1.bf16.msra.mxu0 0
  %1482 = vmatprep.subr.bf16.mxu0 0
  %1483 = vmatpush1.bf16.msra.mxu0 0
  %1484 = vmatprep.subr.bf16.mxu0 0
  %1485 = vmatpush1.bf16.msra.mxu0 0
  %1486 = vmatprep.subr.bf16.mxu0 0
  %1487 = vmatpush1.bf16.msra.mxu0 0
  %1488 = vmatprep.subr.bf16.mxu0 0
  %1489 = vmatpush1.bf16.msra.mxu0 0
  %1490 = vmatprep.subr.bf16.mxu0 0
  %1491 = vmatpush1.bf16.msra.mxu0 0
  %1492 = vmatprep.mubr.bf16.mxu0 0
  %1493 = vmatmul.mubr.bf16.gmra.mrb[0].mxu0 %v1455
  %v1494 = vpop.f32.mrb[0].mxu0
  %v1495 = vadd.f32 0.0, %v1494
  %v1496 = vpop.f32.mrb[0].mxu0
  %v1497 = vpop.f32.mrb[0].mxu0
  %v1498 = vpop.f32.mrb[0].mxu0
  %1499 = vdwg.mxu0
  %v1501 = vsel %vm1312, %v1300, 0
  %v1504 = vand.u32 %v1308, %v1318
  %1506 = vmatprep.subr.bf16.mxu0 0
  %1507 = vmatpush1.bf16.msra.mxu0 %v1504
  %1508 = vmatprep.subr.bf16.mxu0 0
  %1509 = vmatpush1.bf16.msra.mxu0 0
  %1510 = vmatprep.subr.bf16.mxu0 0
  %1511 = vmatpush1.bf16.msra.mxu0 0
  %1512 = vmatprep.subr.bf16.mxu0 0
  %1513 = vmatpush1.bf16.msra.mxu0 0
  %1514 = vmatprep.subr.bf16.mxu0 0
  %1515 = vmatpush1.bf16.msra.mxu0 0
  %1516 = vmatprep.subr.bf16.mxu0 0
  %1517 = vmatpush1.bf16.msra.mxu0 0
  %1518 = vmatprep.subr.bf16.mxu0 0
  %1519 = vmatpush1.bf16.msra.mxu0 0
  %1520 = vmatprep.subr.bf16.mxu0 0
  %1521 = vmatpush1.bf16.msra.mxu0 0
  %1522 = vmatprep.subr.bf16.mxu0 0
  %1523 = vmatpush1.bf16.msra.mxu0 0
  %1524 = vmatprep.subr.bf16.mxu0 0
  %1525 = vmatpush1.bf16.msra.mxu0 0
  %1526 = vmatprep.subr.bf16.mxu0 0
  %1527 = vmatpush1.bf16.msra.mxu0 0
  %1528 = vmatprep.subr.bf16.mxu0 0
  %1529 = vmatpush1.bf16.msra.mxu0 0
  %1530 = vmatprep.subr.bf16.mxu0 0
  %1531 = vmatpush1.bf16.msra.mxu0 0
  %1532 = vmatprep.subr.bf16.mxu0 0
  %1533 = vmatpush1.bf16.msra.mxu0 0
  %1534 = vmatprep.subr.bf16.mxu0 0
  %1535 = vmatpush1.bf16.msra.mxu0 0
  %1536 = vmatprep.subr.bf16.mxu0 0
  %1537 = vmatpush1.bf16.msra.mxu0 0
  %1538 = vmatprep.mubr.bf16.mxu0 0
  %1539 = vmatmul.mubr.bf16.gmra.mrb[0].mxu0 %v1501
  %v1540 = vpop.f32.mrb[0].mxu0
  %v1541 = vadd.f32 0.0, %v1540
  %v1542 = vpop.f32.mrb[0].mxu0
  %v1543 = vpop.f32.mrb[0].mxu0
  %v1544 = vpop.f32.mrb[0].mxu0
  %1545 = vdwg.mxu0
  %v1547 = vsel %vm1312, %v1301, 0
  %v1550 = vand.u32 %v1309, %v1318
  %1552 = vmatprep.subr.bf16.mxu0 0
  %1553 = vmatpush1.bf16.msra.mxu0 %v1550
  %1554 = vmatprep.subr.bf16.mxu0 0
  %1555 = vmatpush1.bf16.msra.mxu0 0
  %1556 = vmatprep.subr.bf16.mxu0 0
  %1557 = vmatpush1.bf16.msra.mxu0 0
  %1558 = vmatprep.subr.bf16.mxu0 0
  %1559 = vmatpush1.bf16.msra.mxu0 0
  %1560 = vmatprep.subr.bf16.mxu0 0
  %1561 = vmatpush1.bf16.msra.mxu0 0
  %1562 = vmatprep.subr.bf16.mxu0 0
  %1563 = vmatpush1.bf16.msra.mxu0 0
  %1564 = vmatprep.subr.bf16.mxu0 0
  %1565 = vmatpush1.bf16.msra.mxu0 0
  %1566 = vmatprep.subr.bf16.mxu0 0
  %1567 = vmatpush1.bf16.msra.mxu0 0
  %1568 = vmatprep.subr.bf16.mxu0 0
  %1569 = vmatpush1.bf16.msra.mxu0 0
  %1570 = vmatprep.subr.bf16.mxu0 0
  %1571 = vmatpush1.bf16.msra.mxu0 0
  %1572 = vmatprep.subr.bf16.mxu0 0
  %1573 = vmatpush1.bf16.msra.mxu0 0
  %1574 = vmatprep.subr.bf16.mxu0 0
  %1575 = vmatpush1.bf16.msra.mxu0 0
  %1576 = vmatprep.subr.bf16.mxu0 0
  %1577 = vmatpush1.bf16.msra.mxu0 0
  %1578 = vmatprep.subr.bf16.mxu0 0
  %1579 = vmatpush1.bf16.msra.mxu0 0
  %1580 = vmatprep.subr.bf16.mxu0 0
  %1581 = vmatpush1.bf16.msra.mxu0 0
  %1582 = vmatprep.subr.bf16.mxu0 0
  %1583 = vmatpush1.bf16.msra.mxu0 0
  %1584 = vmatprep.mubr.bf16.mxu0 0
  %1585 = vmatmul.mubr.bf16.gmra.mrb[0].mxu0 %v1547
  %v1586 = vpop.f32.mrb[0].mxu0
  %v1587 = vadd.f32 0.0, %v1586
  %v1588 = vpop.f32.mrb[0].mxu0
  %v1589 = vpop.f32.mrb[0].mxu0
  %v1590 = vpop.f32.mrb[0].mxu0
  %1591 = vdwg.mxu0
  %v1593 = vsel %vm1312, %v1302, 0
  %v1596 = vand.u32 %v1310, %v1318
  %1598 = vmatprep.subr.bf16.mxu0 0
  %1599 = vmatpush1.bf16.msra.mxu0 %v1596
  %1600 = vmatprep.subr.bf16.mxu0 0
  %1601 = vmatpush1.bf16.msra.mxu0 0
  %1602 = vmatprep.subr.bf16.mxu0 0
  %1603 = vmatpush1.bf16.msra.mxu0 0
  %1604 = vmatprep.subr.bf16.mxu0 0
  %1605 = vmatpush1.bf16.msra.mxu0 0
  %1606 = vmatprep.subr.bf16.mxu0 0
  %1607 = vmatpush1.bf16.msra.mxu0 0
  %1608 = vmatprep.subr.bf16.mxu0 0
  %1609 = vmatpush1.bf16.msra.mxu0 0
  %1610 = vmatprep.subr.bf16.mxu0 0
  %1611 = vmatpush1.bf16.msra.mxu0 0
  %1612 = vmatprep.subr.bf16.mxu0 0
  %1613 = vmatpush1.bf16.msra.mxu0 0
  %1614 = vmatprep.subr.bf16.mxu0 0
  %1615 = vmatpush1.bf16.msra.mxu0 0
  %1616 = vmatprep.subr.bf16.mxu0 0
  %1617 = vmatpush1.bf16.msra.mxu0 0
  %1618 = vmatprep.subr.bf16.mxu0 0
  %1619 = vmatpush1.bf16.msra.mxu0 0
  %1620 = vmatprep.subr.bf16.mxu0 0
  %1621 = vmatpush1.bf16.msra.mxu0 0
  %1622 = vmatprep.subr.bf16.mxu0 0
  %1623 = vmatpush1.bf16.msra.mxu0 0
  %1624 = vmatprep.subr.bf16.mxu0 0
  %1625 = vmatpush1.bf16.msra.mxu0 0
  %1626 = vmatprep.subr.bf16.mxu0 0
  %1627 = vmatpush1.bf16.msra.mxu0 0
  %1628 = vmatprep.subr.bf16.mxu0 0
  %1629 = vmatpush1.bf16.msra.mxu0 0
  %1630 = vmatprep.mubr.bf16.mxu0 0
  %1631 = vmatmul.mubr.bf16.gmra.mrb[0].mxu0 %v1593
  %v1632 = vpop.f32.mrb[0].mxu0
  %v1633 = vadd.f32 0.0, %v1632
  %v1634 = vpop.f32.mrb[0].mxu0
  %v1635 = vpop.f32.mrb[0].mxu0
  %v1636 = vpop.f32.mrb[0].mxu0
  %1637 = vdwg.mxu0
  %v1639 = vsel %vm1312, %v1303, 0
  %v1642 = vand.u32 %v1311, %v1318
  %1644 = vmatprep.subr.bf16.mxu0 0
  %1645 = vmatpush1.bf16.msra.mxu0 %v1642
  %1646 = vmatprep.subr.bf16.mxu0 0
  %1647 = vmatpush1.bf16.msra.mxu0 0
  %1648 = vmatprep.subr.bf16.mxu0 0
  %1649 = vmatpush1.bf16.msra.mxu0 0
  %1650 = vmatprep.subr.bf16.mxu0 0
  %1651 = vmatpush1.bf16.msra.mxu0 0
  %1652 = vmatprep.subr.bf16.mxu0 0
  %1653 = vmatpush1.bf16.msra.mxu0 0
  %1654 = vmatprep.subr.bf16.mxu0 0
  %1655 = vmatpush1.bf16.msra.mxu0 0
  %1656 = vmatprep.subr.bf16.mxu0 0
  %1657 = vmatpush1.bf16.msra.mxu0 0
  %1658 = vmatprep.subr.bf16.mxu0 0
  %1659 = vmatpush1.bf16.msra.mxu0 0
  %1660 = vmatprep.subr.bf16.mxu0 0
  %1661 = vmatpush1.bf16.msra.mxu0 0
  %1662 = vmatprep.subr.bf16.mxu0 0
  %1663 = vmatpush1.bf16.msra.mxu0 0
  %1664 = vmatprep.subr.bf16.mxu0 0
  %1665 = vmatpush1.bf16.msra.mxu0 0
  %1666 = vmatprep.subr.bf16.mxu0 0
  %1667 = vmatpush1.bf16.msra.mxu0 0
  %1668 = vmatprep.subr.bf16.mxu0 0
  %1669 = vmatpush1.bf16.msra.mxu0 0
  %1670 = vmatprep.subr.bf16.mxu0 0
  %1671 = vmatpush1.bf16.msra.mxu0 0
  %1672 = vmatprep.subr.bf16.mxu0 0
  %1673 = vmatpush1.bf16.msra.mxu0 0
  %1674 = vmatprep.subr.bf16.mxu0 0
  %1675 = vmatpush1.bf16.msra.mxu0 0
  %1676 = vmatprep.mubr.bf16.mxu0 0
  %1677 = vmatmul.mubr.bf16.gmra.mrb[0].mxu0 %v1639
  %v1678 = vpop.f32.mrb[0].mxu0
  %v1679 = vadd.f32 0.0, %v1678
  %v1680 = vpop.f32.mrb[0].mxu0
  %v1681 = vpop.f32.mrb[0].mxu0
  %v1682 = vpop.f32.mrb[0].mxu0
  %1683 = vdwg.mxu0
  %1685 = vrot.lane.b32.xlu0 %v1403, 16
  %v1686 = vpop.permute.xlu0 %1685
  %1689 = vrot.lane.b32.xlu0 %v1449, 32
  %v1690 = vpop.permute.xlu0 %1689
  %1693 = vrot.lane.b32.xlu0 %v1495, 48
  %v1694 = vpop.permute.xlu0 %1693
  %v1696 = vsel %vm809, %v1357, %v1686
  %vm1697 = vcmask 261120
  %v1698 = vsel %vm1697, %v1696, %v1690
  %vm1699 = vcmask 392192
  %v1700 = vsel %vm1699, %v1698, %v1694
  %1702 = vrot.lane.b32.xlu0 %v1587, 16
  %v1703 = vpop.permute.xlu0 %1702
  %1706 = vrot.lane.b32.xlu0 %v1633, 32
  %v1707 = vpop.permute.xlu0 %1706
  %1710 = vrot.lane.b32.xlu0 %v1679, 48
  %v1711 = vpop.permute.xlu0 %1710
  %v1713 = vsel %vm809, %v1541, %v1703
  %v1714 = vsel %vm1697, %v1713, %v1707
  %v1715 = vsel %vm1699, %v1714, %v1711
  %v1717 = vrot.slane %v1715, 3
  %vm1719 = vcmask 1044480
  %v1720 = vsel %vm1719, %v1700, %v1717
  %v1721 = vpack.c.bf16 %v1717, %v1720
  %v1722 = vld [vmem:[%s6] sm:$0xf]
  %v1723 = vld [vmem:[%s6 + $0x4] sm:$0xf]
  %v1724 = vld [vmem:[%s6 + $0x8] sm:$0xf]
  %v1725 = vld [vmem:[%s6 + $0xc] sm:$0xf]
  %v1726 = vld [vmem:[%s6 + $0x10] sm:$0xf]
  %v1727 = vld [vmem:[%s6 + $0x14] sm:$0xf]
  %v1728 = vld [vmem:[%s6 + $0x18] sm:$0xf]
  %v1729 = vld [vmem:[%s6 + $0x1c] sm:$0xf]
  %v1730 = vld [vmem:[%s7] sm:$0x1]
  %v1732 = vlaneseq
  %v1733 = vshrl.u32 %v1732, 7
  %v1734 = vsub.s32 0, %v1733
  %v1735 = vrot.slane %v1730, %v1734
  %v1745 = vunpack.c.l.b16 %v1722
  %v1746 = vunpack.c.l.b16 %v1723
  %v1747 = vunpack.c.l.b16 %v1724
  %v1748 = vunpack.c.l.b16 %v1725
  %v1749 = vunpack.c.l.b16 %v1726
  %v1750 = vunpack.c.l.b16 %v1727
  %v1751 = vunpack.c.l.b16 %v1728
  %v1752 = vunpack.c.l.b16 %v1729
  %v1753 = vpack.c.b16 %v1746, %v1745
  %v1754 = vpack.c.b16 %v1748, %v1747
  %v1755 = vpack.c.b16 %v1750, %v1749
  %v1756 = vpack.c.b16 %v1752, %v1751
  %v1762 = vsel %vm597, %v1721, 0
  %1764 = vmatprep.subr.bf16.mxu0 0
  %1765 = vmatpush1.bf16.msra.mxu0 %v1753
  %1766 = vmatprep.subr.bf16.mxu0 0
  %1767 = vmatpush1.bf16.msra.mxu0 %v1754
  %1768 = vmatprep.subr.bf16.mxu0 0
  %1769 = vmatpush1.bf16.msra.mxu0 %v1755
  %1770 = vmatprep.subr.bf16.mxu0 0
  %1771 = vmatpush1.bf16.msra.mxu0 %v1756
  %1772 = vmatprep.subr.bf16.mxu0 0
  %1773 = vmatpush1.bf16.msra.mxu0 0
  %1774 = vmatprep.subr.bf16.mxu0 0
  %1775 = vmatpush1.bf16.msra.mxu0 0
  %1776 = vmatprep.subr.bf16.mxu0 0
  %1777 = vmatpush1.bf16.msra.mxu0 0
  %1778 = vmatprep.subr.bf16.mxu0 0
  %1779 = vmatpush1.bf16.msra.mxu0 0
  %1780 = vmatprep.subr.bf16.mxu0 0
  %1781 = vmatpush1.bf16.msra.mxu0 0
  %1782 = vmatprep.subr.bf16.mxu0 0
  %1783 = vmatpush1.bf16.msra.mxu0 0
  %1784 = vmatprep.subr.bf16.mxu0 0
  %1785 = vmatpush1.bf16.msra.mxu0 0
  %1786 = vmatprep.subr.bf16.mxu0 0
  %1787 = vmatpush1.bf16.msra.mxu0 0
  %1788 = vmatprep.subr.bf16.mxu0 0
  %1789 = vmatpush1.bf16.msra.mxu0 0
  %1790 = vmatprep.subr.bf16.mxu0 0
  %1791 = vmatpush1.bf16.msra.mxu0 0
  %1792 = vmatprep.subr.bf16.mxu0 0
  %1793 = vmatpush1.bf16.msra.mxu0 0
  %1794 = vmatprep.subr.bf16.mxu0 0
  %1795 = vmatpush1.bf16.msra.mxu0 0
  %1796 = vmatprep.mubr.bf16.mxu0 0
  %1797 = vmatmul.mubr.bf16.gmra.mrb[0].mxu0 %v1762
  %v1798 = vpop.f32.mrb[0].mxu0
  %v1799 = vadd.f32 %v1735, %v1798
  %v1800 = vpop.f32.mrb[0].mxu0
  %v1801 = vpop.f32.mrb[0].mxu0
  %v1802 = vadd.f32 %v1735, %v1801
  %v1803 = vpop.f32.mrb[0].mxu0
  %1804 = vdwg.mxu0
  %v1805 = vadd.f32 %v590, %v1799
  %v1806 = vadd.f32 %v593, %v1802
  %v1807 = vsel %vm597, %v1805, 0.0
  %1808 = vadd.xlane.f32.xlu0 %v1807
  %v1809 = vpop.xlane.xlu0 %1808
  %v1810 = vsel %vm601, %v1806, 0.0
  %1811 = vadd.xlane.f32.xlu0 %v1810
  %v1812 = vpop.xlane.xlu0 %1811
  %v1813 = vmul.f32 %v1809, %v605
  %v1814 = vmul.f32 %v1812, %v605
  %v1815 = vmul.f32 %v1805, %v1805
  %v1816 = vmul.f32 %v1806, %v1806
  %v1817 = vsel %vm597, %v1815, 0.0
  %1818 = vadd.xlane.f32.xlu0 %v1817
  %v1819 = vpop.xlane.xlu0 %1818
  %v1820 = vsel %vm601, %v1816, 0.0
  %1821 = vadd.xlane.f32.xlu0 %v1820
  %v1822 = vpop.xlane.xlu0 %1821
  %v1823 = vmul.f32 %v1819, %v605
  %v1824 = vmul.f32 %v1822, %v605
  %v1825 = vmul.f32 %v1813, %v1813
  %v1826 = vmul.f32 %v1814, %v1814
  %v1827 = vsub.f32 %v1823, %v1825
  %v1828 = vsub.f32 %v1824, %v1826
  %v1829 = vsub.f32 %v1805, %v1813
  %v1830 = vsub.f32 %v1806, %v1814
  %v1831 = vadd.f32 %v1827, 1e-06
  %v1832 = vadd.f32 %v1828, 1e-06
  %v1833 = vrsqrt.pop %v1831
  %v1834 = vrsqrt.pop %v1832
  %v1835 = vmul.f32 %v1829, %v1833
  %v1836 = vmul.f32 %v1830, %v1834
  %v1837 = vlaneseq
  %v1838 = vshrl.u32 %v1837, 7
  %v1839 = vsub.s32 2, %v1838
  %v1840 = vrot.slane %v596, %v1839
  %v1841 = vmul.f32 %v1835, %v1840
  %v1842 = vmul.f32 %v1836, %v1840
  %v1843 = vlaneseq
  %v1844 = vshrl.u32 %v1843, 7
  %v1845 = vsub.s32 3, %v1844
  %v1846 = vrot.slane %v596, %v1845
  %v1847 = vadd.f32 %v1841, %v1846
  %v1848 = vadd.f32 %v1842, %v1846
  %v1849 = vpack.c.bf16 %v1848, %v1847
  %v1850 = vld [vmem:[%s8] sm:$0xff]
  %v1851 = vld [vmem:[%s8 + $0x8] sm:$0xff]
  %v1852 = vld [vmem:[%s8 + $0x10] sm:$0xff]
  %v1853 = vld [vmem:[%s8 + $0x18] sm:$0xff]
  %v1854 = vld [vmem:[%s8 + $0x20] sm:$0xff]
  %v1855 = vld [vmem:[%s8 + $0x28] sm:$0xff]
  %v1856 = vld [vmem:[%s8 + $0x30] sm:$0xff]
  %v1857 = vld [vmem:[%s8 + $0x38] sm:$0xff]
  %v1858 = vld [vmem:[%s9] sm:$0x3]
  %v1860 = vlaneseq
  %v1861 = vshrl.u32 %v1860, 7
  %v1862 = vsub.s32 0, %v1861
  %v1863 = vrot.slane %v1858, %v1862
  %v1864 = vlaneseq
  %v1865 = vshrl.u32 %v1864, 7
  %v1866 = vsub.s32 1, %v1865
  %v1867 = vrot.slane %v1858, %v1866
  %v1878 = vunpack.c.l.b16 %v1850
  %v1879 = vunpack.c.h.b16 %v1850
  %v1880 = vunpack.c.l.b16 %v1851
  %v1881 = vunpack.c.h.b16 %v1851
  %v1882 = vunpack.c.l.b16 %v1852
  %v1883 = vunpack.c.h.b16 %v1852
  %v1884 = vunpack.c.l.b16 %v1853
  %v1885 = vunpack.c.h.b16 %v1853
  %v1886 = vunpack.c.l.b16 %v1854
  %v1887 = vunpack.c.h.b16 %v1854
  %v1888 = vunpack.c.l.b16 %v1855
  %v1889 = vunpack.c.h.b16 %v1855
  %v1890 = vunpack.c.l.b16 %v1856
  %v1891 = vunpack.c.h.b16 %v1856
  %v1892 = vunpack.c.l.b16 %v1857
  %v1893 = vunpack.c.h.b16 %v1857
  %v1894 = vpack.c.b16 %v1880, %v1878
  %v1895 = vpack.c.b16 %v1881, %v1879
  %v1896 = vpack.c.b16 %v1884, %v1882
  %v1897 = vpack.c.b16 %v1885, %v1883
  %v1898 = vpack.c.b16 %v1888, %v1886
  %v1899 = vpack.c.b16 %v1889, %v1887
  %v1900 = vpack.c.b16 %v1892, %v1890
  %v1901 = vpack.c.b16 %v1893, %v1891
  %v1911 = vsel %vm597, %v1849, 0
  %1913 = vmatprep.subr.bf16.mxu0 %v1895
  %1914 = vmatpush1.bf16.msra.mxu0 %v1894
  %1915 = vmatprep.subr.bf16.mxu0 %v1897
  %1916 = vmatpush1.bf16.msra.mxu0 %v1896
  %1917 = vmatprep.subr.bf16.mxu0 %v1899
  %1918 = vmatpush1.bf16.msra.mxu0 %v1898
  %1919 = vmatprep.subr.bf16.mxu0 %v1901
  %1920 = vmatpush1.bf16.msra.mxu0 %v1900
  %1921 = vmatprep.subr.bf16.mxu0 0
  %1922 = vmatpush1.bf16.msra.mxu0 0
  %1923 = vmatprep.subr.bf16.mxu0 0
  %1924 = vmatpush1.bf16.msra.mxu0 0
  %1925 = vmatprep.subr.bf16.mxu0 0
  %1926 = vmatpush1.bf16.msra.mxu0 0
  %1927 = vmatprep.subr.bf16.mxu0 0
  %1928 = vmatpush1.bf16.msra.mxu0 0
  %1929 = vmatprep.subr.bf16.mxu0 0
  %1930 = vmatpush1.bf16.msra.mxu0 0
  %1931 = vmatprep.subr.bf16.mxu0 0
  %1932 = vmatpush1.bf16.msra.mxu0 0
  %1933 = vmatprep.subr.bf16.mxu0 0
  %1934 = vmatpush1.bf16.msra.mxu0 0
  %1935 = vmatprep.subr.bf16.mxu0 0
  %1936 = vmatpush1.bf16.msra.mxu0 0
  %1937 = vmatprep.subr.bf16.mxu0 0
  %1938 = vmatpush1.bf16.msra.mxu0 0
  %1939 = vmatprep.subr.bf16.mxu0 0
  %1940 = vmatpush1.bf16.msra.mxu0 0
  %1941 = vmatprep.subr.bf16.mxu0 0
  %1942 = vmatpush1.bf16.msra.mxu0 0
  %1943 = vmatprep.subr.bf16.mxu0 0
  %1944 = vmatpush1.bf16.msra.mxu0 0
  %1945 = vmatprep.mubr.bf16.mxu0 0
  %1946 = vmatmul.mubr.bf16.gmra.mrb[0].mxu0 %v1911
  %v1947 = vpop.f32.mrb[0].mxu0
  %v1948 = vadd.f32 %v1863, %v1947
  %v1949 = vpop.f32.mrb[0].mxu0
  %v1950 = vadd.f32 %v1867, %v1949
  %v1951 = vpop.f32.mrb[0].mxu0
  %v1952 = vadd.f32 %v1863, %v1951
  %v1953 = vpop.f32.mrb[0].mxu0
  %v1954 = vadd.f32 %v1867, %v1953
  %1955 = vdwg.mxu0
  %v1956 = vmul.f32 %v1948, %v1948
  %v1957 = vmul.f32 %v1950, %v1950
  %v1958 = vmul.f32 %v1952, %v1952
  %v1959 = vmul.f32 %v1954, %v1954
  %v1960 = vmul.f32 %v1948, %v1956
  %v1961 = vmul.f32 %v1950, %v1957
  %v1962 = vmul.f32 %v1952, %v1958
  %v1963 = vmul.f32 %v1954, %v1959
  %v1964 = vmul.f32 %v1960, 0.044715
  %v1965 = vmul.f32 %v1961, 0.044715
  %v1966 = vmul.f32 %v1962, 0.044715
  %v1967 = vmul.f32 %v1963, 0.044715
  %v1968 = vadd.f32 %v1948, %v1964
  %v1969 = vadd.f32 %v1950, %v1965
  %v1970 = vadd.f32 %v1952, %v1966
  %v1971 = vadd.f32 %v1954, %v1967
  %v1972 = vmul.f32 %v1968, 0.7978846
  %v1973 = vmul.f32 %v1969, 0.7978846
  %v1974 = vmul.f32 %v1970, 0.7978846
  %v1975 = vmul.f32 %v1971, 0.7978846
  %v1976 = vtanh.pop %v1972
  %v1977 = vtanh.pop %v1973
  %v1978 = vtanh.pop %v1974
  %v1979 = vtanh.pop %v1975
  %v1980 = vadd.f32 %v1976, 1.0
  %v1981 = vadd.f32 %v1977, 1.0
  %v1982 = vadd.f32 %v1978, 1.0
  %v1983 = vadd.f32 %v1979, 1.0
  %v1984 = vmul.f32 %v1980, 0.5
  %v1985 = vmul.f32 %v1981, 0.5
  %v1986 = vmul.f32 %v1982, 0.5
  %v1987 = vmul.f32 %v1983, 0.5
  %v1988 = vmul.f32 %v1948, %v1984
  %v1989 = vmul.f32 %v1950, %v1985
  %v1990 = vmul.f32 %v1952, %v1986
  %v1991 = vmul.f32 %v1954, %v1987
  %v1992 = vpack.c.bf16 %v1990, %v1988
  %v1993 = vpack.c.bf16 %v1991, %v1989
  %v1994 = vld [vmem:[%s10] sm:$0xf]
  %v1995 = vld [vmem:[%s10 + $0x4] sm:$0xf]
  %v1996 = vld [vmem:[%s10 + $0x8] sm:$0xf]
  %v1997 = vld [vmem:[%s10 + $0xc] sm:$0xf]
  %v1998 = vld [vmem:[%s10 + $0x10] sm:$0xf]
  %v1999 = vld [vmem:[%s10 + $0x14] sm:$0xf]
  %v2000 = vld [vmem:[%s10 + $0x18] sm:$0xf]
  %v2001 = vld [vmem:[%s10 + $0x1c] sm:$0xf]
  %v2002 = vld [vmem:[%s10 + $0x20] sm:$0xf]
  %v2003 = vld [vmem:[%s10 + $0x24] sm:$0xf]
  %v2004 = vld [vmem:[%s10 + $0x28] sm:$0xf]
  %v2005 = vld [vmem:[%s10 + $0x2c] sm:$0xf]
  %v2006 = vld [vmem:[%s10 + $0x30] sm:$0xf]
  %v2007 = vld [vmem:[%s10 + $0x34] sm:$0xf]
  %v2008 = vld [vmem:[%s10 + $0x38] sm:$0xf]
  %v2009 = vld [vmem:[%s10 + $0x3c] sm:$0xf]
  %v2010 = vld [vmem:[%s10 + $0x40] sm:$0xf]
  %v2011 = vld [vmem:[%s10 + $0x44] sm:$0xf]
  %v2012 = vld [vmem:[%s10 + $0x48] sm:$0xf]
  %v2013 = vld [vmem:[%s10 + $0x4c] sm:$0xf]
  %v2014 = vld [vmem:[%s10 + $0x50] sm:$0xf]
  %v2015 = vld [vmem:[%s10 + $0x54] sm:$0xf]
  %v2016 = vld [vmem:[%s10 + $0x58] sm:$0xf]
  %v2017 = vld [vmem:[%s10 + $0x5c] sm:$0xf]
  %v2018 = vld [vmem:[%s10 + $0x60] sm:$0xf]
  %v2019 = vld [vmem:[%s10 + $0x64] sm:$0xf]
  %v2020 = vld [vmem:[%s10 + $0x68] sm:$0xf]
  %v2021 = vld [vmem:[%s10 + $0x6c] sm:$0xf]
  %v2022 = vld [vmem:[%s10 + $0x70] sm:$0xf]
  %v2023 = vld [vmem:[%s10 + $0x74] sm:$0xf]
  %v2024 = vld [vmem:[%s10 + $0x78] sm:$0xf]
  %v2025 = vld [vmem:[%s10 + $0x7c] sm:$0xf]
  %v2026 = vld [vmem:[%s11] sm:$0x1]
  %v2028 = vlaneseq
  %v2029 = vshrl.u32 %v2028, 7
  %v2030 = vsub.s32 0, %v2029
  %v2031 = vrot.slane %v2026, %v2030
  %v2065 = vunpack.c.l.b16 %v1994
  %v2066 = vunpack.c.l.b16 %v1995
  %v2067 = vunpack.c.l.b16 %v1996
  %v2068 = vunpack.c.l.b16 %v1997
  %v2069 = vunpack.c.l.b16 %v1998
  %v2070 = vunpack.c.l.b16 %v1999
  %v2071 = vunpack.c.l.b16 %v2000
  %v2072 = vunpack.c.l.b16 %v2001
  %v2073 = vunpack.c.l.b16 %v2002
  %v2074 = vunpack.c.l.b16 %v2003
  %v2075 = vunpack.c.l.b16 %v2004
  %v2076 = vunpack.c.l.b16 %v2005
  %v2077 = vunpack.c.l.b16 %v2006
  %v2078 = vunpack.c.l.b16 %v2007
  %v2079 = vunpack.c.l.b16 %v2008
  %v2080 = vunpack.c.l.b16 %v2009
  %v2081 = vunpack.c.l.b16 %v2010
  %v2082 = vunpack.c.l.b16 %v2011
  %v2083 = vunpack.c.l.b16 %v2012
  %v2084 = vunpack.c.l.b16 %v2013
  %v2085 = vunpack.c.l.b16 %v2014
  %v2086 = vunpack.c.l.b16 %v2015
  %v2087 = vunpack.c.l.b16 %v2016
  %v2088 = vunpack.c.l.b16 %v2017
  %v2089 = vunpack.c.l.b16 %v2018
  %v2090 = vunpack.c.l.b16 %v2019
  %v2091 = vunpack.c.l.b16 %v2020
  %v2092 = vunpack.c.l.b16 %v2021
  %v2093 = vunpack.c.l.b16 %v2022
  %v2094 = vunpack.c.l.b16 %v2023
  %v2095 = vunpack.c.l.b16 %v2024
  %v2096 = vunpack.c.l.b16 %v2025
  %v2097 = vpack.c.b16 %v2066, %v2065
  %v2098 = vpack.c.b16 %v2068, %v2067
  %v2099 = vpack.c.b16 %v2070, %v2069
  %v2100 = vpack.c.b16 %v2072, %v2071
  %v2101 = vpack.c.b16 %v2074, %v2073
  %v2102 = vpack.c.b16 %v2076, %v2075
  %v2103 = vpack.c.b16 %v2078, %v2077
  %v2104 = vpack.c.b16 %v2080, %v2079
  %v2105 = vpack.c.b16 %v2082, %v2081
  %v2106 = vpack.c.b16 %v2084, %v2083
  %v2107 = vpack.c.b16 %v2086, %v2085
  %v2108 = vpack.c.b16 %v2088, %v2087
  %v2109 = vpack.c.b16 %v2090, %v2089
  %v2110 = vpack.c.b16 %v2092, %v2091
  %v2111 = vpack.c.b16 %v2094, %v2093
  %v2112 = vpack.c.b16 %v2096, %v2095
  %2129 = vmatprep.subr.bf16.mxu0 0
  %2130 = vmatpush1.bf16.msra.mxu0 %v2097
  %2131 = vmatprep.subr.bf16.mxu0 0
  %2132 = vmatpush1.bf16.msra.mxu0 %v2098
  %2133 = vmatprep.subr.bf16.mxu0 0
  %2134 = vmatpush1.bf16.msra.mxu0 %v2099
  %2135 = vmatprep.subr.bf16.mxu0 0
  %2136 = vmatpush1.bf16.msra.mxu0 %v2100
  %2137 = vmatprep.subr.bf16.mxu0 0
  %2138 = vmatpush1.bf16.msra.mxu0 %v2101
  %2139 = vmatprep.subr.bf16.mxu0 0
  %2140 = vmatpush1.bf16.msra.mxu0 %v2102
  %2141 = vmatprep.subr.bf16.mxu0 0
  %2142 = vmatpush1.bf16.msra.mxu0 %v2103
  %2143 = vmatprep.subr.bf16.mxu0 0
  %2144 = vmatpush1.bf16.msra.mxu0 %v2104
  %2145 = vmatprep.subr.bf16.mxu0 0
  %2146 = vmatpush1.bf16.msra.mxu0 %v2105
  %2147 = vmatprep.subr.bf16.mxu0 0
  %2148 = vmatpush1.bf16.msra.mxu0 %v2106
  %2149 = vmatprep.subr.bf16.mxu0 0
  %2150 = vmatpush1.bf16.msra.mxu0 %v2107
  %2151 = vmatprep.subr.bf16.mxu0 0
  %2152 = vmatpush1.bf16.msra.mxu0 %v2108
  %2153 = vmatprep.subr.bf16.mxu0 0
  %2154 = vmatpush1.bf16.msra.mxu0 %v2109
  %2155 = vmatprep.subr.bf16.mxu0 0
  %2156 = vmatpush1.bf16.msra.mxu0 %v2110
  %2157 = vmatprep.subr.bf16.mxu0 0
  %2158 = vmatpush1.bf16.msra.mxu0 %v2111
  %2159 = vmatprep.subr.bf16.mxu0 0
  %2160 = vmatpush1.bf16.msra.mxu0 %v2112
  %2161 = vmatprep.mubr.bf16.mxu0 %v1993
  %2162 = vmatmul.mubr.bf16.gmra.mrb[0].mxu0 %v1992
  %v2163 = vpop.f32.mrb[0].mxu0
  %v2164 = vadd.f32 %v2031, %v2163
  %v2165 = vpop.f32.mrb[0].mxu0
  %v2166 = vpop.f32.mrb[0].mxu0
  %v2167 = vadd.f32 %v2031, %v2166
  %v2168 = vpop.f32.mrb[0].mxu0
  %2169 = vdwg.mxu0
  %v2170 = vadd.f32 %v1805, %v2164
  %v2171 = vadd.f32 %v1806, %v2167
  %s2172 = scalar_lea.vmem %s3, 4
  %v2173 = vld [vmem:[%s2172] sm:$0xf]
  %v2174 = vsel %vm597, %v2170, 0.0
  %2175 = vadd.xlane.f32.xlu0 %v2174
  %v2176 = vpop.xlane.xlu0 %2175
  %v2177 = vsel %vm601, %v2171, 0.0
  %2178 = vadd.xlane.f32.xlu0 %v2177
  %v2179 = vpop.xlane.xlu0 %2178
  %v2180 = vmul.f32 %v2176, %v605
  %v2181 = vmul.f32 %v2179, %v605
  %v2182 = vmul.f32 %v2170, %v2170
  %v2183 = vmul.f32 %v2171, %v2171
  %v2184 = vsel %vm597, %v2182, 0.0
  %2185 = vadd.xlane.f32.xlu0 %v2184
  %v2186 = vpop.xlane.xlu0 %2185
  %v2187 = vsel %vm601, %v2183, 0.0
  %2188 = vadd.xlane.f32.xlu0 %v2187
  %v2189 = vpop.xlane.xlu0 %2188
  %v2190 = vmul.f32 %v2186, %v605
  %v2191 = vmul.f32 %v2189, %v605
  %v2192 = vmul.f32 %v2180, %v2180
  %v2193 = vmul.f32 %v2181, %v2181
  %v2194 = vsub.f32 %v2190, %v2192
  %v2195 = vsub.f32 %v2191, %v2193
  %v2196 = vsub.f32 %v2170, %v2180
  %v2197 = vsub.f32 %v2171, %v2181
  %v2198 = vadd.f32 %v2194, 1e-06
  %v2199 = vadd.f32 %v2195, 1e-06
  %v2200 = vrsqrt.pop %v2198
  %v2201 = vrsqrt.pop %v2199
  %v2202 = vmul.f32 %v2196, %v2200
  %v2203 = vmul.f32 %v2197, %v2201
  %v2204 = vlaneseq
  %v2205 = vshrl.u32 %v2204, 7
  %v2206 = vsub.s32 0, %v2205
  %v2207 = vrot.slane %v2173, %v2206
  %v2208 = vmul.f32 %v2202, %v2207
  %v2209 = vmul.f32 %v2203, %v2207
  %v2210 = vlaneseq
  %v2211 = vshrl.u32 %v2210, 7
  %v2212 = vsub.s32 1, %v2211
  %v2213 = vrot.slane %v2173, %v2212
  %v2214 = vadd.f32 %v2208, %v2213
  %v2215 = vadd.f32 %v2209, %v2213
  %v2216 = vpack.c.bf16 %v2215, %v2214
  %s2217 = scalar_lea.vmem %s4, 64
  %v2218 = vld [vmem:[%s2217] sm:$0xff]
  %v2219 = vld [vmem:[%s2217 + $0x8] sm:$0xff]
  %v2220 = vld [vmem:[%s2217 + $0x10] sm:$0xff]
  %v2221 = vld [vmem:[%s2217 + $0x18] sm:$0xff]
  %v2222 = vld [vmem:[%s2217 + $0x20] sm:$0xff]
  %v2223 = vld [vmem:[%s2217 + $0x28] sm:$0xff]
  %v2224 = vld [vmem:[%s2217 + $0x30] sm:$0xff]
  %v2225 = vld [vmem:[%s2217 + $0x38] sm:$0xff]
  %s2226 = scalar_lea.vmem %s5, 2
  %v2227 = vld [vmem:[%s2226] sm:$0x3]
  %v2229 = vlaneseq
  %v2230 = vshrl.u32 %v2229, 7
  %v2231 = vsub.s32 0, %v2230
  %v2232 = vrot.slane %v2227, %v2231
  %v2233 = vlaneseq
  %v2234 = vshrl.u32 %v2233, 7
  %v2235 = vsub.s32 1, %v2234
  %v2236 = vrot.slane %v2227, %v2235
  %v2247 = vunpack.c.l.b16 %v2218
  %v2248 = vunpack.c.h.b16 %v2218
  %v2249 = vunpack.c.l.b16 %v2219
  %v2250 = vunpack.c.h.b16 %v2219
  %v2251 = vunpack.c.l.b16 %v2220
  %v2252 = vunpack.c.h.b16 %v2220
  %v2253 = vunpack.c.l.b16 %v2221
  %v2254 = vunpack.c.h.b16 %v2221
  %v2255 = vunpack.c.l.b16 %v2222
  %v2256 = vunpack.c.h.b16 %v2222
  %v2257 = vunpack.c.l.b16 %v2223
  %v2258 = vunpack.c.h.b16 %v2223
  %v2259 = vunpack.c.l.b16 %v2224
  %v2260 = vunpack.c.h.b16 %v2224
  %v2261 = vunpack.c.l.b16 %v2225
  %v2262 = vunpack.c.h.b16 %v2225
  %v2263 = vpack.c.b16 %v2249, %v2247
  %v2264 = vpack.c.b16 %v2250, %v2248
  %v2265 = vpack.c.b16 %v2253, %v2251
  %v2266 = vpack.c.b16 %v2254, %v2252
  %v2267 = vpack.c.b16 %v2257, %v2255
  %v2268 = vpack.c.b16 %v2258, %v2256
  %v2269 = vpack.c.b16 %v2261, %v2259
  %v2270 = vpack.c.b16 %v2262, %v2260
  %v2280 = vsel %vm597, %v2216, 0
  %2282 = vmatprep.subr.bf16.mxu0 %v2264
  %2283 = vmatpush1.bf16.msra.mxu0 %v2263
  %2284 = vmatprep.subr.bf16.mxu0 %v2266
  %2285 = vmatpush1.bf16.msra.mxu0 %v2265
  %2286 = vmatprep.subr.bf16.mxu0 %v2268
  %2287 = vmatpush1.bf16.msra.mxu0 %v2267
  %2288 = vmatprep.subr.bf16.mxu0 %v2270
  %2289 = vmatpush1.bf16.msra.mxu0 %v2269
  %2290 = vmatprep.subr.bf16.mxu0 0
  %2291 = vmatpush1.bf16.msra.mxu0 0
  %2292 = vmatprep.subr.bf16.mxu0 0
  %2293 = vmatpush1.bf16.msra.mxu0 0
  %2294 = vmatprep.subr.bf16.mxu0 0
  %2295 = vmatpush1.bf16.msra.mxu0 0
  %2296 = vmatprep.subr.bf16.mxu0 0
  %2297 = vmatpush1.bf16.msra.mxu0 0
  %2298 = vmatprep.subr.bf16.mxu0 0
  %2299 = vmatpush1.bf16.msra.mxu0 0
  %2300 = vmatprep.subr.bf16.mxu0 0
  %2301 = vmatpush1.bf16.msra.mxu0 0
  %2302 = vmatprep.subr.bf16.mxu0 0
  %2303 = vmatpush1.bf16.msra.mxu0 0
  %2304 = vmatprep.subr.bf16.mxu0 0
  %2305 = vmatpush1.bf16.msra.mxu0 0
  %2306 = vmatprep.subr.bf16.mxu0 0
  %2307 = vmatpush1.bf16.msra.mxu0 0
  %2308 = vmatprep.subr.bf16.mxu0 0
  %2309 = vmatpush1.bf16.msra.mxu0 0
  %2310 = vmatprep.subr.bf16.mxu0 0
  %2311 = vmatpush1.bf16.msra.mxu0 0
  %2312 = vmatprep.subr.bf16.mxu0 0
  %2313 = vmatpush1.bf16.msra.mxu0 0
  %2314 = vmatprep.mubr.bf16.mxu0 0
  %2315 = vmatmul.mubr.bf16.gmra.mrb[0].mxu0 %v2280
  %v2316 = vpop.f32.mrb[0].mxu0
  %v2317 = vadd.f32 %v2232, %v2316
  %v2318 = vpop.f32.mrb[0].mxu0
  %v2319 = vadd.f32 %v2236, %v2318
  %v2320 = vpop.f32.mrb[0].mxu0
  %v2321 = vadd.f32 %v2232, %v2320
  %v2322 = vpop.f32.mrb[0].mxu0
  %v2323 = vadd.f32 %v2236, %v2322
  %2324 = vdwg.mxu0
  %2326 = vrot.lane.b32.xlu0 %v2317, 112
  %v2327 = vpop.permute.xlu0 %2326
  %2329 = vrot.lane.b32.xlu0 %v2317, 96
  %v2330 = vpop.permute.xlu0 %2329
  %2332 = vrot.lane.b32.xlu0 %v2317, 80
  %v2333 = vpop.permute.xlu0 %2332
  %v2336 = vrot.slane %v2317, 5
  %v2337 = vrot.slane %v2321, 5
  %v2338 = vsel %vm760, %v2336, %v2337
  %2340 = vrot.lane.b32.xlu0 %v2338, 112
  %v2341 = vpop.permute.xlu0 %2340
  %2343 = vrot.lane.b32.xlu0 %v2338, 96
  %v2344 = vpop.permute.xlu0 %2343
  %2346 = vrot.lane.b32.xlu0 %v2338, 80
  %v2347 = vpop.permute.xlu0 %2346
  %2350 = vrot.lane.b32.xlu0 %v2319, 112
  %v2351 = vpop.permute.xlu0 %2350
  %2353 = vrot.lane.b32.xlu0 %v2319, 96
  %v2354 = vpop.permute.xlu0 %2353
  %2356 = vrot.lane.b32.xlu0 %v2319, 80
  %v2357 = vpop.permute.xlu0 %2356
  %v2360 = vrot.slane %v2319, 5
  %v2361 = vrot.slane %v2323, 5
  %v2362 = vsel %vm760, %v2360, %v2361
  %2364 = vrot.lane.b32.xlu0 %v2362, 112
  %v2365 = vpop.permute.xlu0 %2364
  %2367 = vrot.lane.b32.xlu0 %v2362, 96
  %v2368 = vpop.permute.xlu0 %2367
  %2370 = vrot.lane.b32.xlu0 %v2362, 80
  %v2371 = vpop.permute.xlu0 %2370
  %v2373 = vpack.c.bf16 %v2317, %v2317
  %v2374 = vpack.c.bf16 %v2327, %v2327
  %v2375 = vpack.c.bf16 %v2330, %v2330
  %v2376 = vpack.c.bf16 %v2333, %v2333
  %v2377 = vpack.c.bf16 %v2338, %v2338
  %v2378 = vpack.c.bf16 %v2341, %v2341
  %v2379 = vpack.c.bf16 %v2344, %v2344
  %v2380 = vpack.c.bf16 %v2347, %v2347
  %2382 = vrot.lane.b32.xlu0 %v2373, 64
  %v2383 = vpop.permute.xlu0 %2382
  %v2385 = vsel %vm809, %v2373, 0
  %v2388 = vsel %vm809, %v2383, 0
  %2390 = vmatprep.subr.bf16.mxu0 0
  %2391 = vmatpush1.bf16.xpose.msra.mxu0 %v2388
  %2392 = vmatprep.subr.bf16.mxu0 0
  %2393 = vmatpush1.bf16.xpose.msra.mxu0 0
  %2394 = vmatprep.subr.bf16.mxu0 0
  %2395 = vmatpush1.bf16.xpose.msra.mxu0 0
  %2396 = vmatprep.subr.bf16.mxu0 0
  %2397 = vmatpush1.bf16.xpose.msra.mxu0 0
  %2398 = vmatprep.subr.bf16.mxu0 0
  %2399 = vmatpush1.bf16.xpose.msra.mxu0 0
  %2400 = vmatprep.subr.bf16.mxu0 0
  %2401 = vmatpush1.bf16.xpose.msra.mxu0 0
  %2402 = vmatprep.subr.bf16.mxu0 0
  %2403 = vmatpush1.bf16.xpose.msra.mxu0 0
  %2404 = vmatprep.subr.bf16.mxu0 0
  %2405 = vmatpush1.bf16.xpose.msra.mxu0 0
  %2406 = vmatprep.subr.bf16.mxu0 0
  %2407 = vmatpush1.bf16.xpose.msra.mxu0 0
  %2408 = vmatprep.subr.bf16.mxu0 0
  %2409 = vmatpush1.bf16.xpose.msra.mxu0 0
  %2410 = vmatprep.subr.bf16.mxu0 0
  %2411 = vmatpush1.bf16.xpose.msra.mxu0 0
  %2412 = vmatprep.subr.bf16.mxu0 0
  %2413 = vmatpush1.bf16.xpose.msra.mxu0 0
  %2414 = vmatprep.subr.bf16.mxu0 0
  %2415 = vmatpush1.bf16.xpose.msra.mxu0 0
  %2416 = vmatprep.subr.bf16.mxu0 0
  %2417 = vmatpush1.bf16.xpose.msra.mxu0 0
  %2418 = vmatprep.subr.bf16.mxu0 0
  %2419 = vmatpush1.bf16.xpose.msra.mxu0 0
  %2420 = vmatprep.subr.bf16.mxu0 0
  %2421 = vmatpush1.bf16.xpose.msra.mxu0 0
  %2422 = vmatprep.mubr.bf16.mxu0 0
  %2423 = vmatmul.mubr.bf16.gmra.mrb[0].mxu0 %v2385
  %v2424 = vpop.f32.mrb[0].mxu0
  %v2425 = vadd.f32 0.0, %v2424
  %v2426 = vpop.f32.mrb[0].mxu0
  %v2427 = vpop.f32.mrb[0].mxu0
  %v2428 = vpop.f32.mrb[0].mxu0
  %2429 = vdwg.mxu0
  %2431 = vrot.lane.b32.xlu0 %v2374, 64
  %v2432 = vpop.permute.xlu0 %2431
  %v2434 = vsel %vm809, %v2374, 0
  %v2437 = vsel %vm809, %v2432, 0
  %2439 = vmatprep.subr.bf16.mxu0 0
  %2440 = vmatpush1.bf16.xpose.msra.mxu0 %v2437
  %2441 = vmatprep.subr.bf16.mxu0 0
  %2442 = vmatpush1.bf16.xpose.msra.mxu0 0
  %2443 = vmatprep.subr.bf16.mxu0 0
  %2444 = vmatpush1.bf16.xpose.msra.mxu0 0
  %2445 = vmatprep.subr.bf16.mxu0 0
  %2446 = vmatpush1.bf16.xpose.msra.mxu0 0
  %2447 = vmatprep.subr.bf16.mxu0 0
  %2448 = vmatpush1.bf16.xpose.msra.mxu0 0
  %2449 = vmatprep.subr.bf16.mxu0 0
  %2450 = vmatpush1.bf16.xpose.msra.mxu0 0
  %2451 = vmatprep.subr.bf16.mxu0 0
  %2452 = vmatpush1.bf16.xpose.msra.mxu0 0
  %2453 = vmatprep.subr.bf16.mxu0 0
  %2454 = vmatpush1.bf16.xpose.msra.mxu0 0
  %2455 = vmatprep.subr.bf16.mxu0 0
  %2456 = vmatpush1.bf16.xpose.msra.mxu0 0
  %2457 = vmatprep.subr.bf16.mxu0 0
  %2458 = vmatpush1.bf16.xpose.msra.mxu0 0
  %2459 = vmatprep.subr.bf16.mxu0 0
  %2460 = vmatpush1.bf16.xpose.msra.mxu0 0
  %2461 = vmatprep.subr.bf16.mxu0 0
  %2462 = vmatpush1.bf16.xpose.msra.mxu0 0
  %2463 = vmatprep.subr.bf16.mxu0 0
  %2464 = vmatpush1.bf16.xpose.msra.mxu0 0
  %2465 = vmatprep.subr.bf16.mxu0 0
  %2466 = vmatpush1.bf16.xpose.msra.mxu0 0
  %2467 = vmatprep.subr.bf16.mxu0 0
  %2468 = vmatpush1.bf16.xpose.msra.mxu0 0
  %2469 = vmatprep.subr.bf16.mxu0 0
  %2470 = vmatpush1.bf16.xpose.msra.mxu0 0
  %2471 = vmatprep.mubr.bf16.mxu0 0
  %2472 = vmatmul.mubr.bf16.gmra.mrb[0].mxu0 %v2434
  %v2473 = vpop.f32.mrb[0].mxu0
  %v2474 = vadd.f32 0.0, %v2473
  %v2475 = vpop.f32.mrb[0].mxu0
  %v2476 = vpop.f32.mrb[0].mxu0
  %v2477 = vpop.f32.mrb[0].mxu0
  %2478 = vdwg.mxu0
  %2480 = vrot.lane.b32.xlu0 %v2375, 64
  %v2481 = vpop.permute.xlu0 %2480
  %v2483 = vsel %vm809, %v2375, 0
  %v2486 = vsel %vm809, %v2481, 0
  %2488 = vmatprep.subr.bf16.mxu0 0
  %2489 = vmatpush1.bf16.xpose.msra.mxu0 %v2486
  %2490 = vmatprep.subr.bf16.mxu0 0
  %2491 = vmatpush1.bf16.xpose.msra.mxu0 0
  %2492 = vmatprep.subr.bf16.mxu0 0
  %2493 = vmatpush1.bf16.xpose.msra.mxu0 0
  %2494 = vmatprep.subr.bf16.mxu0 0
  %2495 = vmatpush1.bf16.xpose.msra.mxu0 0
  %2496 = vmatprep.subr.bf16.mxu0 0
  %2497 = vmatpush1.bf16.xpose.msra.mxu0 0
  %2498 = vmatprep.subr.bf16.mxu0 0
  %2499 = vmatpush1.bf16.xpose.msra.mxu0 0
  %2500 = vmatprep.subr.bf16.mxu0 0
  %2501 = vmatpush1.bf16.xpose.msra.mxu0 0
  %2502 = vmatprep.subr.bf16.mxu0 0
  %2503 = vmatpush1.bf16.xpose.msra.mxu0 0
  %2504 = vmatprep.subr.bf16.mxu0 0
  %2505 = vmatpush1.bf16.xpose.msra.mxu0 0
  %2506 = vmatprep.subr.bf16.mxu0 0
  %2507 = vmatpush1.bf16.xpose.msra.mxu0 0
  %2508 = vmatprep.subr.bf16.mxu0 0
  %2509 = vmatpush1.bf16.xpose.msra.mxu0 0
  %2510 = vmatprep.subr.bf16.mxu0 0
  %2511 = vmatpush1.bf16.xpose.msra.mxu0 0
  %2512 = vmatprep.subr.bf16.mxu0 0
  %2513 = vmatpush1.bf16.xpose.msra.mxu0 0
  %2514 = vmatprep.subr.bf16.mxu0 0
  %2515 = vmatpush1.bf16.xpose.msra.mxu0 0
  %2516 = vmatprep.subr.bf16.mxu0 0
  %2517 = vmatpush1.bf16.xpose.msra.mxu0 0
  %2518 = vmatprep.subr.bf16.mxu0 0
  %2519 = vmatpush1.bf16.xpose.msra.mxu0 0
  %2520 = vmatprep.mubr.bf16.mxu0 0
  %2521 = vmatmul.mubr.bf16.gmra.mrb[0].mxu0 %v2483
  %v2522 = vpop.f32.mrb[0].mxu0
  %v2523 = vadd.f32 0.0, %v2522
  %v2524 = vpop.f32.mrb[0].mxu0
  %v2525 = vpop.f32.mrb[0].mxu0
  %v2526 = vpop.f32.mrb[0].mxu0
  %2527 = vdwg.mxu0
  %2529 = vrot.lane.b32.xlu0 %v2376, 64
  %v2530 = vpop.permute.xlu0 %2529
  %v2532 = vsel %vm809, %v2376, 0
  %v2535 = vsel %vm809, %v2530, 0
  %2537 = vmatprep.subr.bf16.mxu0 0
  %2538 = vmatpush1.bf16.xpose.msra.mxu0 %v2535
  %2539 = vmatprep.subr.bf16.mxu0 0
  %2540 = vmatpush1.bf16.xpose.msra.mxu0 0
  %2541 = vmatprep.subr.bf16.mxu0 0
  %2542 = vmatpush1.bf16.xpose.msra.mxu0 0
  %2543 = vmatprep.subr.bf16.mxu0 0
  %2544 = vmatpush1.bf16.xpose.msra.mxu0 0
  %2545 = vmatprep.subr.bf16.mxu0 0
  %2546 = vmatpush1.bf16.xpose.msra.mxu0 0
  %2547 = vmatprep.subr.bf16.mxu0 0
  %2548 = vmatpush1.bf16.xpose.msra.mxu0 0
  %2549 = vmatprep.subr.bf16.mxu0 0
  %2550 = vmatpush1.bf16.xpose.msra.mxu0 0
  %2551 = vmatprep.subr.bf16.mxu0 0
  %2552 = vmatpush1.bf16.xpose.msra.mxu0 0
  %2553 = vmatprep.subr.bf16.mxu0 0
  %2554 = vmatpush1.bf16.xpose.msra.mxu0 0
  %2555 = vmatprep.subr.bf16.mxu0 0
  %2556 = vmatpush1.bf16.xpose.msra.mxu0 0
  %2557 = vmatprep.subr.bf16.mxu0 0
  %2558 = vmatpush1.bf16.xpose.msra.mxu0 0
  %2559 = vmatprep.subr.bf16.mxu0 0
  %2560 = vmatpush1.bf16.xpose.msra.mxu0 0
  %2561 = vmatprep.subr.bf16.mxu0 0
  %2562 = vmatpush1.bf16.xpose.msra.mxu0 0
  %2563 = vmatprep.subr.bf16.mxu0 0
  %2564 = vmatpush1.bf16.xpose.msra.mxu0 0
  %2565 = vmatprep.subr.bf16.mxu0 0
  %2566 = vmatpush1.bf16.xpose.msra.mxu0 0
  %2567 = vmatprep.subr.bf16.mxu0 0
  %2568 = vmatpush1.bf16.xpose.msra.mxu0 0
  %2569 = vmatprep.mubr.bf16.mxu0 0
  %2570 = vmatmul.mubr.bf16.gmra.mrb[0].mxu0 %v2532
  %v2571 = vpop.f32.mrb[0].mxu0
  %v2572 = vadd.f32 0.0, %v2571
  %v2573 = vpop.f32.mrb[0].mxu0
  %v2574 = vpop.f32.mrb[0].mxu0
  %v2575 = vpop.f32.mrb[0].mxu0
  %2576 = vdwg.mxu0
  %2578 = vrot.lane.b32.xlu0 %v2377, 64
  %v2579 = vpop.permute.xlu0 %2578
  %v2581 = vsel %vm809, %v2377, 0
  %v2584 = vsel %vm809, %v2579, 0
  %2586 = vmatprep.subr.bf16.mxu0 0
  %2587 = vmatpush1.bf16.xpose.msra.mxu0 %v2584
  %2588 = vmatprep.subr.bf16.mxu0 0
  %2589 = vmatpush1.bf16.xpose.msra.mxu0 0
  %2590 = vmatprep.subr.bf16.mxu0 0
  %2591 = vmatpush1.bf16.xpose.msra.mxu0 0
  %2592 = vmatprep.subr.bf16.mxu0 0
  %2593 = vmatpush1.bf16.xpose.msra.mxu0 0
  %2594 = vmatprep.subr.bf16.mxu0 0
  %2595 = vmatpush1.bf16.xpose.msra.mxu0 0
  %2596 = vmatprep.subr.bf16.mxu0 0
  %2597 = vmatpush1.bf16.xpose.msra.mxu0 0
  %2598 = vmatprep.subr.bf16.mxu0 0
  %2599 = vmatpush1.bf16.xpose.msra.mxu0 0
  %2600 = vmatprep.subr.bf16.mxu0 0
  %2601 = vmatpush1.bf16.xpose.msra.mxu0 0
  %2602 = vmatprep.subr.bf16.mxu0 0
  %2603 = vmatpush1.bf16.xpose.msra.mxu0 0
  %2604 = vmatprep.subr.bf16.mxu0 0
  %2605 = vmatpush1.bf16.xpose.msra.mxu0 0
  %2606 = vmatprep.subr.bf16.mxu0 0
  %2607 = vmatpush1.bf16.xpose.msra.mxu0 0
  %2608 = vmatprep.subr.bf16.mxu0 0
  %2609 = vmatpush1.bf16.xpose.msra.mxu0 0
  %2610 = vmatprep.subr.bf16.mxu0 0
  %2611 = vmatpush1.bf16.xpose.msra.mxu0 0
  %2612 = vmatprep.subr.bf16.mxu0 0
  %2613 = vmatpush1.bf16.xpose.msra.mxu0 0
  %2614 = vmatprep.subr.bf16.mxu0 0
  %2615 = vmatpush1.bf16.xpose.msra.mxu0 0
  %2616 = vmatprep.subr.bf16.mxu0 0
  %2617 = vmatpush1.bf16.xpose.msra.mxu0 0
  %2618 = vmatprep.mubr.bf16.mxu0 0
  %2619 = vmatmul.mubr.bf16.gmra.mrb[0].mxu0 %v2581
  %v2620 = vpop.f32.mrb[0].mxu0
  %v2621 = vadd.f32 0.0, %v2620
  %v2622 = vpop.f32.mrb[0].mxu0
  %v2623 = vpop.f32.mrb[0].mxu0
  %v2624 = vpop.f32.mrb[0].mxu0
  %2625 = vdwg.mxu0
  %2627 = vrot.lane.b32.xlu0 %v2378, 64
  %v2628 = vpop.permute.xlu0 %2627
  %v2630 = vsel %vm809, %v2378, 0
  %v2633 = vsel %vm809, %v2628, 0
  %2635 = vmatprep.subr.bf16.mxu0 0
  %2636 = vmatpush1.bf16.xpose.msra.mxu0 %v2633
  %2637 = vmatprep.subr.bf16.mxu0 0
  %2638 = vmatpush1.bf16.xpose.msra.mxu0 0
  %2639 = vmatprep.subr.bf16.mxu0 0
  %2640 = vmatpush1.bf16.xpose.msra.mxu0 0
  %2641 = vmatprep.subr.bf16.mxu0 0
  %2642 = vmatpush1.bf16.xpose.msra.mxu0 0
  %2643 = vmatprep.subr.bf16.mxu0 0
  %2644 = vmatpush1.bf16.xpose.msra.mxu0 0
  %2645 = vmatprep.subr.bf16.mxu0 0
  %2646 = vmatpush1.bf16.xpose.msra.mxu0 0
  %2647 = vmatprep.subr.bf16.mxu0 0
  %2648 = vmatpush1.bf16.xpose.msra.mxu0 0
  %2649 = vmatprep.subr.bf16.mxu0 0
  %2650 = vmatpush1.bf16.xpose.msra.mxu0 0
  %2651 = vmatprep.subr.bf16.mxu0 0
  %2652 = vmatpush1.bf16.xpose.msra.mxu0 0
  %2653 = vmatprep.subr.bf16.mxu0 0
  %2654 = vmatpush1.bf16.xpose.msra.mxu0 0
  %2655 = vmatprep.subr.bf16.mxu0 0
  %2656 = vmatpush1.bf16.xpose.msra.mxu0 0
  %2657 = vmatprep.subr.bf16.mxu0 0
  %2658 = vmatpush1.bf16.xpose.msra.mxu0 0
  %2659 = vmatprep.subr.bf16.mxu0 0
  %2660 = vmatpush1.bf16.xpose.msra.mxu0 0
  %2661 = vmatprep.subr.bf16.mxu0 0
  %2662 = vmatpush1.bf16.xpose.msra.mxu0 0
  %2663 = vmatprep.subr.bf16.mxu0 0
  %2664 = vmatpush1.bf16.xpose.msra.mxu0 0
  %2665 = vmatprep.subr.bf16.mxu0 0
  %2666 = vmatpush1.bf16.xpose.msra.mxu0 0
  %2667 = vmatprep.mubr.bf16.mxu0 0
  %2668 = vmatmul.mubr.bf16.gmra.mrb[0].mxu0 %v2630
  %v2669 = vpop.f32.mrb[0].mxu0
  %v2670 = vadd.f32 0.0, %v2669
  %v2671 = vpop.f32.mrb[0].mxu0
  %v2672 = vpop.f32.mrb[0].mxu0
  %v2673 = vpop.f32.mrb[0].mxu0
  %2674 = vdwg.mxu0
  %2676 = vrot.lane.b32.xlu0 %v2379, 64
  %v2677 = vpop.permute.xlu0 %2676
  %v2679 = vsel %vm809, %v2379, 0
  %v2682 = vsel %vm809, %v2677, 0
  %2684 = vmatprep.subr.bf16.mxu0 0
  %2685 = vmatpush1.bf16.xpose.msra.mxu0 %v2682
  %2686 = vmatprep.subr.bf16.mxu0 0
  %2687 = vmatpush1.bf16.xpose.msra.mxu0 0
  %2688 = vmatprep.subr.bf16.mxu0 0
  %2689 = vmatpush1.bf16.xpose.msra.mxu0 0
  %2690 = vmatprep.subr.bf16.mxu0 0
  %2691 = vmatpush1.bf16.xpose.msra.mxu0 0
  %2692 = vmatprep.subr.bf16.mxu0 0
  %2693 = vmatpush1.bf16.xpose.msra.mxu0 0
  %2694 = vmatprep.subr.bf16.mxu0 0
  %2695 = vmatpush1.bf16.xpose.msra.mxu0 0
  %2696 = vmatprep.subr.bf16.mxu0 0
  %2697 = vmatpush1.bf16.xpose.msra.mxu0 0
  %2698 = vmatprep.subr.bf16.mxu0 0
  %2699 = vmatpush1.bf16.xpose.msra.mxu0 0
  %2700 = vmatprep.subr.bf16.mxu0 0
  %2701 = vmatpush1.bf16.xpose.msra.mxu0 0
  %2702 = vmatprep.subr.bf16.mxu0 0
  %2703 = vmatpush1.bf16.xpose.msra.mxu0 0
  %2704 = vmatprep.subr.bf16.mxu0 0
  %2705 = vmatpush1.bf16.xpose.msra.mxu0 0
  %2706 = vmatprep.subr.bf16.mxu0 0
  %2707 = vmatpush1.bf16.xpose.msra.mxu0 0
  %2708 = vmatprep.subr.bf16.mxu0 0
  %2709 = vmatpush1.bf16.xpose.msra.mxu0 0
  %2710 = vmatprep.subr.bf16.mxu0 0
  %2711 = vmatpush1.bf16.xpose.msra.mxu0 0
  %2712 = vmatprep.subr.bf16.mxu0 0
  %2713 = vmatpush1.bf16.xpose.msra.mxu0 0
  %2714 = vmatprep.subr.bf16.mxu0 0
  %2715 = vmatpush1.bf16.xpose.msra.mxu0 0
  %2716 = vmatprep.mubr.bf16.mxu0 0
  %2717 = vmatmul.mubr.bf16.gmra.mrb[0].mxu0 %v2679
  %v2718 = vpop.f32.mrb[0].mxu0
  %v2719 = vadd.f32 0.0, %v2718
  %v2720 = vpop.f32.mrb[0].mxu0
  %v2721 = vpop.f32.mrb[0].mxu0
  %v2722 = vpop.f32.mrb[0].mxu0
  %2723 = vdwg.mxu0
  %2725 = vrot.lane.b32.xlu0 %v2380, 64
  %v2726 = vpop.permute.xlu0 %2725
  %v2728 = vsel %vm809, %v2380, 0
  %v2731 = vsel %vm809, %v2726, 0
  %2733 = vmatprep.subr.bf16.mxu0 0
  %2734 = vmatpush1.bf16.xpose.msra.mxu0 %v2731
  %2735 = vmatprep.subr.bf16.mxu0 0
  %2736 = vmatpush1.bf16.xpose.msra.mxu0 0
  %2737 = vmatprep.subr.bf16.mxu0 0
  %2738 = vmatpush1.bf16.xpose.msra.mxu0 0
  %2739 = vmatprep.subr.bf16.mxu0 0
  %2740 = vmatpush1.bf16.xpose.msra.mxu0 0
  %2741 = vmatprep.subr.bf16.mxu0 0
  %2742 = vmatpush1.bf16.xpose.msra.mxu0 0
  %2743 = vmatprep.subr.bf16.mxu0 0
  %2744 = vmatpush1.bf16.xpose.msra.mxu0 0
  %2745 = vmatprep.subr.bf16.mxu0 0
  %2746 = vmatpush1.bf16.xpose.msra.mxu0 0
  %2747 = vmatprep.subr.bf16.mxu0 0
  %2748 = vmatpush1.bf16.xpose.msra.mxu0 0
  %2749 = vmatprep.subr.bf16.mxu0 0
  %2750 = vmatpush1.bf16.xpose.msra.mxu0 0
  %2751 = vmatprep.subr.bf16.mxu0 0
  %2752 = vmatpush1.bf16.xpose.msra.mxu0 0
  %2753 = vmatprep.subr.bf16.mxu0 0
  %2754 = vmatpush1.bf16.xpose.msra.mxu0 0
  %2755 = vmatprep.subr.bf16.mxu0 0
  %2756 = vmatpush1.bf16.xpose.msra.mxu0 0
  %2757 = vmatprep.subr.bf16.mxu0 0
  %2758 = vmatpush1.bf16.xpose.msra.mxu0 0
  %2759 = vmatprep.subr.bf16.mxu0 0
  %2760 = vmatpush1.bf16.xpose.msra.mxu0 0
  %2761 = vmatprep.subr.bf16.mxu0 0
  %2762 = vmatpush1.bf16.xpose.msra.mxu0 0
  %2763 = vmatprep.subr.bf16.mxu0 0
  %2764 = vmatpush1.bf16.xpose.msra.mxu0 0
  %2765 = vmatprep.mubr.bf16.mxu0 0
  %2766 = vmatmul.mubr.bf16.gmra.mrb[0].mxu0 %v2728
  %v2767 = vpop.f32.mrb[0].mxu0
  %v2768 = vadd.f32 0.0, %v2767
  %v2769 = vpop.f32.mrb[0].mxu0
  %v2770 = vpop.f32.mrb[0].mxu0
  %v2771 = vpop.f32.mrb[0].mxu0
  %2772 = vdwg.mxu0
  %v2773 = vmul.f32 %v2425, 0.25
  %v2774 = vmul.f32 %v2474, 0.25
  %v2775 = vmul.f32 %v2523, 0.25
  %v2776 = vmul.f32 %v2572, 0.25
  %v2777 = vmul.f32 %v2621, 0.25
  %v2778 = vmul.f32 %v2670, 0.25
  %v2779 = vmul.f32 %v2719, 0.25
  %v2780 = vmul.f32 %v2768, 0.25
  %v2781 = vsel %vm1207, %v2773, -inf
  %2782 = vmax.xlane.f32.xlu0 %v2781
  %v2783 = vpop.xlane.xlu0 %2782
  %v2784 = vsel %vm1207, %v2774, -inf
  %2785 = vmax.xlane.f32.xlu0 %v2784
  %v2786 = vpop.xlane.xlu0 %2785
  %v2787 = vsel %vm1207, %v2775, -inf
  %2788 = vmax.xlane.f32.xlu0 %v2787
  %v2789 = vpop.xlane.xlu0 %2788
  %v2790 = vsel %vm1207, %v2776, -inf
  %2791 = vmax.xlane.f32.xlu0 %v2790
  %v2792 = vpop.xlane.xlu0 %2791
  %v2793 = vsel %vm1207, %v2777, -inf
  %2794 = vmax.xlane.f32.xlu0 %v2793
  %v2795 = vpop.xlane.xlu0 %2794
  %v2796 = vsel %vm1207, %v2778, -inf
  %2797 = vmax.xlane.f32.xlu0 %v2796
  %v2798 = vpop.xlane.xlu0 %2797
  %v2799 = vsel %vm1207, %v2779, -inf
  %2800 = vmax.xlane.f32.xlu0 %v2799
  %v2801 = vpop.xlane.xlu0 %2800
  %v2802 = vsel %vm1207, %v2780, -inf
  %2803 = vmax.xlane.f32.xlu0 %v2802
  %v2804 = vpop.xlane.xlu0 %2803
  %v2805 = vsub.f32 %v2773, %v2783
  %v2806 = vsub.f32 %v2774, %v2786
  %v2807 = vsub.f32 %v2775, %v2789
  %v2808 = vsub.f32 %v2776, %v2792
  %v2809 = vsub.f32 %v2777, %v2795
  %v2810 = vsub.f32 %v2778, %v2798
  %v2811 = vsub.f32 %v2779, %v2801
  %v2812 = vsub.f32 %v2780, %v2804
  %v2813 = vmul.f32 %v2805, 1.442695
  %v2814 = vpow.pop %v2813
  %v2815 = vmul.f32 %v2806, 1.442695
  %v2816 = vpow.pop %v2815
  %v2817 = vmul.f32 %v2807, 1.442695
  %v2818 = vpow.pop %v2817
  %v2819 = vmul.f32 %v2808, 1.442695
  %v2820 = vpow.pop %v2819
  %v2821 = vmul.f32 %v2809, 1.442695
  %v2822 = vpow.pop %v2821
  %v2823 = vmul.f32 %v2810, 1.442695
  %v2824 = vpow.pop %v2823
  %v2825 = vmul.f32 %v2811, 1.442695
  %v2826 = vpow.pop %v2825
  %v2827 = vmul.f32 %v2812, 1.442695
  %v2828 = vpow.pop %v2827
  %v2829 = vsel %vm1207, %v2814, 0.0
  %2830 = vadd.xlane.f32.xlu0 %v2829
  %v2831 = vpop.xlane.xlu0 %2830
  %v2832 = vsel %vm1207, %v2816, 0.0
  %2833 = vadd.xlane.f32.xlu0 %v2832
  %v2834 = vpop.xlane.xlu0 %2833
  %v2835 = vsel %vm1207, %v2818, 0.0
  %2836 = vadd.xlane.f32.xlu0 %v2835
  %v2837 = vpop.xlane.xlu0 %2836
  %v2838 = vsel %vm1207, %v2820, 0.0
  %2839 = vadd.xlane.f32.xlu0 %v2838
  %v2840 = vpop.xlane.xlu0 %2839
  %v2841 = vsel %vm1207, %v2822, 0.0
  %2842 = vadd.xlane.f32.xlu0 %v2841
  %v2843 = vpop.xlane.xlu0 %2842
  %v2844 = vsel %vm1207, %v2824, 0.0
  %2845 = vadd.xlane.f32.xlu0 %v2844
  %v2846 = vpop.xlane.xlu0 %2845
  %v2847 = vsel %vm1207, %v2826, 0.0
  %2848 = vadd.xlane.f32.xlu0 %v2847
  %v2849 = vpop.xlane.xlu0 %2848
  %v2850 = vsel %vm1207, %v2828, 0.0
  %2851 = vadd.xlane.f32.xlu0 %v2850
  %v2852 = vpop.xlane.xlu0 %2851
  %v2853 = vrcp.pop %v2831
  %v2854 = vrcp.pop %v2834
  %v2855 = vrcp.pop %v2837
  %v2856 = vrcp.pop %v2840
  %v2857 = vrcp.pop %v2843
  %v2858 = vrcp.pop %v2846
  %v2859 = vrcp.pop %v2849
  %v2860 = vrcp.pop %v2852
  %v2861 = vmul.f32 %v2814, %v2853
  %v2862 = vmul.f32 %v2816, %v2854
  %v2863 = vmul.f32 %v2818, %v2855
  %v2864 = vmul.f32 %v2820, %v2856
  %v2865 = vmul.f32 %v2822, %v2857
  %v2866 = vmul.f32 %v2824, %v2858
  %v2867 = vmul.f32 %v2826, %v2859
  %v2868 = vmul.f32 %v2828, %v2860
  %v2869 = vpack.c.bf16 %v2861, %v2861
  %v2870 = vpack.c.bf16 %v2862, %v2862
  %v2871 = vpack.c.bf16 %v2863, %v2863
  %v2872 = vpack.c.bf16 %v2864, %v2864
  %v2873 = vpack.c.bf16 %v2865, %v2865
  %v2874 = vpack.c.bf16 %v2866, %v2866
  %v2875 = vpack.c.bf16 %v2867, %v2867
  %v2876 = vpack.c.bf16 %v2868, %v2868
  %v2877 = vpack.c.bf16 %v2319, %v2319
  %v2878 = vpack.c.bf16 %v2351, %v2351
  %v2879 = vpack.c.bf16 %v2354, %v2354
  %v2880 = vpack.c.bf16 %v2357, %v2357
  %v2881 = vpack.c.bf16 %v2362, %v2362
  %v2882 = vpack.c.bf16 %v2365, %v2365
  %v2883 = vpack.c.bf16 %v2368, %v2368
  %v2884 = vpack.c.bf16 %v2371, %v2371
  %v2886 = vsel %vm1312, %v2869, 0
  %v2889 = vand.u32 %v2877, %v1318
  %2891 = vmatprep.subr.bf16.mxu0 0
  %2892 = vmatpush1.bf16.msra.mxu0 %v2889
  %2893 = vmatprep.subr.bf16.mxu0 0
  %2894 = vmatpush1.bf16.msra.mxu0 0
  %2895 = vmatprep.subr.bf16.mxu0 0
  %2896 = vmatpush1.bf16.msra.mxu0 0
  %2897 = vmatprep.subr.bf16.mxu0 0
  %2898 = vmatpush1.bf16.msra.mxu0 0
  %2899 = vmatprep.subr.bf16.mxu0 0
  %2900 = vmatpush1.bf16.msra.mxu0 0
  %2901 = vmatprep.subr.bf16.mxu0 0
  %2902 = vmatpush1.bf16.msra.mxu0 0
  %2903 = vmatprep.subr.bf16.mxu0 0
  %2904 = vmatpush1.bf16.msra.mxu0 0
  %2905 = vmatprep.subr.bf16.mxu0 0
  %2906 = vmatpush1.bf16.msra.mxu0 0
  %2907 = vmatprep.subr.bf16.mxu0 0
  %2908 = vmatpush1.bf16.msra.mxu0 0
  %2909 = vmatprep.subr.bf16.mxu0 0
  %2910 = vmatpush1.bf16.msra.mxu0 0
  %2911 = vmatprep.subr.bf16.mxu0 0
  %2912 = vmatpush1.bf16.msra.mxu0 0
  %2913 = vmatprep.subr.bf16.mxu0 0
  %2914 = vmatpush1.bf16.msra.mxu0 0
  %2915 = vmatprep.subr.bf16.mxu0 0
  %2916 = vmatpush1.bf16.msra.mxu0 0
  %2917 = vmatprep.subr.bf16.mxu0 0
  %2918 = vmatpush1.bf16.msra.mxu0 0
  %2919 = vmatprep.subr.bf16.mxu0 0
  %2920 = vmatpush1.bf16.msra.mxu0 0
  %2921 = vmatprep.subr.bf16.mxu0 0
  %2922 = vmatpush1.bf16.msra.mxu0 0
  %2923 = vmatprep.mubr.bf16.mxu0 0
  %2924 = vmatmul.mubr.bf16.gmra.mrb[0].mxu0 %v2886
  %v2925 = vpop.f32.mrb[0].mxu0
  %v2926 = vadd.f32 0.0, %v2925
  %v2927 = vpop.f32.mrb[0].mxu0
  %v2928 = vpop.f32.mrb[0].mxu0
  %v2929 = vpop.f32.mrb[0].mxu0
  %2930 = vdwg.mxu0
  %v2932 = vsel %vm1312, %v2870, 0
  %v2935 = vand.u32 %v2878, %v1318
  %2937 = vmatprep.subr.bf16.mxu0 0
  %2938 = vmatpush1.bf16.msra.mxu0 %v2935
  %2939 = vmatprep.subr.bf16.mxu0 0
  %2940 = vmatpush1.bf16.msra.mxu0 0
  %2941 = vmatprep.subr.bf16.mxu0 0
  %2942 = vmatpush1.bf16.msra.mxu0 0
  %2943 = vmatprep.subr.bf16.mxu0 0
  %2944 = vmatpush1.bf16.msra.mxu0 0
  %2945 = vmatprep.subr.bf16.mxu0 0
  %2946 = vmatpush1.bf16.msra.mxu0 0
  %2947 = vmatprep.subr.bf16.mxu0 0
  %2948 = vmatpush1.bf16.msra.mxu0 0
  %2949 = vmatprep.subr.bf16.mxu0 0
  %2950 = vmatpush1.bf16.msra.mxu0 0
  %2951 = vmatprep.subr.bf16.mxu0 0
  %2952 = vmatpush1.bf16.msra.mxu0 0
  %2953 = vmatprep.subr.bf16.mxu0 0
  %2954 = vmatpush1.bf16.msra.mxu0 0
  %2955 = vmatprep.subr.bf16.mxu0 0
  %2956 = vmatpush1.bf16.msra.mxu0 0
  %2957 = vmatprep.subr.bf16.mxu0 0
  %2958 = vmatpush1.bf16.msra.mxu0 0
  %2959 = vmatprep.subr.bf16.mxu0 0
  %2960 = vmatpush1.bf16.msra.mxu0 0
  %2961 = vmatprep.subr.bf16.mxu0 0
  %2962 = vmatpush1.bf16.msra.mxu0 0
  %2963 = vmatprep.subr.bf16.mxu0 0
  %2964 = vmatpush1.bf16.msra.mxu0 0
  %2965 = vmatprep.subr.bf16.mxu0 0
  %2966 = vmatpush1.bf16.msra.mxu0 0
  %2967 = vmatprep.subr.bf16.mxu0 0
  %2968 = vmatpush1.bf16.msra.mxu0 0
  %2969 = vmatprep.mubr.bf16.mxu0 0
  %2970 = vmatmul.mubr.bf16.gmra.mrb[0].mxu0 %v2932
  %v2971 = vpop.f32.mrb[0].mxu0
  %v2972 = vadd.f32 0.0, %v2971
  %v2973 = vpop.f32.mrb[0].mxu0
  %v2974 = vpop.f32.mrb[0].mxu0
  %v2975 = vpop.f32.mrb[0].mxu0
  %2976 = vdwg.mxu0
  %v2978 = vsel %vm1312, %v2871, 0
  %v2981 = vand.u32 %v2879, %v1318
  %2983 = vmatprep.subr.bf16.mxu0 0
  %2984 = vmatpush1.bf16.msra.mxu0 %v2981
  %2985 = vmatprep.subr.bf16.mxu0 0
  %2986 = vmatpush1.bf16.msra.mxu0 0
  %2987 = vmatprep.subr.bf16.mxu0 0
  %2988 = vmatpush1.bf16.msra.mxu0 0
  %2989 = vmatprep.subr.bf16.mxu0 0
  %2990 = vmatpush1.bf16.msra.mxu0 0
  %2991 = vmatprep.subr.bf16.mxu0 0
  %2992 = vmatpush1.bf16.msra.mxu0 0
  %2993 = vmatprep.subr.bf16.mxu0 0
  %2994 = vmatpush1.bf16.msra.mxu0 0
  %2995 = vmatprep.subr.bf16.mxu0 0
  %2996 = vmatpush1.bf16.msra.mxu0 0
  %2997 = vmatprep.subr.bf16.mxu0 0
  %2998 = vmatpush1.bf16.msra.mxu0 0
  %2999 = vmatprep.subr.bf16.mxu0 0
  %3000 = vmatpush1.bf16.msra.mxu0 0
  %3001 = vmatprep.subr.bf16.mxu0 0
  %3002 = vmatpush1.bf16.msra.mxu0 0
  %3003 = vmatprep.subr.bf16.mxu0 0
  %3004 = vmatpush1.bf16.msra.mxu0 0
  %3005 = vmatprep.subr.bf16.mxu0 0
  %3006 = vmatpush1.bf16.msra.mxu0 0
  %3007 = vmatprep.subr.bf16.mxu0 0
  %3008 = vmatpush1.bf16.msra.mxu0 0
  %3009 = vmatprep.subr.bf16.mxu0 0
  %3010 = vmatpush1.bf16.msra.mxu0 0
  %3011 = vmatprep.subr.bf16.mxu0 0
  %3012 = vmatpush1.bf16.msra.mxu0 0
  %3013 = vmatprep.subr.bf16.mxu0 0
  %3014 = vmatpush1.bf16.msra.mxu0 0
  %3015 = vmatprep.mubr.bf16.mxu0 0
  %3016 = vmatmul.mubr.bf16.gmra.mrb[0].mxu0 %v2978
  %v3017 = vpop.f32.mrb[0].mxu0
  %v3018 = vadd.f32 0.0, %v3017
  %v3019 = vpop.f32.mrb[0].mxu0
  %v3020 = vpop.f32.mrb[0].mxu0
  %v3021 = vpop.f32.mrb[0].mxu0
  %3022 = vdwg.mxu0
  %v3024 = vsel %vm1312, %v2872, 0
  %v3027 = vand.u32 %v2880, %v1318
  %3029 = vmatprep.subr.bf16.mxu0 0
  %3030 = vmatpush1.bf16.msra.mxu0 %v3027
  %3031 = vmatprep.subr.bf16.mxu0 0
  %3032 = vmatpush1.bf16.msra.mxu0 0
  %3033 = vmatprep.subr.bf16.mxu0 0
  %3034 = vmatpush1.bf16.msra.mxu0 0
  %3035 = vmatprep.subr.bf16.mxu0 0
  %3036 = vmatpush1.bf16.msra.mxu0 0
  %3037 = vmatprep.subr.bf16.mxu0 0
  %3038 = vmatpush1.bf16.msra.mxu0 0
  %3039 = vmatprep.subr.bf16.mxu0 0
  %3040 = vmatpush1.bf16.msra.mxu0 0
  %3041 = vmatprep.subr.bf16.mxu0 0
  %3042 = vmatpush1.bf16.msra.mxu0 0
  %3043 = vmatprep.subr.bf16.mxu0 0
  %3044 = vmatpush1.bf16.msra.mxu0 0
  %3045 = vmatprep.subr.bf16.mxu0 0
  %3046 = vmatpush1.bf16.msra.mxu0 0
  %3047 = vmatprep.subr.bf16.mxu0 0
  %3048 = vmatpush1.bf16.msra.mxu0 0
  %3049 = vmatprep.subr.bf16.mxu0 0
  %3050 = vmatpush1.bf16.msra.mxu0 0
  %3051 = vmatprep.subr.bf16.mxu0 0
  %3052 = vmatpush1.bf16.msra.mxu0 0
  %3053 = vmatprep.subr.bf16.mxu0 0
  %3054 = vmatpush1.bf16.msra.mxu0 0
  %3055 = vmatprep.subr.bf16.mxu0 0
  %3056 = vmatpush1.bf16.msra.mxu0 0
  %3057 = vmatprep.subr.bf16.mxu0 0
  %3058 = vmatpush1.bf16.msra.mxu0 0
  %3059 = vmatprep.subr.bf16.mxu0 0
  %3060 = vmatpush1.bf16.msra.mxu0 0
  %3061 = vmatprep.mubr.bf16.mxu0 0
  %3062 = vmatmul.mubr.bf16.gmra.mrb[0].mxu0 %v3024
  %v3063 = vpop.f32.mrb[0].mxu0
  %v3064 = vadd.f32 0.0, %v3063
  %v3065 = vpop.f32.mrb[0].mxu0
  %v3066 = vpop.f32.mrb[0].mxu0
  %v3067 = vpop.f32.mrb[0].mxu0
  %3068 = vdwg.mxu0
  %v3070 = vsel %vm1312, %v2873, 0
  %v3073 = vand.u32 %v2881, %v1318
  %3075 = vmatprep.subr.bf16.mxu0 0
  %3076 = vmatpush1.bf16.msra.mxu0 %v3073
  %3077 = vmatprep.subr.bf16.mxu0 0
  %3078 = vmatpush1.bf16.msra.mxu0 0
  %3079 = vmatprep.subr.bf16.mxu0 0
  %3080 = vmatpush1.bf16.msra.mxu0 0
  %3081 = vmatprep.subr.bf16.mxu0 0
  %3082 = vmatpush1.bf16.msra.mxu0 0
  %3083 = vmatprep.subr.bf16.mxu0 0
  %3084 = vmatpush1.bf16.msra.mxu0 0
  %3085 = vmatprep.subr.bf16.mxu0 0
  %3086 = vmatpush1.bf16.msra.mxu0 0
  %3087 = vmatprep.subr.bf16.mxu0 0
  %3088 = vmatpush1.bf16.msra.mxu0 0
  %3089 = vmatprep.subr.bf16.mxu0 0
  %3090 = vmatpush1.bf16.msra.mxu0 0
  %3091 = vmatprep.subr.bf16.mxu0 0
  %3092 = vmatpush1.bf16.msra.mxu0 0
  %3093 = vmatprep.subr.bf16.mxu0 0
  %3094 = vmatpush1.bf16.msra.mxu0 0
  %3095 = vmatprep.subr.bf16.mxu0 0
  %3096 = vmatpush1.bf16.msra.mxu0 0
  %3097 = vmatprep.subr.bf16.mxu0 0
  %3098 = vmatpush1.bf16.msra.mxu0 0
  %3099 = vmatprep.subr.bf16.mxu0 0
  %3100 = vmatpush1.bf16.msra.mxu0 0
  %3101 = vmatprep.subr.bf16.mxu0 0
  %3102 = vmatpush1.bf16.msra.mxu0 0
  %3103 = vmatprep.subr.bf16.mxu0 0
  %3104 = vmatpush1.bf16.msra.mxu0 0
  %3105 = vmatprep.subr.bf16.mxu0 0
  %3106 = vmatpush1.bf16.msra.mxu0 0
  %3107 = vmatprep.mubr.bf16.mxu0 0
  %3108 = vmatmul.mubr.bf16.gmra.mrb[0].mxu0 %v3070
  %v3109 = vpop.f32.mrb[0].mxu0
  %v3110 = vadd.f32 0.0, %v3109
  %v3111 = vpop.f32.mrb[0].mxu0
  %v3112 = vpop.f32.mrb[0].mxu0
  %v3113 = vpop.f32.mrb[0].mxu0
  %3114 = vdwg.mxu0
  %v3116 = vsel %vm1312, %v2874, 0
  %v3119 = vand.u32 %v2882, %v1318
  %3121 = vmatprep.subr.bf16.mxu0 0
  %3122 = vmatpush1.bf16.msra.mxu0 %v3119
  %3123 = vmatprep.subr.bf16.mxu0 0
  %3124 = vmatpush1.bf16.msra.mxu0 0
  %3125 = vmatprep.subr.bf16.mxu0 0
  %3126 = vmatpush1.bf16.msra.mxu0 0
  %3127 = vmatprep.subr.bf16.mxu0 0
  %3128 = vmatpush1.bf16.msra.mxu0 0
  %3129 = vmatprep.subr.bf16.mxu0 0
  %3130 = vmatpush1.bf16.msra.mxu0 0
  %3131 = vmatprep.subr.bf16.mxu0 0
  %3132 = vmatpush1.bf16.msra.mxu0 0
  %3133 = vmatprep.subr.bf16.mxu0 0
  %3134 = vmatpush1.bf16.msra.mxu0 0
  %3135 = vmatprep.subr.bf16.mxu0 0
  %3136 = vmatpush1.bf16.msra.mxu0 0
  %3137 = vmatprep.subr.bf16.mxu0 0
  %3138 = vmatpush1.bf16.msra.mxu0 0
  %3139 = vmatprep.subr.bf16.mxu0 0
  %3140 = vmatpush1.bf16.msra.mxu0 0
  %3141 = vmatprep.subr.bf16.mxu0 0
  %3142 = vmatpush1.bf16.msra.mxu0 0
  %3143 = vmatprep.subr.bf16.mxu0 0
  %3144 = vmatpush1.bf16.msra.mxu0 0
  %3145 = vmatprep.subr.bf16.mxu0 0
  %3146 = vmatpush1.bf16.msra.mxu0 0
  %3147 = vmatprep.subr.bf16.mxu0 0
  %3148 = vmatpush1.bf16.msra.mxu0 0
  %3149 = vmatprep.subr.bf16.mxu0 0
  %3150 = vmatpush1.bf16.msra.mxu0 0
  %3151 = vmatprep.subr.bf16.mxu0 0
  %3152 = vmatpush1.bf16.msra.mxu0 0
  %3153 = vmatprep.mubr.bf16.mxu0 0
  %3154 = vmatmul.mubr.bf16.gmra.mrb[0].mxu0 %v3116
  %v3155 = vpop.f32.mrb[0].mxu0
  %v3156 = vadd.f32 0.0, %v3155
  %v3157 = vpop.f32.mrb[0].mxu0
  %v3158 = vpop.f32.mrb[0].mxu0
  %v3159 = vpop.f32.mrb[0].mxu0
  %3160 = vdwg.mxu0
  %v3162 = vsel %vm1312, %v2875, 0
  %v3165 = vand.u32 %v2883, %v1318
  %3167 = vmatprep.subr.bf16.mxu0 0
  %3168 = vmatpush1.bf16.msra.mxu0 %v3165
  %3169 = vmatprep.subr.bf16.mxu0 0
  %3170 = vmatpush1.bf16.msra.mxu0 0
  %3171 = vmatprep.subr.bf16.mxu0 0
  %3172 = vmatpush1.bf16.msra.mxu0 0
  %3173 = vmatprep.subr.bf16.mxu0 0
  %3174 = vmatpush1.bf16.msra.mxu0 0
  %3175 = vmatprep.subr.bf16.mxu0 0
  %3176 = vmatpush1.bf16.msra.mxu0 0
  %3177 = vmatprep.subr.bf16.mxu0 0
  %3178 = vmatpush1.bf16.msra.mxu0 0
  %3179 = vmatprep.subr.bf16.mxu0 0
  %3180 = vmatpush1.bf16.msra.mxu0 0
  %3181 = vmatprep.subr.bf16.mxu0 0
  %3182 = vmatpush1.bf16.msra.mxu0 0
  %3183 = vmatprep.subr.bf16.mxu0 0
  %3184 = vmatpush1.bf16.msra.mxu0 0
  %3185 = vmatprep.subr.bf16.mxu0 0
  %3186 = vmatpush1.bf16.msra.mxu0 0
  %3187 = vmatprep.subr.bf16.mxu0 0
  %3188 = vmatpush1.bf16.msra.mxu0 0
  %3189 = vmatprep.subr.bf16.mxu0 0
  %3190 = vmatpush1.bf16.msra.mxu0 0
  %3191 = vmatprep.subr.bf16.mxu0 0
  %3192 = vmatpush1.bf16.msra.mxu0 0
  %3193 = vmatprep.subr.bf16.mxu0 0
  %3194 = vmatpush1.bf16.msra.mxu0 0
  %3195 = vmatprep.subr.bf16.mxu0 0
  %3196 = vmatpush1.bf16.msra.mxu0 0
  %3197 = vmatprep.subr.bf16.mxu0 0
  %3198 = vmatpush1.bf16.msra.mxu0 0
  %3199 = vmatprep.mubr.bf16.mxu0 0
  %3200 = vmatmul.mubr.bf16.gmra.mrb[0].mxu0 %v3162
  %v3201 = vpop.f32.mrb[0].mxu0
  %v3202 = vadd.f32 0.0, %v3201
  %v3203 = vpop.f32.mrb[0].mxu0
  %v3204 = vpop.f32.mrb[0].mxu0
  %v3205 = vpop.f32.mrb[0].mxu0
  %3206 = vdwg.mxu0
  %v3208 = vsel %vm1312, %v2876, 0
  %v3211 = vand.u32 %v2884, %v1318
  %3213 = vmatprep.subr.bf16.mxu0 0
  %3214 = vmatpush1.bf16.msra.mxu0 %v3211
  %3215 = vmatprep.subr.bf16.mxu0 0
  %3216 = vmatpush1.bf16.msra.mxu0 0
  %3217 = vmatprep.subr.bf16.mxu0 0
  %3218 = vmatpush1.bf16.msra.mxu0 0
  %3219 = vmatprep.subr.bf16.mxu0 0
  %3220 = vmatpush1.bf16.msra.mxu0 0
  %3221 = vmatprep.subr.bf16.mxu0 0
  %3222 = vmatpush1.bf16.msra.mxu0 0
  %3223 = vmatprep.subr.bf16.mxu0 0
  %3224 = vmatpush1.bf16.msra.mxu0 0
  %3225 = vmatprep.subr.bf16.mxu0 0
  %3226 = vmatpush1.bf16.msra.mxu0 0
  %3227 = vmatprep.subr.bf16.mxu0 0
  %3228 = vmatpush1.bf16.msra.mxu0 0
  %3229 = vmatprep.subr.bf16.mxu0 0
  %3230 = vmatpush1.bf16.msra.mxu0 0
  %3231 = vmatprep.subr.bf16.mxu0 0
  %3232 = vmatpush1.bf16.msra.mxu0 0
  %3233 = vmatprep.subr.bf16.mxu0 0
  %3234 = vmatpush1.bf16.msra.mxu0 0
  %3235 = vmatprep.subr.bf16.mxu0 0
  %3236 = vmatpush1.bf16.msra.mxu0 0
  %3237 = vmatprep.subr.bf16.mxu0 0
  %3238 = vmatpush1.bf16.msra.mxu0 0
  %3239 = vmatprep.subr.bf16.mxu0 0
  %3240 = vmatpush1.bf16.msra.mxu0 0
  %3241 = vmatprep.subr.bf16.mxu0 0
  %3242 = vmatpush1.bf16.msra.mxu0 0
  %3243 = vmatprep.subr.bf16.mxu0 0
  %3244 = vmatpush1.bf16.msra.mxu0 0
  %3245 = vmatprep.mubr.bf16.mxu0 0
  %3246 = vmatmul.mubr.bf16.gmra.mrb[0].mxu0 %v3208
  %v3247 = vpop.f32.mrb[0].mxu0
  %v3248 = vadd.f32 0.0, %v3247
  %v3249 = vpop.f32.mrb[0].mxu0
  %v3250 = vpop.f32.mrb[0].mxu0
  %v3251 = vpop.f32.mrb[0].mxu0
  %3252 = vdwg.mxu0
  %3254 = vrot.lane.b32.xlu0 %v2972, 16
  %v3255 = vpop.permute.xlu0 %3254
  %3258 = vrot.lane.b32.xlu0 %v3018, 32
  %v3259 = vpop.permute.xlu0 %3258
  %3262 = vrot.lane.b32.xlu0 %v3064, 48
  %v3263 = vpop.permute.xlu0 %3262
  %v3265 = vsel %vm809, %v2926, %v3255
  %v3266 = vsel %vm1697, %v3265, %v3259
  %v3267 = vsel %vm1699, %v3266, %v3263
  %3269 = vrot.lane.b32.xlu0 %v3156, 16
  %v3270 = vpop.permute.xlu0 %3269
  %3273 = vrot.lane.b32.xlu0 %v3202, 32
  %v3274 = vpop.permute.xlu0 %3273
  %3277 = vrot.lane.b32.xlu0 %v3248, 48
  %v3278 = vpop.permute.xlu0 %3277
  %v3280 = vsel %vm809, %v3110, %v3270
  %v3281 = vsel %vm1697, %v3280, %v3274
  %v3282 = vsel %vm1699, %v3281, %v3278
  %v3284 = vrot.slane %v3282, 3
  %v3286 = vsel %vm1719, %v3267, %v3284
  %v3287 = vpack.c.bf16 %v3284, %v3286
  %s3288 = scalar_lea.vmem %s6, 32
  %v3289 = vld [vmem:[%s3288] sm:$0xf]
  %v3290 = vld [vmem:[%s3288 + $0x4] sm:$0xf]
  %v3291 = vld [vmem:[%s3288 + $0x8] sm:$0xf]
  %v3292 = vld [vmem:[%s3288 + $0xc] sm:$0xf]
  %v3293 = vld [vmem:[%s3288 + $0x10] sm:$0xf]
  %v3294 = vld [vmem:[%s3288 + $0x14] sm:$0xf]
  %v3295 = vld [vmem:[%s3288 + $0x18] sm:$0xf]
  %v3296 = vld [vmem:[%s3288 + $0x1c] sm:$0xf]
  %s3297 = scalar_lea.vmem %s7, 1
  %v3298 = vld [vmem:[%s3297] sm:$0x1]
  %v3300 = vlaneseq
  %v3301 = vshrl.u32 %v3300, 7
  %v3302 = vsub.s32 0, %v3301
  %v3303 = vrot.slane %v3298, %v3302
  %v3313 = vunpack.c.l.b16 %v3289
  %v3314 = vunpack.c.l.b16 %v3290
  %v3315 = vunpack.c.l.b16 %v3291
  %v3316 = vunpack.c.l.b16 %v3292
  %v3317 = vunpack.c.l.b16 %v3293
  %v3318 = vunpack.c.l.b16 %v3294
  %v3319 = vunpack.c.l.b16 %v3295
  %v3320 = vunpack.c.l.b16 %v3296
  %v3321 = vpack.c.b16 %v3314, %v3313
  %v3322 = vpack.c.b16 %v3316, %v3315
  %v3323 = vpack.c.b16 %v3318, %v3317
  %v3324 = vpack.c.b16 %v3320, %v3319
  %v3330 = vsel %vm597, %v3287, 0
  %3332 = vmatprep.subr.bf16.mxu0 0
  %3333 = vmatpush1.bf16.msra.mxu0 %v3321
  %3334 = vmatprep.subr.bf16.mxu0 0
  %3335 = vmatpush1.bf16.msra.mxu0 %v3322
  %3336 = vmatprep.subr.bf16.mxu0 0
  %3337 = vmatpush1.bf16.msra.mxu0 %v3323
  %3338 = vmatprep.subr.bf16.mxu0 0
  %3339 = vmatpush1.bf16.msra.mxu0 %v3324
  %3340 = vmatprep.subr.bf16.mxu0 0
  %3341 = vmatpush1.bf16.msra.mxu0 0
  %3342 = vmatprep.subr.bf16.mxu0 0
  %3343 = vmatpush1.bf16.msra.mxu0 0
  %3344 = vmatprep.subr.bf16.mxu0 0
  %3345 = vmatpush1.bf16.msra.mxu0 0
  %3346 = vmatprep.subr.bf16.mxu0 0
  %3347 = vmatpush1.bf16.msra.mxu0 0
  %3348 = vmatprep.subr.bf16.mxu0 0
  %3349 = vmatpush1.bf16.msra.mxu0 0
  %3350 = vmatprep.subr.bf16.mxu0 0
  %3351 = vmatpush1.bf16.msra.mxu0 0
  %3352 = vmatprep.subr.bf16.mxu0 0
  %3353 = vmatpush1.bf16.msra.mxu0 0
  %3354 = vmatprep.subr.bf16.mxu0 0
  %3355 = vmatpush1.bf16.msra.mxu0 0
  %3356 = vmatprep.subr.bf16.mxu0 0
  %3357 = vmatpush1.bf16.msra.mxu0 0
  %3358 = vmatprep.subr.bf16.mxu0 0
  %3359 = vmatpush1.bf16.msra.mxu0 0
  %3360 = vmatprep.subr.bf16.mxu0 0
  %3361 = vmatpush1.bf16.msra.mxu0 0
  %3362 = vmatprep.subr.bf16.mxu0 0
  %3363 = vmatpush1.bf16.msra.mxu0 0
  %3364 = vmatprep.mubr.bf16.mxu0 0
  %3365 = vmatmul.mubr.bf16.gmra.mrb[0].mxu0 %v3330
  %v3366 = vpop.f32.mrb[0].mxu0
  %v3367 = vadd.f32 %v3303, %v3366
  %v3368 = vpop.f32.mrb[0].mxu0
  %v3369 = vpop.f32.mrb[0].mxu0
  %v3370 = vadd.f32 %v3303, %v3369
  %v3371 = vpop.f32.mrb[0].mxu0
  %3372 = vdwg.mxu0
  %v3373 = vadd.f32 %v2170, %v3367
  %v3374 = vadd.f32 %v2171, %v3370
  %v3375 = vsel %vm597, %v3373, 0.0
  %3376 = vadd.xlane.f32.xlu0 %v3375
  %v3377 = vpop.xlane.xlu0 %3376
  %v3378 = vsel %vm601, %v3374, 0.0
  %3379 = vadd.xlane.f32.xlu0 %v3378
  %v3380 = vpop.xlane.xlu0 %3379
  %v3381 = vmul.f32 %v3377, %v605
  %v3382 = vmul.f32 %v3380, %v605
  %v3383 = vmul.f32 %v3373, %v3373
  %v3384 = vmul.f32 %v3374, %v3374
  %v3385 = vsel %vm597, %v3383, 0.0
  %3386 = vadd.xlane.f32.xlu0 %v3385
  %v3387 = vpop.xlane.xlu0 %3386
  %v3388 = vsel %vm601, %v3384, 0.0
  %3389 = vadd.xlane.f32.xlu0 %v3388
  %v3390 = vpop.xlane.xlu0 %3389
  %v3391 = vmul.f32 %v3387, %v605
  %v3392 = vmul.f32 %v3390, %v605
  %v3393 = vmul.f32 %v3381, %v3381
  %v3394 = vmul.f32 %v3382, %v3382
  %v3395 = vsub.f32 %v3391, %v3393
  %v3396 = vsub.f32 %v3392, %v3394
  %v3397 = vsub.f32 %v3373, %v3381
  %v3398 = vsub.f32 %v3374, %v3382
  %v3399 = vadd.f32 %v3395, 1e-06
  %v3400 = vadd.f32 %v3396, 1e-06
  %v3401 = vrsqrt.pop %v3399
  %v3402 = vrsqrt.pop %v3400
  %v3403 = vmul.f32 %v3397, %v3401
  %v3404 = vmul.f32 %v3398, %v3402
  %v3405 = vlaneseq
  %v3406 = vshrl.u32 %v3405, 7
  %v3407 = vsub.s32 2, %v3406
  %v3408 = vrot.slane %v2173, %v3407
  %v3409 = vmul.f32 %v3403, %v3408
  %v3410 = vmul.f32 %v3404, %v3408
  %v3411 = vlaneseq
  %v3412 = vshrl.u32 %v3411, 7
  %v3413 = vsub.s32 3, %v3412
  %v3414 = vrot.slane %v2173, %v3413
  %v3415 = vadd.f32 %v3409, %v3414
  %v3416 = vadd.f32 %v3410, %v3414
  %v3417 = vpack.c.bf16 %v3416, %v3415
  %s3418 = scalar_lea.vmem %s8, 64
  %v3419 = vld [vmem:[%s3418] sm:$0xff]
  %v3420 = vld [vmem:[%s3418 + $0x8] sm:$0xff]
  %v3421 = vld [vmem:[%s3418 + $0x10] sm:$0xff]
  %v3422 = vld [vmem:[%s3418 + $0x18] sm:$0xff]
  %v3423 = vld [vmem:[%s3418 + $0x20] sm:$0xff]
  %v3424 = vld [vmem:[%s3418 + $0x28] sm:$0xff]
  %v3425 = vld [vmem:[%s3418 + $0x30] sm:$0xff]
  %v3426 = vld [vmem:[%s3418 + $0x38] sm:$0xff]
  %s3427 = scalar_lea.vmem %s9, 2
  %v3428 = vld [vmem:[%s3427] sm:$0x3]
  %v3430 = vlaneseq
  %v3431 = vshrl.u32 %v3430, 7
  %v3432 = vsub.s32 0, %v3431
  %v3433 = vrot.slane %v3428, %v3432
  %v3434 = vlaneseq
  %v3435 = vshrl.u32 %v3434, 7
  %v3436 = vsub.s32 1, %v3435
  %v3437 = vrot.slane %v3428, %v3436
  %v3448 = vunpack.c.l.b16 %v3419
  %v3449 = vunpack.c.h.b16 %v3419
  %v3450 = vunpack.c.l.b16 %v3420
  %v3451 = vunpack.c.h.b16 %v3420
  %v3452 = vunpack.c.l.b16 %v3421
  %v3453 = vunpack.c.h.b16 %v3421
  %v3454 = vunpack.c.l.b16 %v3422
  %v3455 = vunpack.c.h.b16 %v3422
  %v3456 = vunpack.c.l.b16 %v3423
  %v3457 = vunpack.c.h.b16 %v3423
  %v3458 = vunpack.c.l.b16 %v3424
  %v3459 = vunpack.c.h.b16 %v3424
  %v3460 = vunpack.c.l.b16 %v3425
  %v3461 = vunpack.c.h.b16 %v3425
  %v3462 = vunpack.c.l.b16 %v3426
  %v3463 = vunpack.c.h.b16 %v3426
  %v3464 = vpack.c.b16 %v3450, %v3448
  %v3465 = vpack.c.b16 %v3451, %v3449
  %v3466 = vpack.c.b16 %v3454, %v3452
  %v3467 = vpack.c.b16 %v3455, %v3453
  %v3468 = vpack.c.b16 %v3458, %v3456
  %v3469 = vpack.c.b16 %v3459, %v3457
  %v3470 = vpack.c.b16 %v3462, %v3460
  %v3471 = vpack.c.b16 %v3463, %v3461
  %v3481 = vsel %vm597, %v3417, 0
  %3483 = vmatprep.subr.bf16.mxu0 %v3465
  %3484 = vmatpush1.bf16.msra.mxu0 %v3464
  %3485 = vmatprep.subr.bf16.mxu0 %v3467
  %3486 = vmatpush1.bf16.msra.mxu0 %v3466
  %3487 = vmatprep.subr.bf16.mxu0 %v3469
  %3488 = vmatpush1.bf16.msra.mxu0 %v3468
  %3489 = vmatprep.subr.bf16.mxu0 %v3471
  %3490 = vmatpush1.bf16.msra.mxu0 %v3470
  %3491 = vmatprep.subr.bf16.mxu0 0
  %3492 = vmatpush1.bf16.msra.mxu0 0
  %3493 = vmatprep.subr.bf16.mxu0 0
  %3494 = vmatpush1.bf16.msra.mxu0 0
  %3495 = vmatprep.subr.bf16.mxu0 0
  %3496 = vmatpush1.bf16.msra.mxu0 0
  %3497 = vmatprep.subr.bf16.mxu0 0
  %3498 = vmatpush1.bf16.msra.mxu0 0
  %3499 = vmatprep.subr.bf16.mxu0 0
  %3500 = vmatpush1.bf16.msra.mxu0 0
  %3501 = vmatprep.subr.bf16.mxu0 0
  %3502 = vmatpush1.bf16.msra.mxu0 0
  %3503 = vmatprep.subr.bf16.mxu0 0
  %3504 = vmatpush1.bf16.msra.mxu0 0
  %3505 = vmatprep.subr.bf16.mxu0 0
  %3506 = vmatpush1.bf16.msra.mxu0 0
  %3507 = vmatprep.subr.bf16.mxu0 0
  %3508 = vmatpush1.bf16.msra.mxu0 0
  %3509 = vmatprep.subr.bf16.mxu0 0
  %3510 = vmatpush1.bf16.msra.mxu0 0
  %3511 = vmatprep.subr.bf16.mxu0 0
  %3512 = vmatpush1.bf16.msra.mxu0 0
  %3513 = vmatprep.subr.bf16.mxu0 0
  %3514 = vmatpush1.bf16.msra.mxu0 0
  %3515 = vmatprep.mubr.bf16.mxu0 0
  %3516 = vmatmul.mubr.bf16.gmra.mrb[0].mxu0 %v3481
  %v3517 = vpop.f32.mrb[0].mxu0
  %v3518 = vadd.f32 %v3433, %v3517
  %v3519 = vpop.f32.mrb[0].mxu0
  %v3520 = vadd.f32 %v3437, %v3519
  %v3521 = vpop.f32.mrb[0].mxu0
  %v3522 = vadd.f32 %v3433, %v3521
  %v3523 = vpop.f32.mrb[0].mxu0
  %v3524 = vadd.f32 %v3437, %v3523
  %3525 = vdwg.mxu0
  %v3526 = vmul.f32 %v3518, %v3518
  %v3527 = vmul.f32 %v3520, %v3520
  %v3528 = vmul.f32 %v3522, %v3522
  %v3529 = vmul.f32 %v3524, %v3524
  %v3530 = vmul.f32 %v3518, %v3526
  %v3531 = vmul.f32 %v3520, %v3527
  %v3532 = vmul.f32 %v3522, %v3528
  %v3533 = vmul.f32 %v3524, %v3529
  %v3534 = vmul.f32 %v3530, 0.044715
  %v3535 = vmul.f32 %v3531, 0.044715
  %v3536 = vmul.f32 %v3532, 0.044715
  %v3537 = vmul.f32 %v3533, 0.044715
  %v3538 = vadd.f32 %v3518, %v3534
  %v3539 = vadd.f32 %v3520, %v3535
  %v3540 = vadd.f32 %v3522, %v3536
  %v3541 = vadd.f32 %v3524, %v3537
  %v3542 = vmul.f32 %v3538, 0.7978846
  %v3543 = vmul.f32 %v3539, 0.7978846
  %v3544 = vmul.f32 %v3540, 0.7978846
  %v3545 = vmul.f32 %v3541, 0.7978846
  %v3546 = vtanh.pop %v3542
  %v3547 = vtanh.pop %v3543
  %v3548 = vtanh.pop %v3544
  %v3549 = vtanh.pop %v3545
  %v3550 = vadd.f32 %v3546, 1.0
  %v3551 = vadd.f32 %v3547, 1.0
  %v3552 = vadd.f32 %v3548, 1.0
  %v3553 = vadd.f32 %v3549, 1.0
  %v3554 = vmul.f32 %v3550, 0.5
  %v3555 = vmul.f32 %v3551, 0.5
  %v3556 = vmul.f32 %v3552, 0.5
  %v3557 = vmul.f32 %v3553, 0.5
  %v3558 = vmul.f32 %v3518, %v3554
  %v3559 = vmul.f32 %v3520, %v3555
  %v3560 = vmul.f32 %v3522, %v3556
  %v3561 = vmul.f32 %v3524, %v3557
  %v3562 = vpack.c.bf16 %v3560, %v3558
  %v3563 = vpack.c.bf16 %v3561, %v3559
  %s3564 = scalar_lea.vmem %s10, 128
  %v3565 = vld [vmem:[%s3564] sm:$0xf]
  %v3566 = vld [vmem:[%s3564 + $0x4] sm:$0xf]
  %v3567 = vld [vmem:[%s3564 + $0x8] sm:$0xf]
  %v3568 = vld [vmem:[%s3564 + $0xc] sm:$0xf]
  %v3569 = vld [vmem:[%s3564 + $0x10] sm:$0xf]
  %v3570 = vld [vmem:[%s3564 + $0x14] sm:$0xf]
  %v3571 = vld [vmem:[%s3564 + $0x18] sm:$0xf]
  %v3572 = vld [vmem:[%s3564 + $0x1c] sm:$0xf]
  %v3573 = vld [vmem:[%s3564 + $0x20] sm:$0xf]
  %v3574 = vld [vmem:[%s3564 + $0x24] sm:$0xf]
  %v3575 = vld [vmem:[%s3564 + $0x28] sm:$0xf]
  %v3576 = vld [vmem:[%s3564 + $0x2c] sm:$0xf]
  %v3577 = vld [vmem:[%s3564 + $0x30] sm:$0xf]
  %v3578 = vld [vmem:[%s3564 + $0x34] sm:$0xf]
  %v3579 = vld [vmem:[%s3564 + $0x38] sm:$0xf]
  %v3580 = vld [vmem:[%s3564 + $0x3c] sm:$0xf]
  %v3581 = vld [vmem:[%s3564 + $0x40] sm:$0xf]
  %v3582 = vld [vmem:[%s3564 + $0x44] sm:$0xf]
  %v3583 = vld [vmem:[%s3564 + $0x48] sm:$0xf]
  %v3584 = vld [vmem:[%s3564 + $0x4c] sm:$0xf]
  %v3585 = vld [vmem:[%s3564 + $0x50] sm:$0xf]
  %v3586 = vld [vmem:[%s3564 + $0x54] sm:$0xf]
  %v3587 = vld [vmem:[%s3564 + $0x58] sm:$0xf]
  %v3588 = vld [vmem:[%s3564 + $0x5c] sm:$0xf]
  %v3589 = vld [vmem:[%s3564 + $0x60] sm:$0xf]
  %v3590 = vld [vmem:[%s3564 + $0x64] sm:$0xf]
  %v3591 = vld [vmem:[%s3564 + $0x68] sm:$0xf]
  %v3592 = vld [vmem:[%s3564 + $0x6c] sm:$0xf]
  %v3593 = vld [vmem:[%s3564 + $0x70] sm:$0xf]
  %v3594 = vld [vmem:[%s3564 + $0x74] sm:$0xf]
  %v3595 = vld [vmem:[%s3564 + $0x78] sm:$0xf]
  %v3596 = vld [vmem:[%s3564 + $0x7c] sm:$0xf]
  %s3597 = scalar_lea.vmem %s11, 1
  %v3598 = vld [vmem:[%s3597] sm:$0x1]
  %v3600 = vlaneseq
  %v3601 = vshrl.u32 %v3600, 7
  %v3602 = vsub.s32 0, %v3601
  %v3603 = vrot.slane %v3598, %v3602
  %v3637 = vunpack.c.l.b16 %v3565
  %v3638 = vunpack.c.l.b16 %v3566
  %v3639 = vunpack.c.l.b16 %v3567
  %v3640 = vunpack.c.l.b16 %v3568
  %v3641 = vunpack.c.l.b16 %v3569
  %v3642 = vunpack.c.l.b16 %v3570
  %v3643 = vunpack.c.l.b16 %v3571
  %v3644 = vunpack.c.l.b16 %v3572
  %v3645 = vunpack.c.l.b16 %v3573
  %v3646 = vunpack.c.l.b16 %v3574
  %v3647 = vunpack.c.l.b16 %v3575
  %v3648 = vunpack.c.l.b16 %v3576
  %v3649 = vunpack.c.l.b16 %v3577
  %v3650 = vunpack.c.l.b16 %v3578
  %v3651 = vunpack.c.l.b16 %v3579
  %v3652 = vunpack.c.l.b16 %v3580
  %v3653 = vunpack.c.l.b16 %v3581
  %v3654 = vunpack.c.l.b16 %v3582
  %v3655 = vunpack.c.l.b16 %v3583
  %v3656 = vunpack.c.l.b16 %v3584
  %v3657 = vunpack.c.l.b16 %v3585
  %v3658 = vunpack.c.l.b16 %v3586
  %v3659 = vunpack.c.l.b16 %v3587
  %v3660 = vunpack.c.l.b16 %v3588
  %v3661 = vunpack.c.l.b16 %v3589
  %v3662 = vunpack.c.l.b16 %v3590
  %v3663 = vunpack.c.l.b16 %v3591
  %v3664 = vunpack.c.l.b16 %v3592
  %v3665 = vunpack.c.l.b16 %v3593
  %v3666 = vunpack.c.l.b16 %v3594
  %v3667 = vunpack.c.l.b16 %v3595
  %v3668 = vunpack.c.l.b16 %v3596
  %v3669 = vpack.c.b16 %v3638, %v3637
  %v3670 = vpack.c.b16 %v3640, %v3639
  %v3671 = vpack.c.b16 %v3642, %v3641
  %v3672 = vpack.c.b16 %v3644, %v3643
  %v3673 = vpack.c.b16 %v3646, %v3645
  %v3674 = vpack.c.b16 %v3648, %v3647
  %v3675 = vpack.c.b16 %v3650, %v3649
  %v3676 = vpack.c.b16 %v3652, %v3651
  %v3677 = vpack.c.b16 %v3654, %v3653
  %v3678 = vpack.c.b16 %v3656, %v3655
  %v3679 = vpack.c.b16 %v3658, %v3657
  %v3680 = vpack.c.b16 %v3660, %v3659
  %v3681 = vpack.c.b16 %v3662, %v3661
  %v3682 = vpack.c.b16 %v3664, %v3663
  %v3683 = vpack.c.b16 %v3666, %v3665
  %v3684 = vpack.c.b16 %v3668, %v3667
  %3701 = vmatprep.subr.bf16.mxu0 0
  %3702 = vmatpush1.bf16.msra.mxu0 %v3669
  %3703 = vmatprep.subr.bf16.mxu0 0
  %3704 = vmatpush1.bf16.msra.mxu0 %v3670
  %3705 = vmatprep.subr.bf16.mxu0 0
  %3706 = vmatpush1.bf16.msra.mxu0 %v3671
  %3707 = vmatprep.subr.bf16.mxu0 0
  %3708 = vmatpush1.bf16.msra.mxu0 %v3672
  %3709 = vmatprep.subr.bf16.mxu0 0
  %3710 = vmatpush1.bf16.msra.mxu0 %v3673
  %3711 = vmatprep.subr.bf16.mxu0 0
  %3712 = vmatpush1.bf16.msra.mxu0 %v3674
  %3713 = vmatprep.subr.bf16.mxu0 0
  %3714 = vmatpush1.bf16.msra.mxu0 %v3675
  %3715 = vmatprep.subr.bf16.mxu0 0
  %3716 = vmatpush1.bf16.msra.mxu0 %v3676
  %3717 = vmatprep.subr.bf16.mxu0 0
  %3718 = vmatpush1.bf16.msra.mxu0 %v3677
  %3719 = vmatprep.subr.bf16.mxu0 0
  %3720 = vmatpush1.bf16.msra.mxu0 %v3678
  %3721 = vmatprep.subr.bf16.mxu0 0
  %3722 = vmatpush1.bf16.msra.mxu0 %v3679
  %3723 = vmatprep.subr.bf16.mxu0 0
  %3724 = vmatpush1.bf16.msra.mxu0 %v3680
  %3725 = vmatprep.subr.bf16.mxu0 0
  %3726 = vmatpush1.bf16.msra.mxu0 %v3681
  %3727 = vmatprep.subr.bf16.mxu0 0
  %3728 = vmatpush1.bf16.msra.mxu0 %v3682
  %3729 = vmatprep.subr.bf16.mxu0 0
  %3730 = vmatpush1.bf16.msra.mxu0 %v3683
  %3731 = vmatprep.subr.bf16.mxu0 0
  %3732 = vmatpush1.bf16.msra.mxu0 %v3684
  %3733 = vmatprep.mubr.bf16.mxu0 %v3563
  %3734 = vmatmul.mubr.bf16.gmra.mrb[0].mxu0 %v3562
  %v3735 = vpop.f32.mrb[0].mxu0
  %v3736 = vadd.f32 %v3603, %v3735
  %v3737 = vpop.f32.mrb[0].mxu0
  %v3738 = vpop.f32.mrb[0].mxu0
  %v3739 = vpop.f32.mrb[0].mxu0
  %3740 = vdwg.mxu0
  %v3741 = vadd.f32 %v3373, %v3736
  %v3743 = vrot.slane %v3741, 4
  %vm3745 = vcmask 1040384
  %v3746 = vsel %vm3745, %v3741, %v3743
  %v3747 = vld [vmem:[%s12] sm:$0x1]
  %v3748 = vld [vmem:[%s12 + $0x1] sm:$0x1]
  %v3749 = vsel %vm601, %v3746, 0.0
  %3750 = vadd.xlane.f32.xlu0 %v3749
  %v3751 = vpop.xlane.xlu0 %3750
  %v3752 = vmul.f32 %v3751, %v605
  %v3753 = vmul.f32 %v3746, %v3746
  %v3754 = vsel %vm601, %v3753, 0.0
  %3755 = vadd.xlane.f32.xlu0 %v3754
  %v3756 = vpop.xlane.xlu0 %3755
  %v3757 = vmul.f32 %v3756, %v605
  %v3758 = vmul.f32 %v3752, %v3752
  %v3759 = vsub.f32 %v3757, %v3758
  %v3760 = vsub.f32 %v3746, %v3752
  %v3761 = vadd.f32 %v3759, 1e-06
  %v3762 = vrsqrt.pop %v3761
  %v3763 = vmul.f32 %v3760, %v3762
  %v3764 = vlaneseq
  %v3765 = vshrl.u32 %v3764, 7
  %v3766 = vsub.s32 0, %v3765
  %v3767 = vrot.slane %v3747, %v3766
  %v3768 = vmul.f32 %v3763, %v3767
  %v3769 = vlaneseq
  %v3770 = vshrl.u32 %v3769, 7
  %v3771 = vsub.s32 0, %v3770
  %v3772 = vrot.slane %v3748, %v3771
  %v3773 = vadd.f32 %v3768, %v3772
  %v3774 = vpack.c.bf16 %v3773, %v3773
  %v3775 = vld [vmem:[%s13] sm:$0xf]
  %v3776 = vld [vmem:[%s13 + $0x4] sm:$0xf]
  %v3777 = vld [vmem:[%s13 + $0x8] sm:$0xf]
  %v3778 = vld [vmem:[%s13 + $0xc] sm:$0xf]
  %v3779 = vld [vmem:[%s13 + $0x10] sm:$0xf]
  %v3780 = vld [vmem:[%s13 + $0x14] sm:$0xf]
  %v3781 = vld [vmem:[%s13 + $0x18] sm:$0xf]
  %v3782 = vld [vmem:[%s13 + $0x1c] sm:$0xf]
  %v3783 = vld [vmem:[%s14] sm:$0x1]
  %v3785 = vlaneseq
  %v3786 = vshrl.u32 %v3785, 7
  %v3787 = vsub.s32 0, %v3786
  %v3788 = vrot.slane %v3783, %v3787
  %v3798 = vunpack.c.l.b16 %v3775
  %v3799 = vunpack.c.l.b16 %v3776
  %v3800 = vunpack.c.l.b16 %v3777
  %v3801 = vunpack.c.l.b16 %v3778
  %v3802 = vunpack.c.l.b16 %v3779
  %v3803 = vunpack.c.l.b16 %v3780
  %v3804 = vunpack.c.l.b16 %v3781
  %v3805 = vunpack.c.l.b16 %v3782
  %v3806 = vpack.c.b16 %v3799, %v3798
  %v3807 = vpack.c.b16 %v3801, %v3800
  %v3808 = vpack.c.b16 %v3803, %v3802
  %v3809 = vpack.c.b16 %v3805, %v3804
  %v3815 = vsel %vm597, %v3774, 0
  %3817 = vmatprep.subr.bf16.mxu0 0
  %3818 = vmatpush1.bf16.msra.mxu0 %v3806
  %3819 = vmatprep.subr.bf16.mxu0 0
  %3820 = vmatpush1.bf16.msra.mxu0 %v3807
  %3821 = vmatprep.subr.bf16.mxu0 0
  %3822 = vmatpush1.bf16.msra.mxu0 %v3808
  %3823 = vmatprep.subr.bf16.mxu0 0
  %3824 = vmatpush1.bf16.msra.mxu0 %v3809
  %3825 = vmatprep.subr.bf16.mxu0 0
  %3826 = vmatpush1.bf16.msra.mxu0 0
  %3827 = vmatprep.subr.bf16.mxu0 0
  %3828 = vmatpush1.bf16.msra.mxu0 0
  %3829 = vmatprep.subr.bf16.mxu0 0
  %3830 = vmatpush1.bf16.msra.mxu0 0
  %3831 = vmatprep.subr.bf16.mxu0 0
  %3832 = vmatpush1.bf16.msra.mxu0 0
  %3833 = vmatprep.subr.bf16.mxu0 0
  %3834 = vmatpush1.bf16.msra.mxu0 0
  %3835 = vmatprep.subr.bf16.mxu0 0
  %3836 = vmatpush1.bf16.msra.mxu0 0
  %3837 = vmatprep.subr.bf16.mxu0 0
  %3838 = vmatpush1.bf16.msra.mxu0 0
  %3839 = vmatprep.subr.bf16.mxu0 0
  %3840 = vmatpush1.bf16.msra.mxu0 0
  %3841 = vmatprep.subr.bf16.mxu0 0
  %3842 = vmatpush1.bf16.msra.mxu0 0
  %3843 = vmatprep.subr.bf16.mxu0 0
  %3844 = vmatpush1.bf16.msra.mxu0 0
  %3845 = vmatprep.subr.bf16.mxu0 0
  %3846 = vmatpush1.bf16.msra.mxu0 0
  %3847 = vmatprep.subr.bf16.mxu0 0
  %3848 = vmatpush1.bf16.msra.mxu0 0
  %3849 = vmatprep.mubr.bf16.mxu0 0
  %3850 = vmatmul.mubr.bf16.gmra.mrb[0].mxu0 %v3815
  %v3851 = vpop.f32.mrb[0].mxu0
  %v3852 = vadd.f32 %v3788, %v3851
  %v3853 = vpop.f32.mrb[0].mxu0
  %v3854 = vpop.f32.mrb[0].mxu0
  %v3855 = vpop.f32.mrb[0].mxu0
  %3856 = vdwg.mxu0
  %3857 = vst [vmem:[%s15] sm:$0x3] %v3852
  // Predicated region
  $region62: #{vit_forward.1} parent=0 // pred_check
    _
  $region63: #{vit_forward.1} parent=0 // pred_check_branch
    %3859 = sbr.rel (0) target = $region65
  $region64: #{vit_forward.1} parent=0 // pred_region
    _
  $region65: #{vit_forward.1} parent=0 // pred_fallthru
    _
  // Predicated region
  $region66: #{vit_forward.1} parent=0 // pred_check
    _
  $region67: #{vit_forward.1} parent=0 // pred_check_branch
    %3861 = sbr.rel (0) target = $region69
  $region68: #{vit_forward.1} parent=0 // pred_region
    _
  $region69: #{vit_forward.1} parent=0 // pred_fallthru
    _

</llo_original>
